<compile_context>
chip_gen: v6e
topology: v6e:2x2x1
jax: 0.10.0
libtpu: 0.0.40
codegen_flags: <defaults>
</compile_context>

<pallas_src>
import functools

import jax
import jax.numpy as jnp
from jax.experimental import pallas as pl
from jax.experimental.pallas import tpu as pltpu

EPS = 1e-5  # PyTorch BatchNorm2d default eps


def _round_up(x, m):
    return (x + m - 1) // m * m


def _pad_to(x, shape):
    pads = [(0, t - s) for s, t in zip(x.shape, shape)]
    if any(p[1] for p in pads):
        return jnp.pad(x, pads)
    return x


# --------------------------- VMEM-aware sizing ------------------------------ #

def _vmem_capacity_bytes():
    try:
        info = pltpu.get_tpu_info()
        for name in ("vmem_capacity_bytes", "vmem_size_bytes", "vmem_bytes"):
            v = getattr(info, name, None)
            if v:
                return int(v)
    except Exception:
        pass
    return 64 * 1024 * 1024          # conservative default (v7x per-TC VMEM)


def _vmem_limit_bytes():
    return int(min(_vmem_capacity_bytes() * 3 // 4, 96 * 1024 * 1024))


def _vmem_budget_bytes():
    return int(min(_vmem_capacity_bytes() // 2, 40 * 1024 * 1024))


def _select_tiles(M, N, K, Kp, in_itemsize, out_itemsize, has_residual):
    """Pick (TM, TN) so double-buffered blocks fit the per-generation budget."""
    budget = _vmem_budget_bytes()
    # whole-N weight resident whenever it fits comfortably (true for every
    # bottleneck conv in bf16) -> weight DMA'd once total, grid over rows only.
    if N <= 256 or 2 * (K + Kp) * N * in_itemsize <= budget // 2:
        TN = N
    elif N % 256 == 0:
        TN = 256
    else:
        TN = 128

    def step_bytes(tm):
        byt = 2 * tm * (K + Kp) * in_itemsize      # streamed activation block(s)
        byt += 2 * (K + Kp) * TN * in_itemsize     # resident weight block(s)
        byt += 2 * tm * TN * out_itemsize          # output block
        if has_residual:
            byt += 2 * tm * TN * in_itemsize       # residual stream
        byt += 4 * TN * 4                          # biases
        return byt

    TM = 512
    while TM > 32 and step_bytes(TM) > budget:
        TM //= 2
    TM = min(TM, _round_up(M, 8))
    # give the row axis >= 2 tiles when big enough (v7x has 2 TensorCores)
    if M >= 256 and pl.cdiv(M, TM) < 2:
        TM = _round_up(pl.cdiv(M, 2), 8)
    return TM, TN


# ----------------------------- Pallas kernels ------------------------------- #

def _mm_bias_act_kernel(x_ref, w_ref, b_ref, o_ref, *, relu):
    # out = act(x @ w_scaled + bias)        (BN scale folded into the weight)
    acc = jnp.dot(x_ref[...], w_ref[...], preferred_element_type=jnp.float32)
    acc = acc + b_ref[...].astype(jnp.float32)
    if relu:
        acc = jnp.maximum(acc, 0.0)
    o_ref[...] = acc.astype(o_ref.dtype)


def _mm_bias_add_relu_kernel(x_ref, w_ref, b_ref, r_ref, o_ref):
    # out = relu(x @ w_scaled + bias + residual)
    acc = jnp.dot(x_ref[...], w_ref[...], preferred_element_type=jnp.float32)
    acc = acc + b_ref[...].astype(jnp.float32) + r_ref[...].astype(jnp.float32)
    o_ref[...] = jnp.maximum(acc, 0.0).astype(o_ref.dtype)


def _mm_bias_proj_relu_kernel(x_ref, w_ref, b_ref, xs_ref, wp_ref, bp_ref, o_ref):
    # out = relu(x @ w_scaled + bias + (xs @ wp_scaled + bp))
    # projection branch fused: its result never round-trips HBM.
    acc = jnp.dot(x_ref[...], w_ref[...], preferred_element_type=jnp.float32)
    res = jnp.dot(xs_ref[...], wp_ref[...], preferred_element_type=jnp.float32)
    acc = acc + b_ref[...].astype(jnp.float32) + res + bp_ref[...].astype(jnp.float32)
    o_ref[...] = jnp.maximum(acc, 0.0).astype(o_ref.dtype)


def _conv3x3_kernel(ph_ref, w_ref, b_ref, o_ref, *, s, d, RH, Wop):
    # One band of RH output rows of a 3x3 conv (stride s, dilation d) for one
    # image: 9 accumulated per-tap matmuls over a stride-phase-decomposed,
    # spatially zero-padded NHWC tile + folded-BN bias + relu.
    Cin = w_ref.shape[1]
    Cout = w_ref.shape[2]
    r0 = pl.program_id(1) * RH                       # first output row of band
    acc = jnp.zeros((RH * Wop, Cout), jnp.float32)
    # TODO(synk): per-ky wide loads + in-register kx shifts (pltpu.roll) would
    # cut the 9 sublane-misaligned VMEM reads to 3; kept simple/robust here.
    for ky in range(3):
        for kx in range(3):
            py, ay = (ky * d) % s, (ky * d) // s
            px, ax = (kx * d) % s, (kx * d) // s
            blk = ph_ref[py * s + px, pl.ds(ay + r0, RH), pl.ds(ax, Wop), :]
            acc = acc + jnp.dot(blk.reshape(RH * Wop, Cin),
                                w_ref[ky * 3 + kx],
                                preferred_element_type=jnp.float32)
    out = jnp.maximum(acc + b_ref[...].astype(jnp.float32), 0.0)
    o_ref[...] = out.reshape(1, RH, Wop, Cout).astype(o_ref.dtype)


# ------------------------------ kernel wrappers ------------------------------ #

def fused_matmul(x, w, b, *, relu=True, residual=None, proj=None, out_dtype=None):
    """out = act(x @ w + b [+ residual | + xs @ wp + bp]) in one pallas_call.

    The grid is ordered so the M (row) axis is the fastest-varying one: the
    weight block index is constant across it, so each weight block is DMA'd
    exactly once while the activation rows stream; row tails are handled by
    Pallas' masked edge blocks (no host-side row padding copy).
    """
    M, K = x.shape
    Kw, N = w.shape
    assert K == Kw and K % 128 == 0 and N % 128 == 0
    out_dtype = out_dtype or x.dtype
    in_itemsize = jnp.dtype(x.dtype).itemsize
    out_itemsize = jnp.dtype(out_dtype).itemsize
    Kp = proj[0].shape[1] if proj is not None else 0
    if proj is not None:
        assert Kp % 128 == 0

    TM, TN = _select_tiles(M, N, K, Kp, in_itemsize, out_itemsize,
                           residual is not None)
    m_tiles = pl.cdiv(M, TM)
    n_tiles = N // TN

    if n_tiles > 1:
        grid = (n_tiles, m_tiles)         # M fastest -> weight block resident
        sem = ("parallel", "parallel")
        xm = lambda j, i: (i, 0)
        wm = lambda j, i: (0, j)
        bm = lambda j, i: (0, j)
        om = lambda j, i: (i, j)
    else:
        grid = (m_tiles,)                 # whole weight resident, rows stream
        sem = ("parallel",)
        xm = lambda i: (i, 0)
        wm = lambda i: (0, 0)
        bm = lambda i: (0, 0)
        om = lambda i: (i, 0)

    in_specs = [pl.BlockSpec((TM, K), xm),
                pl.BlockSpec((K, TN), wm),
                pl.BlockSpec((1, TN), bm)]
    args = [x, w, b]
    flops = 2 * M * K * N
    bytes_accessed = (M * K + K * N + N) * in_itemsize + M * N * out_itemsize

    if proj is not None:
        xs, wp, bp = proj
        in_specs += [pl.BlockSpec((TM, Kp), xm),
                     pl.BlockSpec((Kp, TN), wm),
                     pl.BlockSpec((1, TN), bm)]
        args += [xs, wp, bp]
        kernel = _mm_bias_proj_relu_kernel
        flops += 2 * M * Kp * N
        bytes_accessed += (M * Kp + Kp * N + N) * in_itemsize
    elif residual is not None:
        in_specs.append(pl.BlockSpec((TM, TN), om))
        args.append(residual)
        kernel = _mm_bias_add_relu_kernel
        bytes_accessed += M * N * in_itemsize
    else:
        kernel = functools.partial(_mm_bias_act_kernel, relu=relu)

    return pl.pallas_call(
        kernel,
        out_shape=jax.ShapeDtypeStruct((M, N), out_dtype),
        grid=grid,
        in_specs=in_specs,
        out_specs=pl.BlockSpec((TM, TN), om),
        compiler_params=pltpu.CompilerParams(
            dimension_semantics=sem,
            vmem_limit_bytes=_vmem_limit_bytes()),
        cost_estimate=pl.CostEstimate(flops=int(flops), transcendentals=0,
                                      bytes_accessed=int(bytes_accessed)),
    )(*args)


def conv3x3_bn_relu(phases, w_taps, b, *, Nb, s, d, Ho, Wop, RH, out_dtype):
    """3x3 conv (stride s, dilation d) + folded-BN bias + relu, gridded over
    (image, output-row band).  The per-image phase tensor has a constant block
    index along the band axis, so it is DMA'd once per image and stays
    resident while output bands stream out; no im2col is materialized."""
    _, Hc, Wc, Cin = phases.shape
    Cout = w_taps.shape[-1]
    num_bands = pl.cdiv(Ho, RH)
    itemsize = jnp.dtype(phases.dtype).itemsize
    kernel = functools.partial(_conv3x3_kernel, s=s, d=d, RH=RH, Wop=Wop)
    flops = 2 * 9 * Nb * Ho * Wop * Cin * Cout
    bytes_accessed = ((phases.size + w_taps.size) * itemsize
                      + Nb * Ho * Wop * Cout * jnp.dtype(out_dtype).itemsize)
    return pl.pallas_call(
        kernel,
        out_shape=jax.ShapeDtypeStruct((Nb, Ho, Wop, Cout), out_dtype),
        grid=(Nb, num_bands),
        in_specs=[
            pl.BlockSpec((s * s, Hc, Wc, Cin), lambda n, r: (n, 0, 0, 0)),
            pl.BlockSpec((9, Cin, Cout), lambda n, r: (0, 0, 0)),
            pl.BlockSpec((1, Cout), lambda n, r: (0, 0)),
        ],
        out_specs=pl.BlockSpec((1, RH, Wop, Cout), lambda n, r: (n, r, 0, 0)),
        compiler_params=pltpu.CompilerParams(
            dimension_semantics=("parallel", "parallel"),
            vmem_limit_bytes=_vmem_limit_bytes()),
        cost_estimate=pl.CostEstimate(flops=int(flops), transcendentals=0,
                                      bytes_accessed=int(bytes_accessed)),
    )(phases, w_taps, b)


# ------------------------------ module forward ------------------------------- #

def fold_bn(p):
    scale = p["gamma"] / jnp.sqrt(p["var"] + EPS)
    bias = p["beta"] - p["mean"] * scale
    return scale, bias


def blocks_forward(x_nchw, params, *, stride=1, dilation=1, multi_grid=1,
                   compute_dtype=jnp.bfloat16):
    """Pallas forward of the Blocks bottleneck.  Input/output are NCHW.

    compute_dtype defaults to bfloat16 (f32 accumulation inside every kernel);
    pass jnp.float32 to match the f32 reference bit-closely.
    """
    Nb, Cin, H, W = x_nchw.shape
    s = stride
    d = dilation * multi_grid

    w1 = params["conv1_w"]
    C1 = w1.shape[0]
    w3 = params["conv3_w"]
    Cout = w3.shape[0]
    Cin_p, C1_p, Cout_p = (_round_up(c, 128) for c in (Cin, C1, Cout))

    # TODO(synk): in a full network keep activations NHWC across blocks to
    # avoid this per-block layout transpose.
    x = jnp.transpose(x_nchw, (0, 2, 3, 1))                      # NHWC
    x_p = _pad_to(x, (Nb, H, W, Cin_p)).astype(compute_dtype)

    # ---- conv1 (1x1) + bn1 + relu -------------------------------------------
    s1, b1 = fold_bn(params["bn1"])
    w1m = _pad_to(w1[:, :, 0, 0].T * s1[None, :], (Cin_p, C1_p)).astype(compute_dtype)
    b1p = _pad_to(b1.reshape(1, C1), (1, C1_p))
    h1 = fused_matmul(x_p.reshape(-1, Cin_p), w1m, b1p, relu=True,
                      out_dtype=compute_dtype).reshape(Nb, H, W, C1_p)

    # ---- conv2 (3x3, stride, dilation, padding=dilation) + bn2 + relu --------
    Ho = (H - 1) // s + 1
    Wo = (W - 1) // s + 1
    Wop = _round_up(Wo, 8)                       # sublane-friendly output width
    # output-row band height: bounds per-step VMEM / f32 accumulator size and
    # gives the (image, band) grid enough parallel extent for v7x's 2 TCs.
    RH = max(1, min(Ho, max(1, 512 // Wop), max(1, (1 << 20) // (Wop * C1_p * 4))))
    if Nb * (-(-Ho // RH)) < 2 and Ho >= 2:
        RH = -(-Ho // 2)
    num_bands = -(-Ho // RH)
    Ho_pad = num_bands * RH
    amax = (2 * d) // s
    Hc = max(-(-(H + 2 * d) // s), amax + Ho_pad)
    Wc = max(-(-(W + 2 * d) // s), amax + Wop)
    # TODO(synk): the pad + stride-phase transpose below are one extra HBM pass
    # over h1; writing conv1's output directly in phase layout would remove it.
    hp = jnp.pad(h1, ((0, 0), (d, s * Hc - H - d), (d, s * Wc - W - d), (0, 0)))
    # stride-phase decomposition: phase (p, q) == hp[:, p::s, q::s, :]
    phases = hp.reshape(Nb, Hc, s, Wc, s, C1_p)
    phases = jnp.transpose(phases, (0, 2, 4, 1, 3, 5)).reshape(Nb * s * s, Hc, Wc, C1_p)

    s2, b2 = fold_bn(params["bn2"])
    w2 = params["conv2_w"]                                       # (C1, C1, 3, 3) OIHW
    w2m = jnp.transpose(w2, (2, 3, 1, 0)) * s2[None, None, None, :]
    w2m = _pad_to(w2m.reshape(9, C1, C1), (9, C1_p, C1_p)).astype(compute_dtype)
    b2p = _pad_to(b2.reshape(1, C1), (1, C1_p))
    h2 = conv3x3_bn_relu(phases, w2m, b2p, Nb=Nb, s=s, d=d, Ho=Ho, Wop=Wop,
                         RH=RH, out_dtype=compute_dtype)         # (Nb, Ho, Wop, C1_p)

    # ---- conv3 (1x1) + bn3 + residual + relu (projection branch fused) -------
    s3, b3 = fold_bn(params["bn3"])
    w3m = _pad_to(w3[:, :, 0, 0].T * s3[None, :], (C1_p, Cout_p)).astype(compute_dtype)
    b3p = _pad_to(b3.reshape(1, Cout), (1, Cout_p))
    h2_flat = h2.reshape(-1, C1_p)

    if "proj_conv_w" in params:
        wp = params["proj_conv_w"]
        sp, bp = fold_bn(params["proj_bn"])
        wpm = _pad_to(wp[:, :, 0, 0].T * sp[None, :], (Cin_p, Cout_p)).astype(compute_dtype)
        bpp = _pad_to(bp.reshape(1, Cout), (1, Cout_p))
        xs = _pad_to(x_p[:, ::s, ::s, :], (Nb, Ho, Wop, Cin_p)).reshape(-1, Cin_p)
        out = fused_matmul(h2_flat, w3m, b3p, proj=(xs, wpm, bpp),
                           out_dtype=compute_dtype)
    else:
        # identity branch: stride == 1 and Cin == Cout (so Cin_p == Cout_p)
        res = _pad_to(x_p, (Nb, H, Wop, Cin_p)).reshape(-1, Cin_p)
        out = fused_matmul(h2_flat, w3m, b3p, residual=res, out_dtype=compute_dtype)

    out = out.reshape(Nb, Ho, Wop, Cout_p)[:, :, :Wo, :Cout]
    return jnp.transpose(out, (0, 3, 1, 2)).astype(x_nchw.dtype)  # -> NCHW


# ----------------------- deterministic parameter init ------------------------ #

def init_params(key, num_in_ch, num_out_ch, stride):
    exp = 4

    def bn_params(k, c):
        k1, k2, k3, k4 = jax.random.split(k, 4)
        return dict(
            gamma=jax.random.uniform(k1, (c,), jnp.float32, 0.5, 1.5),
            beta=jax.random.normal(k2, (c,), jnp.float32) * 0.1,
            mean=jax.random.normal(k3, (c,), jnp.float32) * 0.1,
            var=jax.random.uniform(k4, (c,), jnp.float32, 0.5, 1.5),
        )

    keys = jax.random.split(key, 8)
    p = {
        "conv1_w": jax.random.normal(keys[0], (num_out_ch, num_in_ch, 1, 1), jnp.float32) * 0.1,
        "bn1": bn_params(keys[1], num_out_ch),
        "conv2_w": jax.random.normal(keys[2], (num_out_ch, num_out_ch, 3, 3), jnp.float32) * 0.1,
        "bn2": bn_params(keys[3], num_out_ch),
        "conv3_w": jax.random.normal(keys[4], (exp * num_out_ch, num_out_ch, 1, 1), jnp.float32) * 0.1,
        "bn3": bn_params(keys[5], exp * num_out_ch),
    }
    if stride != 1 or num_in_ch != exp * num_out_ch:
        p["proj_conv_w"] = jax.random.normal(
            keys[6], (exp * num_out_ch, num_in_ch, 1, 1), jnp.float32) * 0.1
        p["proj_bn"] = bn_params(keys[7], exp * num_out_ch)
    return p


# ----------------------------- pure-JAX reference ----------------------------- #

def ref_forward(x, params, *, stride=1, dilation=1, multi_grid=1):
    def bn(y, p):
        g, b, m, v = p["gamma"], p["beta"], p["mean"], p["var"]
        return ((y - m[None, :, None, None]) / jnp.sqrt(v[None, :, None, None] + EPS)
                * g[None, :, None, None] + b[None, :, None, None])

    def conv(y, w, stride=1, pad=0, dil=1):
        return jax.lax.conv_general_dilated(
            y, w, (stride, stride), [(pad, pad), (pad, pad)],
            rhs_dilation=(dil, dil),
            dimension_numbers=("NCHW", "OIHW", "NCHW"))

    d = dilation * multi_grid
    out = jax.nn.relu(bn(conv(x, params["conv1_w"]), params["bn1"]))
    out = jax.nn.relu(bn(conv(out, params["conv2_w"], stride=stride, pad=d, dil=d),
                         params["bn2"]))
    out = bn(conv(out, params["conv3_w"]), params["bn3"])
    if "proj_conv_w" in params:
        res = bn(conv(x, params["proj_conv_w"], stride=stride), params["proj_bn"])
    else:
        res = x
    return jax.nn.relu(out + res)


# ------------------------------------ main ------------------------------------ #

if __name__ == "__main__":
    num_in_ch, num_out_ch = 16, 8
    stride, dilation, multi_grid = 2, 1, 1
    N, H, W = 2, 16, 16

    key = jax.random.PRNGKey(0)
    kx, kp = jax.random.split(key)
    x = jax.random.normal(kx, (N, num_in_ch, H, W), jnp.float32)   # NCHW like PyTorch
    params = init_params(kp, num_in_ch, num_out_ch, stride)

    ref = jax.block_until_ready(
        ref_forward(x, params, stride=stride, dilation=dilation,
                    multi_grid=multi_grid))

    # f32 path: should be bit-close to the f32 reference
    fwd_f32 = jax.jit(functools.partial(
        blocks_forward, stride=stride, dilation=dilation,
        multi_grid=multi_grid, compute_dtype=jnp.float32))
    out_f32 = jax.block_until_ready(fwd_f32(x, params))
    assert out_f32.shape == ref.shape, (out_f32.shape, ref.shape)
    assert jnp.allclose(out_f32, ref, atol=2e-4, rtol=2e-4), \
        float(jnp.max(jnp.abs(out_f32 - ref)))

    # bf16 perf default (f32 accumulation inside every kernel), loose tolerance
    fwd_bf16 = jax.jit(functools.partial(
        blocks_forward, stride=stride, dilation=dilation,
        multi_grid=multi_grid, compute_dtype=jnp.bfloat16))
    out_bf16 = jax.block_until_ready(fwd_bf16(x, params))
    assert out_bf16.shape == ref.shape, (out_bf16.shape, ref.shape)
    assert jnp.allclose(out_bf16, ref, atol=1e-1, rtol=1e-1), \
        float(jnp.max(jnp.abs(out_bf16 - ref)))

    print("KERNEL_OK")
</pallas_src>

<mosaic_0001>
module attributes {stable_mosaic.version = 11 : i64} {
  func.func @_mm_bias_act_kernel(%arg0: i32, %arg1: memref<256x128xf32, #tpu.memory_space<vmem>>, %arg2: memref<128x128xf32, #tpu.memory_space<vmem>>, %arg3: memref<1x128xf32, #tpu.memory_space<vmem>>, %arg4: memref<256x128xf32, #tpu.memory_space<vmem>>) attributes {dimension_semantics = [#tpu.dimension_semantics<parallel>], iteration_bounds = array<i64: 2>, scalar_prefetch = 0 : i64, scratch_operands = 0 : i64, tpu.core_type = #tpu.core_type<tc>, window_params = [{transform_indices = @transform_0, window_bounds = array<i64: 256, 128>}, {pipeline_mode = #tpu.pipeline_mode<synchronous>, transform_indices = @transform_1, window_bounds = array<i64: 128, 128>}, {pipeline_mode = #tpu.pipeline_mode<synchronous>, transform_indices = @transform_2, window_bounds = array<i64: 1, 128>}, {transform_indices = @transform_3, window_bounds = array<i64: 256, 128>}]} {
    %c0 = arith.constant 0 : index
    %c0_0 = arith.constant 0 : index
    %0 = vector.load %arg1[%c0, %c0_0] : memref<256x128xf32, #tpu.memory_space<vmem>>, vector<256x128xf32>
    %c0_1 = arith.constant 0 : index
    %c0_2 = arith.constant 0 : index
    %1 = vector.load %arg2[%c0_1, %c0_2] : memref<128x128xf32, #tpu.memory_space<vmem>>, vector<128x128xf32>
    %cst = arith.constant dense<0.000000e+00> : vector<256x128xf32>
    %2 = tpu.matmul %0, %1, %cst {dimension_numbers = #tpu.dot_dimension_numbers<[1], [0], [0], [1], [0, 0, 1, 1], [], []>} : vector<256x128xf32>, vector<128x128xf32>, vector<256x128xf32> -> vector<256x128xf32>
    %c0_3 = arith.constant 0 : index
    %c0_4 = arith.constant 0 : index
    %3 = vector.load %arg3[%c0_3, %c0_4] : memref<1x128xf32, #tpu.memory_space<vmem>>, vector<1x128xf32>
    %4 = vector.broadcast %3 : vector<1x128xf32> to vector<256x128xf32>
    %5 = arith.addf %2, %4 : vector<256x128xf32>
    %cst_5 = arith.constant 0.000000e+00 : f32
    %6 = vector.broadcast %cst_5 : f32 to vector<256x128xf32>
    %7 = arith.maximumf %5, %6 : vector<256x128xf32>
    %c0_6 = arith.constant 0 : index
    %c0_7 = arith.constant 0 : index
    %8 = vector.load %arg4[%c0_6, %c0_7] : memref<256x128xf32, #tpu.memory_space<vmem>>, vector<256x128xf32>
    tpu.vector_store %arg4[%c0_6, %c0_7], %7 {strides = array<i32>} : memref<256x128xf32, #tpu.memory_space<vmem>>, vector<256x128xf32>,
    return
  }
  func.func @transform_0(%arg0: i32) -> (i32, i32) {
    %c0_i32 = arith.constant 0 : i32
    %c0_i32_0 = arith.constant 0 : i32
    return %arg0, %c0_i32 : i32, i32
  }
  func.func @transform_1(%arg0: i32) -> (i32, i32) {
    %c0_i32 = arith.constant 0 : i32
    %c0_i32_0 = arith.constant 0 : i32
    %c0_i32_1 = arith.constant 0 : i32
    return %c0_i32, %c0_i32_0 : i32, i32
  }
  func.func @transform_2(%arg0: i32) -> (i32, i32) {
    %c0_i32 = arith.constant 0 : i32
    %c0_i32_0 = arith.constant 0 : i32
    %c0_i32_1 = arith.constant 0 : i32
    return %c0_i32, %c0_i32_0 : i32, i32
  }
  func.func @transform_3(%arg0: i32) -> (i32, i32) {
    %c0_i32 = arith.constant 0 : i32
    %c0_i32_0 = arith.constant 0 : i32
    return %arg0, %c0_i32 : i32, i32
  }
}

module attributes {stable_mosaic.version = 11 : i64} {
  func.func @_conv3x3_kernel(%arg0: i32, %arg1: i32, %arg2: memref<4x9x9x128xf32, #tpu.memory_space<vmem>>, %arg3: memref<9x128x128xf32, #tpu.memory_space<vmem>>, %arg4: memref<1x128xf32, #tpu.memory_space<vmem>>, %arg5: memref<1x8x8x128xf32, #tpu.memory_space<vmem>>) attributes {dimension_semantics = [#tpu.dimension_semantics<parallel>, #tpu.dimension_semantics<parallel>], iteration_bounds = array<i64: 2, 1>, scalar_prefetch = 0 : i64, scratch_operands = 0 : i64, tpu.core_type = #tpu.core_type<tc>, window_params = [{transform_indices = @transform_0, window_bounds = array<i64: 4, 9, 9, 128>}, {pipeline_mode = #tpu.pipeline_mode<synchronous>, transform_indices = @transform_1, window_bounds = array<i64: 9, 128, 128>}, {pipeline_mode = #tpu.pipeline_mode<synchronous>, transform_indices = @transform_2, window_bounds = array<i64: 1, 128>}, {transform_indices = @transform_3, window_bounds = array<i64: 1, 8, 8, 128>}]} {
    %c8_i32 = arith.constant 8 : i32
    %0 = arith.muli %arg1, %c8_i32 : i32
    %cst = arith.constant 0.000000e+00 : f32
    %1 = vector.broadcast %cst : f32 to vector<64x128xf32>
    %c0_i32 = arith.constant 0 : i32
    %2 = arith.addi %c0_i32, %0 : i32
    %c0 = arith.constant 0 : index
    %3 = arith.index_cast %2 : i32 to index
    %c0_0 = arith.constant 0 : index
    %c0_1 = arith.constant 0 : index
    %4 = vector.load %arg2[%c0, %3, %c0_0, %c0_1] : memref<4x9x9x128xf32, #tpu.memory_space<vmem>>, vector<1x8x8x128xf32>
    %5 = vector.shape_cast %4 : vector<1x8x8x128xf32> to vector<8x8x128xf32>
    %6 = vector.shape_cast %5 : vector<8x8x128xf32> to vector<64x128xf32>
    %c0_2 = arith.constant 0 : index
    %c0_3 = arith.constant 0 : index
    %c0_4 = arith.constant 0 : index
    %7 = vector.load %arg3[%c0_2, %c0_3, %c0_4] : memref<9x128x128xf32, #tpu.memory_space<vmem>>, vector<1x128x128xf32>
    %8 = vector.shape_cast %7 : vector<1x128x128xf32> to vector<128x128xf32>
    %cst_5 = arith.constant dense<0.000000e+00> : vector<64x128xf32>
    %9 = tpu.matmul %6, %8, %cst_5 {dimension_numbers = #tpu.dot_dimension_numbers<[1], [0], [0], [1], [0, 0, 1, 1], [], []>} : vector<64x128xf32>, vector<128x128xf32>, vector<64x128xf32> -> vector<64x128xf32>
    %10 = arith.addf %1, %9 : vector<64x128xf32>
    %c0_i32_6 = arith.constant 0 : i32
    %11 = arith.addi %c0_i32_6, %0 : i32
    %c1 = arith.constant 1 : index
    %12 = arith.index_cast %11 : i32 to index
    %c0_7 = arith.constant 0 : index
    %c0_8 = arith.constant 0 : index
    %13 = vector.load %arg2[%c1, %12, %c0_7, %c0_8] : memref<4x9x9x128xf32, #tpu.memory_space<vmem>>, vector<1x8x8x128xf32>
    %14 = vector.shape_cast %13 : vector<1x8x8x128xf32> to vector<8x8x128xf32>
    %15 = vector.shape_cast %14 : vector<8x8x128xf32> to vector<64x128xf32>
    %c1_9 = arith.constant 1 : index
    %c0_10 = arith.constant 0 : index
    %c0_11 = arith.constant 0 : index
    %16 = vector.load %arg3[%c1_9, %c0_10, %c0_11] : memref<9x128x128xf32, #tpu.memory_space<vmem>>, vector<1x128x128xf32>
    %17 = vector.shape_cast %16 : vector<1x128x128xf32> to vector<128x128xf32>
    %cst_12 = arith.constant dense<0.000000e+00> : vector<64x128xf32>
    %18 = tpu.matmul %15, %17, %cst_12 {dimension_numbers = #tpu.dot_dimension_numbers<[1], [0], [0], [1], [0, 0, 1, 1], [], []>} : vector<64x128xf32>, vector<128x128xf32>, vector<64x128xf32> -> vector<64x128xf32>
    %19 = arith.addf %10, %18 : vector<64x128xf32>
    %c0_i32_13 = arith.constant 0 : i32
    %20 = arith.addi %c0_i32_13, %0 : i32
    %c0_14 = arith.constant 0 : index
    %21 = arith.index_cast %20 : i32 to index
    %c1_15 = arith.constant 1 : index
    %c0_16 = arith.constant 0 : index
    %22 = vector.load %arg2[%c0_14, %21, %c1_15, %c0_16] : memref<4x9x9x128xf32, #tpu.memory_space<vmem>>, vector<1x8x8x128xf32>
    %23 = vector.shape_cast %22 : vector<1x8x8x128xf32> to vector<8x8x128xf32>
    %24 = vector.shape_cast %23 : vector<8x8x128xf32> to vector<64x128xf32>
    %c2 = arith.constant 2 : index
    %c0_17 = arith.constant 0 : index
    %c0_18 = arith.constant 0 : index
    %25 = vector.load %arg3[%c2, %c0_17, %c0_18] : memref<9x128x128xf32, #tpu.memory_space<vmem>>, vector<1x128x128xf32>
    %26 = vector.shape_cast %25 : vector<1x128x128xf32> to vector<128x128xf32>
    %cst_19 = arith.constant dense<0.000000e+00> : vector<64x128xf32>
    %27 = tpu.matmul %24, %26, %cst_19 {dimension_numbers = #tpu.dot_dimension_numbers<[1], [0], [0], [1], [0, 0, 1, 1], [], []>} : vector<64x128xf32>, vector<128x128xf32>, vector<64x128xf32> -> vector<64x128xf32>
    %28 = arith.addf %19, %27 : vector<64x128xf32>
    %c0_i32_20 = arith.constant 0 : i32
    %29 = arith.addi %c0_i32_20, %0 : i32
    %c2_21 = arith.constant 2 : index
    %30 = arith.index_cast %29 : i32 to index
    %c0_22 = arith.constant 0 : index
    %c0_23 = arith.constant 0 : index
    %31 = vector.load %arg2[%c2_21, %30, %c0_22, %c0_23] : memref<4x9x9x128xf32, #tpu.memory_space<vmem>>, vector<1x8x8x128xf32>
    %32 = vector.shape_cast %31 : vector<1x8x8x128xf32> to vector<8x8x128xf32>
    %33 = vector.shape_cast %32 : vector<8x8x128xf32> to vector<64x128xf32>
    %c3 = arith.constant 3 : index
    %c0_24 = arith.constant 0 : index
    %c0_25 = arith.constant 0 : index
    %34 = vector.load %arg3[%c3, %c0_24, %c0_25] : memref<9x128x128xf32, #tpu.memory_space<vmem>>, vector<1x128x128xf32>
    %35 = vector.shape_cast %34 : vector<1x128x128xf32> to vector<128x128xf32>
    %cst_26 = arith.constant dense<0.000000e+00> : vector<64x128xf32>
    %36 = tpu.matmul %33, %35, %cst_26 {dimension_numbers = #tpu.dot_dimension_numbers<[1], [0], [0], [1], [0, 0, 1, 1], [], []>} : vector<64x128xf32>, vector<128x128xf32>, vector<64x128xf32> -> vector<64x128xf32>
    %37 = arith.addf %28, %36 : vector<64x128xf32>
    %c0_i32_27 = arith.constant 0 : i32
    %38 = arith.addi %c0_i32_27, %0 : i32
    %c3_28 = arith.constant 3 : index
    %39 = arith.index_cast %38 : i32 to index
    %c0_29 = arith.constant 0 : index
    %c0_30 = arith.constant 0 : index
    %40 = vector.load %arg2[%c3_28, %39, %c0_29, %c0_30] : memref<4x9x9x128xf32, #tpu.memory_space<vmem>>, vector<1x8x8x128xf32>
    %41 = vector.shape_cast %40 : vector<1x8x8x128xf32> to vector<8x8x128xf32>
    %42 = vector.shape_cast %41 : vector<8x8x128xf32> to vector<64x128xf32>
    %c4 = arith.constant 4 : index
    %c0_31 = arith.constant 0 : index
    %c0_32 = arith.constant 0 : index
    %43 = vector.load %arg3[%c4, %c0_31, %c0_32] : memref<9x128x128xf32, #tpu.memory_space<vmem>>, vector<1x128x128xf32>
    %44 = vector.shape_cast %43 : vector<1x128x128xf32> to vector<128x128xf32>
    %cst_33 = arith.constant dense<0.000000e+00> : vector<64x128xf32>
    %45 = tpu.matmul %42, %44, %cst_33 {dimension_numbers = #tpu.dot_dimension_numbers<[1], [0], [0], [1], [0, 0, 1, 1], [], []>} : vector<64x128xf32>, vector<128x128xf32>, vector<64x128xf32> -> vector<64x128xf32>
    %46 = arith.addf %37, %45 : vector<64x128xf32>
    %c0_i32_34 = arith.constant 0 : i32
    %47 = arith.addi %c0_i32_34, %0 : i32
    %c2_35 = arith.constant 2 : index
    %48 = arith.index_cast %47 : i32 to index
    %c1_36 = arith.constant 1 : index
    %c0_37 = arith.constant 0 : index
    %49 = vector.load %arg2[%c2_35, %48, %c1_36, %c0_37] : memref<4x9x9x128xf32, #tpu.memory_space<vmem>>, vector<1x8x8x128xf32>
    %50 = vector.shape_cast %49 : vector<1x8x8x128xf32> to vector<8x8x128xf32>
    %51 = vector.shape_cast %50 : vector<8x8x128xf32> to vector<64x128xf32>
    %c5 = arith.constant 5 : index
    %c0_38 = arith.constant 0 : index
    %c0_39 = arith.constant 0 : index
    %52 = vector.load %arg3[%c5, %c0_38, %c0_39] : memref<9x128x128xf32, #tpu.memory_space<vmem>>, vector<1x128x128xf32>
    %53 = vector.shape_cast %52 : vector<1x128x128xf32> to vector<128x128xf32>
    %cst_40 = arith.constant dense<0.000000e+00> : vector<64x128xf32>
    %54 = tpu.matmul %51, %53, %cst_40 {dimension_numbers = #tpu.dot_dimension_numbers<[1], [0], [0], [1], [0, 0, 1, 1], [], []>} : vector<64x128xf32>, vector<128x128xf32>, vector<64x128xf32> -> vector<64x128xf32>
    %55 = arith.addf %46, %54 : vector<64x128xf32>
    %c1_i32 = arith.constant 1 : i32
    %56 = arith.addi %c1_i32, %0 : i32
    %c0_41 = arith.constant 0 : index
    %57 = arith.index_cast %56 : i32 to index
    %c0_42 = arith.constant 0 : index
    %c0_43 = arith.constant 0 : index
    %58 = vector.load %arg2[%c0_41, %57, %c0_42, %c0_43] : memref<4x9x9x128xf32, #tpu.memory_space<vmem>>, vector<1x8x8x128xf32>
    %59 = vector.shape_cast %58 : vector<1x8x8x128xf32> to vector<8x8x128xf32>
    %60 = vector.shape_cast %59 : vector<8x8x128xf32> to vector<64x128xf32>
    %c6 = arith.constant 6 : index
    %c0_44 = arith.constant 0 : index
    %c0_45 = arith.constant 0 : index
    %61 = vector.load %arg3[%c6, %c0_44, %c0_45] : memref<9x128x128xf32, #tpu.memory_space<vmem>>, vector<1x128x128xf32>
    %62 = vector.shape_cast %61 : vector<1x128x128xf32> to vector<128x128xf32>
    %cst_46 = arith.constant dense<0.000000e+00> : vector<64x128xf32>
    %63 = tpu.matmul %60, %62, %cst_46 {dimension_numbers = #tpu.dot_dimension_numbers<[1], [0], [0], [1], [0, 0, 1, 1], [], []>} : vector<64x128xf32>, vector<128x128xf32>, vector<64x128xf32> -> vector<64x128xf32>
    %64 = arith.addf %55, %63 : vector<64x128xf32>
    %c1_i32_47 = arith.constant 1 : i32
    %65 = arith.addi %c1_i32_47, %0 : i32
    %c1_48 = arith.constant 1 : index
    %66 = arith.index_cast %65 : i32 to index
    %c0_49 = arith.constant 0 : index
    %c0_50 = arith.constant 0 : index
    %67 = vector.load %arg2[%c1_48, %66, %c0_49, %c0_50] : memref<4x9x9x128xf32, #tpu.memory_space<vmem>>, vector<1x8x8x128xf32>
    %68 = vector.shape_cast %67 : vector<1x8x8x128xf32> to vector<8x8x128xf32>
    %69 = vector.shape_cast %68 : vector<8x8x128xf32> to vector<64x128xf32>
    %c7 = arith.constant 7 : index
    %c0_51 = arith.constant 0 : index
    %c0_52 = arith.constant 0 : index
    %70 = vector.load %arg3[%c7, %c0_51, %c0_52] : memref<9x128x128xf32, #tpu.memory_space<vmem>>, vector<1x128x128xf32>
    %71 = vector.shape_cast %70 : vector<1x128x128xf32> to vector<128x128xf32>
    %cst_53 = arith.constant dense<0.000000e+00> : vector<64x128xf32>
    %72 = tpu.matmul %69, %71, %cst_53 {dimension_numbers = #tpu.dot_dimension_numbers<[1], [0], [0], [1], [0, 0, 1, 1], [], []>} : vector<64x128xf32>, vector<128x128xf32>, vector<64x128xf32> -> vector<64x128xf32>
    %73 = arith.addf %64, %72 : vector<64x128xf32>
    %c1_i32_54 = arith.constant 1 : i32
    %74 = arith.addi %c1_i32_54, %0 : i32
    %c0_55 = arith.constant 0 : index
    %75 = arith.index_cast %74 : i32 to index
    %c1_56 = arith.constant 1 : index
    %c0_57 = arith.constant 0 : index
    %76 = vector.load %arg2[%c0_55, %75, %c1_56, %c0_57] : memref<4x9x9x128xf32, #tpu.memory_space<vmem>>, vector<1x8x8x128xf32>
    %77 = vector.shape_cast %76 : vector<1x8x8x128xf32> to vector<8x8x128xf32>
    %78 = vector.shape_cast %77 : vector<8x8x128xf32> to vector<64x128xf32>
    %c8 = arith.constant 8 : index
    %c0_58 = arith.constant 0 : index
    %c0_59 = arith.constant 0 : index
    %79 = vector.load %arg3[%c8, %c0_58, %c0_59] : memref<9x128x128xf32, #tpu.memory_space<vmem>>, vector<1x128x128xf32>
    %80 = vector.shape_cast %79 : vector<1x128x128xf32> to vector<128x128xf32>
    %cst_60 = arith.constant dense<0.000000e+00> : vector<64x128xf32>
    %81 = tpu.matmul %78, %80, %cst_60 {dimension_numbers = #tpu.dot_dimension_numbers<[1], [0], [0], [1], [0, 0, 1, 1], [], []>} : vector<64x128xf32>, vector<128x128xf32>, vector<64x128xf32> -> vector<64x128xf32>
    %82 = arith.addf %73, %81 : vector<64x128xf32>
    %c0_61 = arith.constant 0 : index
    %c0_62 = arith.constant 0 : index
    %83 = vector.load %arg4[%c0_61, %c0_62] : memref<1x128xf32, #tpu.memory_space<vmem>>, vector<1x128xf32>
    %84 = vector.broadcast %83 : vector<1x128xf32> to vector<64x128xf32>
    %85 = arith.addf %82, %84 : vector<64x128xf32>
    %cst_63 = arith.constant 0.000000e+00 : f32
    %86 = vector.broadcast %cst_63 : f32 to vector<64x128xf32>
    %87 = arith.maximumf %85, %86 : vector<64x128xf32>
    %88 = vector.shape_cast %87 : vector<64x128xf32> to vector<1x8x8x128xf32>
    %c0_64 = arith.constant 0 : index
    %c0_65 = arith.constant 0 : index
    %c0_66 = arith.constant 0 : index
    %c0_67 = arith.constant 0 : index
    %89 = vector.load %arg5[%c0_64, %c0_65, %c0_66, %c0_67] : memref<1x8x8x128xf32, #tpu.memory_space<vmem>>, vector<1x8x8x128xf32>
    tpu.vector_store %arg5[%c0_64, %c0_65, %c0_66, %c0_67], %88 {strides = array<i32>} : memref<1x8x8x128xf32, #tpu.memory_space<vmem>>, vector<1x8x8x128xf32>,
    return
  }
  func.func @transform_0(%arg0: i32, %arg1: i32) -> (i32, i32, i32, i32) {
    %c0_i32 = arith.constant 0 : i32
    %c0_i32_0 = arith.constant 0 : i32
    %c0_i32_1 = arith.constant 0 : i32
    %c0_i32_2 = arith.constant 0 : i32
    return %arg0, %c0_i32, %c0_i32_0, %c0_i32_1 : i32, i32, i32, i32
  }
  func.func @transform_1(%arg0: i32, %arg1: i32) -> (i32, i32, i32) {
    %c0_i32 = arith.constant 0 : i32
    %c0_i32_0 = arith.constant 0 : i32
    %c0_i32_1 = arith.constant 0 : i32
    %c0_i32_2 = arith.constant 0 : i32
    return %c0_i32, %c0_i32_0, %c0_i32_1 : i32, i32, i32
  }
  func.func @transform_2(%arg0: i32, %arg1: i32) -> (i32, i32) {
    %c0_i32 = arith.constant 0 : i32
    %c0_i32_0 = arith.constant 0 : i32
    %c0_i32_1 = arith.constant 0 : i32
    return %c0_i32, %c0_i32_0 : i32, i32
  }
  func.func @transform_3(%arg0: i32, %arg1: i32) -> (i32, i32, i32, i32) {
    %c0_i32 = arith.constant 0 : i32
    %c0_i32_0 = arith.constant 0 : i32
    %c0_i32_1 = arith.constant 0 : i32
    return %arg0, %arg1, %c0_i32, %c0_i32_0 : i32, i32, i32, i32
  }
}

module attributes {stable_mosaic.version = 11 : i64} {
  func.func @_mm_bias_proj_relu_kernel(%arg0: i32, %arg1: memref<128x128xf32, #tpu.memory_space<vmem>>, %arg2: memref<128x128xf32, #tpu.memory_space<vmem>>, %arg3: memref<1x128xf32, #tpu.memory_space<vmem>>, %arg4: memref<128x128xf32, #tpu.memory_space<vmem>>, %arg5: memref<128x128xf32, #tpu.memory_space<vmem>>, %arg6: memref<1x128xf32, #tpu.memory_space<vmem>>, %arg7: memref<128x128xf32, #tpu.memory_space<vmem>>) attributes {dimension_semantics = [#tpu.dimension_semantics<parallel>], iteration_bounds = array<i64: 1>, scalar_prefetch = 0 : i64, scratch_operands = 0 : i64, tpu.core_type = #tpu.core_type<tc>, window_params = [{transform_indices = @transform_0, window_bounds = array<i64: 128, 128>}, {pipeline_mode = #tpu.pipeline_mode<synchronous>, transform_indices = @transform_1, window_bounds = array<i64: 128, 128>}, {pipeline_mode = #tpu.pipeline_mode<synchronous>, transform_indices = @transform_2, window_bounds = array<i64: 1, 128>}, {transform_indices = @transform_3, window_bounds = array<i64: 128, 128>}, {pipeline_mode = #tpu.pipeline_mode<synchronous>, transform_indices = @transform_4, window_bounds = array<i64: 128, 128>}, {pipeline_mode = #tpu.pipeline_mode<synchronous>, transform_indices = @transform_5, window_bounds = array<i64: 1, 128>}, {transform_indices = @transform_6, window_bounds = array<i64: 128, 128>}]} {
    %c0 = arith.constant 0 : index
    %c0_0 = arith.constant 0 : index
    %0 = vector.load %arg1[%c0, %c0_0] : memref<128x128xf32, #tpu.memory_space<vmem>>, vector<128x128xf32>
    %c0_1 = arith.constant 0 : index
    %c0_2 = arith.constant 0 : index
    %1 = vector.load %arg2[%c0_1, %c0_2] : memref<128x128xf32, #tpu.memory_space<vmem>>, vector<128x128xf32>
    %cst = arith.constant dense<0.000000e+00> : vector<128x128xf32>
    %2 = tpu.matmul %0, %1, %cst {dimension_numbers = #tpu.dot_dimension_numbers<[1], [0], [0], [1], [0, 0, 1, 1], [], []>} : vector<128x128xf32>, vector<128x128xf32>, vector<128x128xf32> -> vector<128x128xf32>
    %c0_3 = arith.constant 0 : index
    %c0_4 = arith.constant 0 : index
    %3 = vector.load %arg4[%c0_3, %c0_4] : memref<128x128xf32, #tpu.memory_space<vmem>>, vector<128x128xf32>
    %c0_5 = arith.constant 0 : index
    %c0_6 = arith.constant 0 : index
    %4 = vector.load %arg5[%c0_5, %c0_6] : memref<128x128xf32, #tpu.memory_space<vmem>>, vector<128x128xf32>
    %cst_7 = arith.constant dense<0.000000e+00> : vector<128x128xf32>
    %5 = tpu.matmul %3, %4, %cst_7 {dimension_numbers = #tpu.dot_dimension_numbers<[1], [0], [0], [1], [0, 0, 1, 1], [], []>} : vector<128x128xf32>, vector<128x128xf32>, vector<128x128xf32> -> vector<128x128xf32>
    %c0_8 = arith.constant 0 : index
    %c0_9 = arith.constant 0 : index
    %6 = vector.load %arg3[%c0_8, %c0_9] : memref<1x128xf32, #tpu.memory_space<vmem>>, vector<1x128xf32>
    %7 = vector.broadcast %6 : vector<1x128xf32> to vector<128x128xf32>
    %8 = arith.addf %2, %7 : vector<128x128xf32>
    %9 = arith.addf %8, %5 : vector<128x128xf32>
    %c0_10 = arith.constant 0 : index
    %c0_11 = arith.constant 0 : index
    %10 = vector.load %arg6[%c0_10, %c0_11] : memref<1x128xf32, #tpu.memory_space<vmem>>, vector<1x128xf32>
    %11 = vector.broadcast %10 : vector<1x128xf32> to vector<128x128xf32>
    %12 = arith.addf %9, %11 : vector<128x128xf32>
    %cst_12 = arith.constant 0.000000e+00 : f32
    %13 = vector.broadcast %cst_12 : f32 to vector<128x128xf32>
    %14 = arith.maximumf %12, %13 : vector<128x128xf32>
    %c0_13 = arith.constant 0 : index
    %c0_14 = arith.constant 0 : index
    %15 = vector.load %arg7[%c0_13, %c0_14] : memref<128x128xf32, #tpu.memory_space<vmem>>, vector<128x128xf32>
    tpu.vector_store %arg7[%c0_13, %c0_14], %14 {strides = array<i32>} : memref<128x128xf32, #tpu.memory_space<vmem>>, vector<128x128xf32>,
    return
  }
  func.func @transform_0(%arg0: i32) -> (i32, i32) {
    %c0_i32 = arith.constant 0 : i32
    %c0_i32_0 = arith.constant 0 : i32
    return %arg0, %c0_i32 : i32, i32
  }
  func.func @transform_1(%arg0: i32) -> (i32, i32) {
    %c0_i32 = arith.constant 0 : i32
    %c0_i32_0 = arith.constant 0 : i32
    %c0_i32_1 = arith.constant 0 : i32
    return %c0_i32, %c0_i32_0 : i32, i32
  }
  func.func @transform_2(%arg0: i32) -> (i32, i32) {
    %c0_i32 = arith.constant 0 : i32
    %c0_i32_0 = arith.constant 0 : i32
    %c0_i32_1 = arith.constant 0 : i32
    return %c0_i32, %c0_i32_0 : i32, i32
  }
  func.func @transform_3(%arg0: i32) -> (i32, i32) {
    %c0_i32 = arith.constant 0 : i32
    %c0_i32_0 = arith.constant 0 : i32
    return %arg0, %c0_i32 : i32, i32
  }
  func.func @transform_4(%arg0: i32) -> (i32, i32) {
    %c0_i32 = arith.constant 0 : i32
    %c0_i32_0 = arith.constant 0 : i32
    %c0_i32_1 = arith.constant 0 : i32
    return %c0_i32, %c0_i32_0 : i32, i32
  }
  func.func @transform_5(%arg0: i32) -> (i32, i32) {
    %c0_i32 = arith.constant 0 : i32
    %c0_i32_0 = arith.constant 0 : i32
    %c0_i32_1 = arith.constant 0 : i32
    return %c0_i32, %c0_i32_0 : i32, i32
  }
  func.func @transform_6(%arg0: i32) -> (i32, i32) {
    %c0_i32 = arith.constant 0 : i32
    %c0_i32_0 = arith.constant 0 : i32
    return %arg0, %c0_i32 : i32, i32
  }
}

</mosaic_0001>

<llo_original>
// kernel: blocks_forward.3
$region0: #{blocks_forward.3}
  #allocation0 [shape = 'u32[]', space=smem, size = 0x4, offset = 0x4, fixed_abs, tag = 'smem constant byte address 0x4 - core index']
  #allocation1 [shape = 'u32[144,128]{1,0:T(1,128)}', space=vmem, size = 0x12000, scoped, tag = 'internal scratch']
  %s0 = inlined_call_operand.vmem [shape: f32[512,128], index: 0, kind: input, shape index: {}]
  %s1 = inlined_call_operand.vmem [shape: f32[128,128], index: 1, kind: input, shape index: {}]
  %s2 = inlined_call_operand.vmem [shape: f32[1,128], index: 2, kind: input, shape index: {}]
  %s3 = inlined_call_operand.vmem [shape: f32[512,128], index: 3, kind: output, shape index: {}]
  %s4 = sld [smem:[#allocation0]]
  $region45: #{blocks_forward.3} parent=0
    _
  %s6 = ssub.s32 1, %s4
  %s7 = scalar_select 0, %s6, %s4
  loop: start=0, step=1, limit=4
  $region2: #{blocks_forward.3} parent=0 // loop_pre_header
    _
  $region3: #{blocks_forward.3} parent=0 // loop_header
    %s9 = sphi 0, %s13
    %p10 = scmp.ge.s32.totalorder %s9, 4
    %s19 = sphi 0, %s21
    %s22 = sphi 0, %s19
    %s23 = sphi 0, %s22
    %s39 = sphi 0, %s23
    %s43 = sphi 0, %s43
    %s45 = sphi 0, %s43
    %s46 = sphi 0, %s45
    %s60 = sphi 0, %s46
    %s64 = sphi 0, %s64
    %s66 = sphi 0, %s64
    %s67 = sphi 0, %s66
    %s81 = sphi 0, %s67
    %s87 = sphi 0, %s89
    %s90 = sphi 0, %s87
    %s91 = sphi 0, %s90
    %s107 = sphi 0, %s91
  $region4: #{blocks_forward.3} parent=0 // loop_header_branch
    %12 = sbr.rel (%p10) target = $region8
  $region5: #{blocks_forward.3} parent=0 // loop_body
    %s14 = ssub.s32 %s9, 1
    %s15 = ssub.s32 %s9, 2
    %s16 = sadd.s32 %s9, 1
    %s17 = ssub.s32 %s9, %s16
    %p18 = scmp.eq.s32.totalorder %s17, 0
    %s20 = sadd.s32 %s19, 1
    %s21 = scalar_select %p18, %s19, %s20
    %p24 = pneg %p18
    %p25 = scmp.eq.s32.totalorder %s9, 1
    %p26 = por %p24, %p25
    %p27 = scmp.ne.s32.totalorder %s19, %s22
    %p28 = scmp.eq.s32.totalorder %s9, 0
    %p29 = por %p27, %p28
    %p30 = scmp.ne.s32.totalorder %s19, %s22
    %p31 = scmp.eq.s32.totalorder %s14, 1
    %p32 = por %p30, %p31
    %p33 = scmp.ne.s32.totalorder %s22, %s23
    %p34 = scmp.eq.s32.totalorder %s14, 0
    %p35 = por %p33, %p34
    %p36 = scmp.ne.s32.totalorder %s22, %s23
    %p37 = scmp.eq.s32.totalorder %s15, 1
    %p38 = por %p36, %p37
    %p40 = scmp.ne.s32.totalorder %s23, %s39
    %p41 = scmp.eq.s32.totalorder %s15, 0
    %p42 = por %p40, %p41
    %s44 = sadd.s32 %s43, 1
    %p47 = scmp.eq.s32.totalorder %s9, 1
    %p48 = scmp.ne.s32.totalorder %s43, %s45
    %p49 = scmp.eq.s32.totalorder %s9, 0
    %p50 = por %p48, %p49
    %p51 = scmp.ne.s32.totalorder %s43, %s45
    %p52 = scmp.eq.s32.totalorder %s14, 1
    %p53 = por %p51, %p52
    %p54 = scmp.ne.s32.totalorder %s45, %s46
    %p55 = scmp.eq.s32.totalorder %s14, 0
    %p56 = por %p54, %p55
    %p57 = scmp.ne.s32.totalorder %s45, %s46
    %p58 = scmp.eq.s32.totalorder %s15, 1
    %p59 = por %p57, %p58
    %p61 = scmp.ne.s32.totalorder %s46, %s60
    %p62 = scmp.eq.s32.totalorder %s15, 0
    %p63 = por %p61, %p62
    %s65 = sadd.s32 %s64, 1
    %p68 = scmp.eq.s32.totalorder %s9, 1
    %p69 = scmp.ne.s32.totalorder %s64, %s66
    %p70 = scmp.eq.s32.totalorder %s9, 0
    %p71 = por %p69, %p70
    %p72 = scmp.ne.s32.totalorder %s64, %s66
    %p73 = scmp.eq.s32.totalorder %s14, 1
    %p74 = por %p72, %p73
    %p75 = scmp.ne.s32.totalorder %s66, %s67
    %p76 = scmp.eq.s32.totalorder %s14, 0
    %p77 = por %p75, %p76
    %p78 = scmp.ne.s32.totalorder %s66, %s67
    %p79 = scmp.eq.s32.totalorder %s15, 1
    %p80 = por %p78, %p79
    %p82 = scmp.ne.s32.totalorder %s67, %s81
    %p83 = scmp.eq.s32.totalorder %s15, 0
    %p84 = por %p82, %p83
    %s85 = ssub.s32 %s9, %s16
    %p86 = scmp.eq.s32.totalorder %s85, 0
    %s88 = sadd.s32 %s87, 1
    %s89 = scalar_select %p86, %s87, %s88
    %p92 = pneg %p86
    %p93 = scmp.eq.s32.totalorder %s9, 1
    %p94 = por %p92, %p93
    %p95 = scmp.ne.s32.totalorder %s87, %s90
    %p96 = scmp.eq.s32.totalorder %s9, 0
    %p97 = por %p95, %p96
    %p98 = scmp.ne.s32.totalorder %s87, %s90
    %p99 = scmp.eq.s32.totalorder %s14, 1
    %p100 = por %p98, %p99
    %p101 = scmp.ne.s32.totalorder %s90, %s91
    %p102 = scmp.eq.s32.totalorder %s14, 0
    %p103 = por %p101, %p102
    %p104 = scmp.ne.s32.totalorder %s90, %s91
    %p105 = scmp.eq.s32.totalorder %s15, 1
    %p106 = por %p104, %p105
    %p108 = scmp.ne.s32.totalorder %s91, %s107
    %p109 = scmp.eq.s32.totalorder %s15, 0
    %p110 = por %p108, %p109
    %p111 = scmp.le.s32.totalorder 1, %s9
    %p112 = scmp.lt.s32.totalorder %s9, 3
    %p113 = pnand %p111, %p112
    %p114 = pneg %p113
    // Predicated region
    $region9: #{blocks_forward.3} parent=5 // pred_check
      _
    $region10: #{blocks_forward.3} parent=5 // pred_check_branch
      %116 = sbr.rel (%p113) target = $region12
    $region11: #{blocks_forward.3} parent=5 // pred_region
      %s117 = ssub.s32 %s9, 1
      // Predicated region
      $region13: #{blocks_forward.3} parent=11 // pred_check
        %p118 = pneg %p56
      $region14: #{blocks_forward.3} parent=11 // pred_check_branch
        %120 = sbr.rel (%p118) target = $region16
      $region15: #{blocks_forward.3} parent=11 // pred_region
        _
      $region16: #{blocks_forward.3} parent=11 // pred_fallthru
        _
      // Predicated region
      $region17: #{blocks_forward.3} parent=11 // pred_check
        %p121 = pneg %p77
      $region18: #{blocks_forward.3} parent=11 // pred_check_branch
        %123 = sbr.rel (%p121) target = $region20
      $region19: #{blocks_forward.3} parent=11 // pred_region
        _
      $region20: #{blocks_forward.3} parent=11 // pred_fallthru
        _
    $region12: #{blocks_forward.3} parent=5 // pred_fallthru
      _
    %p124 = scmp.lt.s32.totalorder %s9, 2
    // Predicated region
    $region21: #{blocks_forward.3} parent=5 // pred_check
      %p125 = pneg %p124
    $region22: #{blocks_forward.3} parent=5 // pred_check_branch
      %127 = sbr.rel (%p125) target = $region24
    $region23: #{blocks_forward.3} parent=5 // pred_region
      // Predicated region
      $region25: #{blocks_forward.3} parent=23 // pred_check
        %p128 = pneg %p29
      $region26: #{blocks_forward.3} parent=23 // pred_check_branch
        %130 = sbr.rel (%p128) target = $region28
      $region27: #{blocks_forward.3} parent=23 // pred_region
        %s131 = smul.u32 32, %s9
        %p132 = scmp.lt.s32.totalorder %s131, 63
        %s133 = scalar_select %p132, %s131, 63
        %s134 = smul.addr %s133, 8
        %s135 = scalar_lea.vmem %s0, %s134
        %s136 = smul.u32 32, %s9
      $region28: #{blocks_forward.3} parent=23 // pred_fallthru
        _
    $region24: #{blocks_forward.3} parent=5 // pred_fallthru
      _
    %p137 = scmp.le.s32.totalorder 1, %s9
    %p138 = scmp.lt.s32.totalorder %s9, 3
    %p139 = pnand %p137, %p138
    %p140 = pneg %p139
    // Predicated region
    $region29: #{blocks_forward.3} parent=5 // pred_check
      _
    $region30: #{blocks_forward.3} parent=5 // pred_check_branch
      %142 = sbr.rel (%p139) target = $region32
    $region31: #{blocks_forward.3} parent=5 // pred_region
      %s143 = ssub.s32 %s9, 1
      %s144 = smul.u32 32, %s14
      %p145 = scmp.lt.s32.totalorder %s144, 63
      %s146 = scalar_select %p145, %s144, 63
      %s147 = smul.addr %s146, 8
      %s148 = scalar_lea.vmem %s0, %s147
      %p149 = pneg %p35
      %p150 = pneg %p32
      %p151 = pneg %p56
      %p152 = pneg %p53
      %p153 = pneg %p77
      %p154 = pneg %p74
      %p155 = pneg %p103
      %p156 = pneg %p100
      %s157 = smul.u32 32, %s14
      %p158 = scmp.lt.s32.totalorder %s157, 63
      %s159 = scalar_select %p158, %s157, 63
      %s160 = smul.addr %s159, 8
      %s161 = scalar_lea.vmem %s3, %s160
      %s162 = smul.u32 32, %s14
      %p163 = scmp.lt.s32.totalorder %s162, 63
      %s164 = scalar_select %p163, %s162, 63
      %s165 = smul.addr %s164, 8
      %s166 = scalar_lea.vmem %s0, %s165
      %s167 = smul.u32 32, %s14
      %s168 = smul.u32 32, %s14
      %p169 = scmp.lt.s32.totalorder %s168, 63
      %s170 = scalar_select %p169, %s168, 63
      %s171 = smul.addr %s170, 8
      %s172 = scalar_lea.vmem %s3, %s171
      %s173 = smul.u32 32, %s14
      %v174 = vld [vmem:[%s166] sm:$0xff]
      %v175 = vld [vmem:[%s166 + $0x8] sm:$0xff]
      %v176 = vld [vmem:[%s166 + $0x10] sm:$0xff]
      %v177 = vld [vmem:[%s166 + $0x18] sm:$0xff]
      %v178 = vld [vmem:[%s166 + $0x20] sm:$0xff]
      %v179 = vld [vmem:[%s166 + $0x28] sm:$0xff]
      %v180 = vld [vmem:[%s166 + $0x30] sm:$0xff]
      %v181 = vld [vmem:[%s166 + $0x38] sm:$0xff]
      %v182 = vld [vmem:[%s166 + $0x40] sm:$0xff]
      %v183 = vld [vmem:[%s166 + $0x48] sm:$0xff]
      %v184 = vld [vmem:[%s166 + $0x50] sm:$0xff]
      %v185 = vld [vmem:[%s166 + $0x58] sm:$0xff]
      %v186 = vld [vmem:[%s166 + $0x60] sm:$0xff]
      %v187 = vld [vmem:[%s166 + $0x68] sm:$0xff]
      %v188 = vld [vmem:[%s166 + $0x70] sm:$0xff]
      %v189 = vld [vmem:[%s166 + $0x78] sm:$0xff]
      %v190 = vld [vmem:[%s166 + $0x80] sm:$0xff]
      %v191 = vld [vmem:[%s166 + $0x88] sm:$0xff]
      %v192 = vld [vmem:[%s166 + $0x90] sm:$0xff]
      %v193 = vld [vmem:[%s166 + $0x98] sm:$0xff]
      %v194 = vld [vmem:[%s166 + $0xa0] sm:$0xff]
      %v195 = vld [vmem:[%s166 + $0xa8] sm:$0xff]
      %v196 = vld [vmem:[%s166 + $0xb0] sm:$0xff]
      %v197 = vld [vmem:[%s166 + $0xb8] sm:$0xff]
      %v198 = vld [vmem:[%s166 + $0xc0] sm:$0xff]
      %v199 = vld [vmem:[%s166 + $0xc8] sm:$0xff]
      %v200 = vld [vmem:[%s166 + $0xd0] sm:$0xff]
      %v201 = vld [vmem:[%s166 + $0xd8] sm:$0xff]
      %v202 = vld [vmem:[%s166 + $0xe0] sm:$0xff]
      %v203 = vld [vmem:[%s166 + $0xe8] sm:$0xff]
      %v204 = vld [vmem:[%s166 + $0xf0] sm:$0xff]
      %v205 = vld [vmem:[%s166 + $0xf8] sm:$0xff]
      %v206 = vld [vmem:[%s1] sm:$0xff]
      %v207 = vld [vmem:[%s1 + $0x8] sm:$0xff]
      %v208 = vld [vmem:[%s1 + $0x10] sm:$0xff]
      %v209 = vld [vmem:[%s1 + $0x18] sm:$0xff]
      %v210 = vld [vmem:[%s1 + $0x20] sm:$0xff]
      %v211 = vld [vmem:[%s1 + $0x28] sm:$0xff]
      %v212 = vld [vmem:[%s1 + $0x30] sm:$0xff]
      %v213 = vld [vmem:[%s1 + $0x38] sm:$0xff]
      %v214 = vld [vmem:[%s1 + $0x40] sm:$0xff]
      %v215 = vld [vmem:[%s1 + $0x48] sm:$0xff]
      %v216 = vld [vmem:[%s1 + $0x50] sm:$0xff]
      %v217 = vld [vmem:[%s1 + $0x58] sm:$0xff]
      %v218 = vld [vmem:[%s1 + $0x60] sm:$0xff]
      %v219 = vld [vmem:[%s1 + $0x68] sm:$0xff]
      %v220 = vld [vmem:[%s1 + $0x70] sm:$0xff]
      %v221 = vld [vmem:[%s1 + $0x78] sm:$0xff]
      %v222 = vld [vmem:[%s2] sm:$0x1]
      %v224 = vlaneseq
      %v225 = vshrl.u32 %v224, 7
      %v226 = vsub.s32 0, %v225
      %v227 = vrot.slane %v222, %v226
      %229 = vmatprep.subr.mxu0 0.0
      %230 = vmatpush1.msra.mxu0 %v221
      %231 = vmatprep.subr.mxu0 0.0
      %232 = vmatpush1.msra.mxu0 %v220
      %233 = vmatprep.subr.mxu0 0.0
      %234 = vmatpush1.msra.mxu0 %v219
      %235 = vmatprep.subr.mxu0 0.0
      %236 = vmatpush1.msra.mxu0 %v218
      %237 = vmatprep.subr.mxu0 0.0
      %238 = vmatpush1.msra.mxu0 %v217
      %239 = vmatprep.subr.mxu0 0.0
      %240 = vmatpush1.msra.mxu0 %v216
      %241 = vmatprep.subr.mxu0 0.0
      %242 = vmatpush1.msra.mxu0 %v215
      %243 = vmatprep.subr.mxu0 0.0
      %244 = vmatpush1.msra.mxu0 %v214
      %245 = vmatprep.subr.mxu0 0.0
      %246 = vmatpush1.msra.mxu0 %v213
      %247 = vmatprep.subr.mxu0 0.0
      %248 = vmatpush1.msra.mxu0 %v212
      %249 = vmatprep.subr.mxu0 0.0
      %250 = vmatpush1.msra.mxu0 %v211
      %251 = vmatprep.subr.mxu0 0.0
      %252 = vmatpush1.msra.mxu0 %v210
      %253 = vmatprep.subr.mxu0 0.0
      %254 = vmatpush1.msra.mxu0 %v209
      %255 = vmatprep.subr.mxu0 0.0
      %256 = vmatpush1.msra.mxu0 %v208
      %257 = vmatprep.subr.mxu0 0.0
      %258 = vmatpush1.msra.mxu0 %v207
      %259 = vmatprep.subr.mxu0 0.0
      %260 = vmatpush1.msra.mxu0 %v206
      %261 = vmatprep.subr.mxu0 0.0
      %262 = vmatpush2.msra.mxu0 0.0
      %263 = vmatprep.subr.mxu0 0.0
      %264 = vmatpush2.msra.mxu0 0.0
      %265 = vmatprep.subr.mxu0 0.0
      %266 = vmatpush2.msra.mxu0 0.0
      %267 = vmatprep.subr.mxu0 0.0
      %268 = vmatpush2.msra.mxu0 0.0
      %269 = vmatprep.subr.mxu0 0.0
      %270 = vmatpush2.msra.mxu0 0.0
      %271 = vmatprep.subr.mxu0 0.0
      %272 = vmatpush2.msra.mxu0 0.0
      %273 = vmatprep.subr.mxu0 0.0
      %274 = vmatpush2.msra.mxu0 0.0
      %275 = vmatprep.subr.mxu0 0.0
      %276 = vmatpush2.msra.mxu0 0.0
      %277 = vmatprep.subr.mxu0 0.0
      %278 = vmatpush2.msra.mxu0 0.0
      %279 = vmatprep.subr.mxu0 0.0
      %280 = vmatpush2.msra.mxu0 0.0
      %281 = vmatprep.subr.mxu0 0.0
      %282 = vmatpush2.msra.mxu0 0.0
      %283 = vmatprep.subr.mxu0 0.0
      %284 = vmatpush2.msra.mxu0 0.0
      %285 = vmatprep.subr.mxu0 0.0
      %286 = vmatpush2.msra.mxu0 0.0
      %287 = vmatprep.subr.mxu0 0.0
      %288 = vmatpush2.msra.mxu0 0.0
      %289 = vmatprep.subr.mxu0 0.0
      %290 = vmatpush2.msra.mxu0 0.0
      %291 = vmatprep.subr.mxu0 0.0
      %292 = vmatpush2.msra.mxu0 0.0
      %293 = vmatprep.mubr.f32.mxu0 0.0
      %294 = vmatmul.mubr.f32.gmra.mxu0 %v174
      %v295 = vpop.f32.mrf.mxu0
      %v296 = vadd.f32 %v227, %v295
      %v297 = vpop.f32.mrf.mxu0
      %298 = vmatprep.mubr.f32.mxu0 0.0
      %299 = vmatmul.mubr.f32.gmra.mxu0 %v175
      %v300 = vpop.f32.mrf.mxu0
      %v301 = vadd.f32 %v227, %v300
      %v302 = vpop.f32.mrf.mxu0
      %303 = vmatprep.mubr.f32.mxu0 0.0
      %304 = vmatmul.mubr.f32.gmra.mxu0 %v176
      %v305 = vpop.f32.mrf.mxu0
      %v306 = vadd.f32 %v227, %v305
      %v307 = vpop.f32.mrf.mxu0
      %308 = vmatprep.mubr.f32.mxu0 0.0
      %309 = vmatmul.mubr.f32.gmra.mxu0 %v177
      %v310 = vpop.f32.mrf.mxu0
      %v311 = vadd.f32 %v227, %v310
      %v312 = vpop.f32.mrf.mxu0
      %313 = vmatprep.mubr.f32.mxu0 0.0
      %314 = vmatmul.mubr.f32.gmra.mxu0 %v178
      %v315 = vpop.f32.mrf.mxu0
      %v316 = vadd.f32 %v227, %v315
      %v317 = vpop.f32.mrf.mxu0
      %318 = vmatprep.mubr.f32.mxu0 0.0
      %319 = vmatmul.mubr.f32.gmra.mxu0 %v179
      %v320 = vpop.f32.mrf.mxu0
      %v321 = vadd.f32 %v227, %v320
      %v322 = vpop.f32.mrf.mxu0
      %323 = vmatprep.mubr.f32.mxu0 0.0
      %324 = vmatmul.mubr.f32.gmra.mxu0 %v180
      %v325 = vpop.f32.mrf.mxu0
      %v326 = vadd.f32 %v227, %v325
      %v327 = vpop.f32.mrf.mxu0
      %328 = vmatprep.mubr.f32.mxu0 0.0
      %329 = vmatmul.mubr.f32.gmra.mxu0 %v181
      %v330 = vpop.f32.mrf.mxu0
      %v331 = vadd.f32 %v227, %v330
      %v332 = vpop.f32.mrf.mxu0
      %333 = vmatprep.mubr.f32.mxu0 0.0
      %334 = vmatmul.mubr.f32.gmra.mxu0 %v182
      %v335 = vpop.f32.mrf.mxu0
      %v336 = vadd.f32 %v227, %v335
      %v337 = vpop.f32.mrf.mxu0
      %338 = vmatprep.mubr.f32.mxu0 0.0
      %339 = vmatmul.mubr.f32.gmra.mxu0 %v183
      %v340 = vpop.f32.mrf.mxu0
      %v341 = vadd.f32 %v227, %v340
      %v342 = vpop.f32.mrf.mxu0
      %343 = vmatprep.mubr.f32.mxu0 0.0
      %344 = vmatmul.mubr.f32.gmra.mxu0 %v184
      %v345 = vpop.f32.mrf.mxu0
      %v346 = vadd.f32 %v227, %v345
      %v347 = vpop.f32.mrf.mxu0
      %348 = vmatprep.mubr.f32.mxu0 0.0
      %349 = vmatmul.mubr.f32.gmra.mxu0 %v185
      %v350 = vpop.f32.mrf.mxu0
      %v351 = vadd.f32 %v227, %v350
      %v352 = vpop.f32.mrf.mxu0
      %353 = vmatprep.mubr.f32.mxu0 0.0
      %354 = vmatmul.mubr.f32.gmra.mxu0 %v186
      %v355 = vpop.f32.mrf.mxu0
      %v356 = vadd.f32 %v227, %v355
      %v357 = vpop.f32.mrf.mxu0
      %358 = vmatprep.mubr.f32.mxu0 0.0
      %359 = vmatmul.mubr.f32.gmra.mxu0 %v187
      %v360 = vpop.f32.mrf.mxu0
      %v361 = vadd.f32 %v227, %v360
      %v362 = vpop.f32.mrf.mxu0
      %363 = vmatprep.mubr.f32.mxu0 0.0
      %364 = vmatmul.mubr.f32.gmra.mxu0 %v188
      %v365 = vpop.f32.mrf.mxu0
      %v366 = vadd.f32 %v227, %v365
      %v367 = vpop.f32.mrf.mxu0
      %368 = vmatprep.mubr.f32.mxu0 0.0
      %369 = vmatmul.mubr.f32.gmra.mxu0 %v189
      %v370 = vpop.f32.mrf.mxu0
      %v371 = vadd.f32 %v227, %v370
      %v372 = vpop.f32.mrf.mxu0
      %373 = vmatprep.mubr.f32.mxu0 0.0
      %374 = vmatmul.mubr.f32.gmra.mxu0 %v190
      %v375 = vpop.f32.mrf.mxu0
      %v376 = vadd.f32 %v227, %v375
      %v377 = vpop.f32.mrf.mxu0
      %378 = vmatprep.mubr.f32.mxu0 0.0
      %379 = vmatmul.mubr.f32.gmra.mxu0 %v191
      %v380 = vpop.f32.mrf.mxu0
      %v381 = vadd.f32 %v227, %v380
      %v382 = vpop.f32.mrf.mxu0
      %383 = vmatprep.mubr.f32.mxu0 0.0
      %384 = vmatmul.mubr.f32.gmra.mxu0 %v192
      %v385 = vpop.f32.mrf.mxu0
      %v386 = vadd.f32 %v227, %v385
      %v387 = vpop.f32.mrf.mxu0
      %388 = vmatprep.mubr.f32.mxu0 0.0
      %389 = vmatmul.mubr.f32.gmra.mxu0 %v193
      %v390 = vpop.f32.mrf.mxu0
      %v391 = vadd.f32 %v227, %v390
      %v392 = vpop.f32.mrf.mxu0
      %393 = vmatprep.mubr.f32.mxu0 0.0
      %394 = vmatmul.mubr.f32.gmra.mxu0 %v194
      %v395 = vpop.f32.mrf.mxu0
      %v396 = vadd.f32 %v227, %v395
      %v397 = vpop.f32.mrf.mxu0
      %398 = vmatprep.mubr.f32.mxu0 0.0
      %399 = vmatmul.mubr.f32.gmra.mxu0 %v195
      %v400 = vpop.f32.mrf.mxu0
      %v401 = vadd.f32 %v227, %v400
      %v402 = vpop.f32.mrf.mxu0
      %403 = vmatprep.mubr.f32.mxu0 0.0
      %404 = vmatmul.mubr.f32.gmra.mxu0 %v196
      %v405 = vpop.f32.mrf.mxu0
      %v406 = vadd.f32 %v227, %v405
      %v407 = vpop.f32.mrf.mxu0
      %408 = vmatprep.mubr.f32.mxu0 0.0
      %409 = vmatmul.mubr.f32.gmra.mxu0 %v197
      %v410 = vpop.f32.mrf.mxu0
      %v411 = vadd.f32 %v227, %v410
      %v412 = vpop.f32.mrf.mxu0
      %413 = vmatprep.mubr.f32.mxu0 0.0
      %414 = vmatmul.mubr.f32.gmra.mxu0 %v198
      %v415 = vpop.f32.mrf.mxu0
      %v416 = vadd.f32 %v227, %v415
      %v417 = vpop.f32.mrf.mxu0
      %418 = vmatprep.mubr.f32.mxu0 0.0
      %419 = vmatmul.mubr.f32.gmra.mxu0 %v199
      %v420 = vpop.f32.mrf.mxu0
      %v421 = vadd.f32 %v227, %v420
      %v422 = vpop.f32.mrf.mxu0
      %423 = vmatprep.mubr.f32.mxu0 0.0
      %424 = vmatmul.mubr.f32.gmra.mxu0 %v200
      %v425 = vpop.f32.mrf.mxu0
      %v426 = vadd.f32 %v227, %v425
      %v427 = vpop.f32.mrf.mxu0
      %428 = vmatprep.mubr.f32.mxu0 0.0
      %429 = vmatmul.mubr.f32.gmra.mxu0 %v201
      %v430 = vpop.f32.mrf.mxu0
      %v431 = vadd.f32 %v227, %v430
      %v432 = vpop.f32.mrf.mxu0
      %433 = vmatprep.mubr.f32.mxu0 0.0
      %434 = vmatmul.mubr.f32.gmra.mxu0 %v202
      %v435 = vpop.f32.mrf.mxu0
      %v436 = vadd.f32 %v227, %v435
      %v437 = vpop.f32.mrf.mxu0
      %438 = vmatprep.mubr.f32.mxu0 0.0
      %439 = vmatmul.mubr.f32.gmra.mxu0 %v203
      %v440 = vpop.f32.mrf.mxu0
      %v441 = vadd.f32 %v227, %v440
      %v442 = vpop.f32.mrf.mxu0
      %443 = vmatprep.mubr.f32.mxu0 0.0
      %444 = vmatmul.mubr.f32.gmra.mxu0 %v204
      %v445 = vpop.f32.mrf.mxu0
      %v446 = vadd.f32 %v227, %v445
      %v447 = vpop.f32.mrf.mxu0
      %448 = vmatprep.mubr.f32.mxu0 0.0
      %449 = vmatmul.mubr.f32.gmra.mxu0 %v205
      %v450 = vpop.f32.mrf.mxu0
      %v451 = vadd.f32 %v227, %v450
      %v452 = vpop.f32.mrf.mxu0
      %453 = vdwg.mxu0
      %v454 = vmax.f32 %v296, 0.0
      %v455 = vmax.f32 %v301, 0.0
      %v456 = vmax.f32 %v306, 0.0
      %v457 = vmax.f32 %v311, 0.0
      %v458 = vmax.f32 %v316, 0.0
      %v459 = vmax.f32 %v321, 0.0
      %v460 = vmax.f32 %v326, 0.0
      %v461 = vmax.f32 %v331, 0.0
      %v462 = vmax.f32 %v336, 0.0
      %v463 = vmax.f32 %v341, 0.0
      %v464 = vmax.f32 %v346, 0.0
      %v465 = vmax.f32 %v351, 0.0
      %v466 = vmax.f32 %v356, 0.0
      %v467 = vmax.f32 %v361, 0.0
      %v468 = vmax.f32 %v366, 0.0
      %v469 = vmax.f32 %v371, 0.0
      %v470 = vmax.f32 %v376, 0.0
      %v471 = vmax.f32 %v381, 0.0
      %v472 = vmax.f32 %v386, 0.0
      %v473 = vmax.f32 %v391, 0.0
      %v474 = vmax.f32 %v396, 0.0
      %v475 = vmax.f32 %v401, 0.0
      %v476 = vmax.f32 %v406, 0.0
      %v477 = vmax.f32 %v411, 0.0
      %v478 = vmax.f32 %v416, 0.0
      %v479 = vmax.f32 %v421, 0.0
      %v480 = vmax.f32 %v426, 0.0
      %v481 = vmax.f32 %v431, 0.0
      %v482 = vmax.f32 %v436, 0.0
      %v483 = vmax.f32 %v441, 0.0
      %v484 = vmax.f32 %v446, 0.0
      %v485 = vmax.f32 %v451, 0.0
      %486 = vst [vmem:[%s172] sm:$0xff] %v454
      %487 = vst [vmem:[%s172 + $0x8] sm:$0xff] %v455
      %488 = vst [vmem:[%s172 + $0x10] sm:$0xff] %v456
      %489 = vst [vmem:[%s172 + $0x18] sm:$0xff] %v457
      %490 = vst [vmem:[%s172 + $0x20] sm:$0xff] %v458
      %491 = vst [vmem:[%s172 + $0x28] sm:$0xff] %v459
      %492 = vst [vmem:[%s172 + $0x30] sm:$0xff] %v460
      %493 = vst [vmem:[%s172 + $0x38] sm:$0xff] %v461
      %494 = vst [vmem:[%s172 + $0x40] sm:$0xff] %v462
      %495 = vst [vmem:[%s172 + $0x48] sm:$0xff] %v463
      %496 = vst [vmem:[%s172 + $0x50] sm:$0xff] %v464
      %497 = vst [vmem:[%s172 + $0x58] sm:$0xff] %v465
      %498 = vst [vmem:[%s172 + $0x60] sm:$0xff] %v466
      %499 = vst [vmem:[%s172 + $0x68] sm:$0xff] %v467
      %500 = vst [vmem:[%s172 + $0x70] sm:$0xff] %v468
      %501 = vst [vmem:[%s172 + $0x78] sm:$0xff] %v469
      %502 = vst [vmem:[%s172 + $0x80] sm:$0xff] %v470
      %503 = vst [vmem:[%s172 + $0x88] sm:$0xff] %v471
      %504 = vst [vmem:[%s172 + $0x90] sm:$0xff] %v472
      %505 = vst [vmem:[%s172 + $0x98] sm:$0xff] %v473
      %506 = vst [vmem:[%s172 + $0xa0] sm:$0xff] %v474
      %507 = vst [vmem:[%s172 + $0xa8] sm:$0xff] %v475
      %508 = vst [vmem:[%s172 + $0xb0] sm:$0xff] %v476
      %509 = vst [vmem:[%s172 + $0xb8] sm:$0xff] %v477
      %510 = vst [vmem:[%s172 + $0xc0] sm:$0xff] %v478
      %511 = vst [vmem:[%s172 + $0xc8] sm:$0xff] %v479
      %512 = vst [vmem:[%s172 + $0xd0] sm:$0xff] %v480
      %513 = vst [vmem:[%s172 + $0xd8] sm:$0xff] %v481
      %514 = vst [vmem:[%s172 + $0xe0] sm:$0xff] %v482
      %515 = vst [vmem:[%s172 + $0xe8] sm:$0xff] %v483
      %516 = vst [vmem:[%s172 + $0xf0] sm:$0xff] %v484
      %517 = vst [vmem:[%s172 + $0xf8] sm:$0xff] %v485
      %s518 = smul.u32 32, %s14
      %p519 = scmp.lt.s32.totalorder %s518, 63
      %s520 = scalar_select %p519, %s518, 63
      %s521 = smul.addr %s520, 8
      %s522 = scalar_lea.vmem %s3, %s521
      // Predicated region
      $region33: #{blocks_forward.3} parent=31 // pred_check
        %p523 = pneg %p100
      $region34: #{blocks_forward.3} parent=31 // pred_check_branch
        %525 = sbr.rel (%p523) target = $region36
      $region35: #{blocks_forward.3} parent=31 // pred_region
        %s526 = smul.u32 32, %s14
      $region36: #{blocks_forward.3} parent=31 // pred_fallthru
        _
    $region32: #{blocks_forward.3} parent=5 // pred_fallthru
      _
    %p527 = scmp.le.s32.totalorder 2, %s9
    // Predicated region
    $region37: #{blocks_forward.3} parent=5 // pred_check
      %p528 = pneg %p527
    $region38: #{blocks_forward.3} parent=5 // pred_check_branch
      %530 = sbr.rel (%p528) target = $region40
    $region39: #{blocks_forward.3} parent=5 // pred_region
      %s531 = ssub.s32 %s9, 2
      // Predicated region
      $region41: #{blocks_forward.3} parent=39 // pred_check
        %p532 = pneg %p106
      $region42: #{blocks_forward.3} parent=39 // pred_check_branch
        %534 = sbr.rel (%p532) target = $region44
      $region43: #{blocks_forward.3} parent=39 // pred_region
        %s535 = smul.u32 32, %s15
        %p536 = scmp.lt.s32.totalorder %s535, 63
        %s537 = scalar_select %p536, %s535, 63
        %s538 = smul.addr %s537, 8
        %s539 = scalar_lea.vmem %s3, %s538
      $region44: #{blocks_forward.3} parent=39 // pred_fallthru
        _
    $region40: #{blocks_forward.3} parent=5 // pred_fallthru
      _
  $region6: #{blocks_forward.3} parent=0 // loop_footer
    %s13 = sadd.s32 1, %s9
  $region7: #{blocks_forward.3} parent=0 // loop_footer_branch
    %8 = sbr.rel target = $region3
  $region8: #{blocks_forward.3} parent=0 // loop_exit
    _

// kernel: blocks_forward.4
$region0: #{blocks_forward.4}
  #allocation0 [shape = 'u32[]', space=smem, size = 0x4, offset = 0x4, fixed_abs, tag = 'smem constant byte address 0x4 - core index']
  #allocation1 [shape = 'u32[144,128]{1,0:T(1,128)}', space=vmem, size = 0x12000, scoped, tag = 'internal scratch']
  %s0 = inlined_call_operand.vmem [shape: f32[8,9,9,128], index: 0, kind: input, shape index: {}]
  %s1 = inlined_call_operand.vmem [shape: f32[9,128,128], index: 1, kind: input, shape index: {}]
  %s2 = inlined_call_operand.vmem [shape: f32[1,128], index: 2, kind: input, shape index: {}]
  %s3 = inlined_call_operand.vmem [shape: f32[2,8,8,128], index: 3, kind: output, shape index: {}]
  %s4 = sld [smem:[#allocation0]]
  $region45: #{blocks_forward.4} parent=0
    _
  %s6 = ssub.s32 1, %s4
  %s7 = scalar_select 0, %s6, %s4
  loop: start=0, step=1, limit=4
  $region2: #{blocks_forward.4} parent=0 // loop_pre_header
    _
  $region3: #{blocks_forward.4} parent=0 // loop_header
    %s9 = sphi 0, %s13
    %p10 = scmp.ge.s32.totalorder %s9, 4
    %s16 = sphi 0, %s28
    %s17 = sphi 0, %s24
    %s18 = sphi 0, %s16
    %s19 = sphi 0, %s17
    %s20 = sphi 0, %s18
    %s21 = sphi 0, %s19
    %s31 = sphi 0, %s33
    %s34 = sphi 0, %s31
    %s35 = sphi 0, %s34
    %s51 = sphi 0, %s35
    %s55 = sphi 0, %s55
    %s57 = sphi 0, %s55
    %s58 = sphi 0, %s57
    %s72 = sphi 0, %s58
    %s76 = sphi 0, %s76
    %s78 = sphi 0, %s76
    %s79 = sphi 0, %s78
    %s93 = sphi 0, %s79
    %s101 = sphi 0, %s103
    %s104 = sphi 0, %s101
    %s105 = sphi 0, %s104
    %s121 = sphi 0, %s105
  $region4: #{blocks_forward.4} parent=0 // loop_header_branch
    %12 = sbr.rel (%p10) target = $region8
  $region5: #{blocks_forward.4} parent=0 // loop_body
    %s14 = ssub.s32 %s9, 1
    %s15 = ssub.s32 %s9, 2
    %s22 = sadd.s32 1, %s17
    %p23 = scmp.ge.s32.totalorder %s22, 1
    %s24 = scalar_select %p23, 0, %s22
    %s25 = sadd.s32 1, %s16
    %s26 = scalar_select %p23, %s25, %s16
    %p27 = scmp.ge.s32.totalorder %s26, 2
    %s28 = scalar_select %p27, 0, %s26
    %s29 = ssub.s32 %s16, %s28
    %p30 = scmp.eq.s32.totalorder %s29, 0
    %s32 = sadd.s32 %s31, 1
    %s33 = scalar_select %p30, %s31, %s32
    %p36 = pneg %p30
    %p37 = scmp.eq.s32.totalorder %s9, 1
    %p38 = por %p36, %p37
    %p39 = scmp.ne.s32.totalorder %s31, %s34
    %p40 = scmp.eq.s32.totalorder %s9, 0
    %p41 = por %p39, %p40
    %p42 = scmp.ne.s32.totalorder %s31, %s34
    %p43 = scmp.eq.s32.totalorder %s14, 1
    %p44 = por %p42, %p43
    %p45 = scmp.ne.s32.totalorder %s34, %s35
    %p46 = scmp.eq.s32.totalorder %s14, 0
    %p47 = por %p45, %p46
    %p48 = scmp.ne.s32.totalorder %s34, %s35
    %p49 = scmp.eq.s32.totalorder %s15, 1
    %p50 = por %p48, %p49
    %p52 = scmp.ne.s32.totalorder %s35, %s51
    %p53 = scmp.eq.s32.totalorder %s15, 0
    %p54 = por %p52, %p53
    %s56 = sadd.s32 %s55, 1
    %p59 = scmp.eq.s32.totalorder %s9, 1
    %p60 = scmp.ne.s32.totalorder %s55, %s57
    %p61 = scmp.eq.s32.totalorder %s9, 0
    %p62 = por %p60, %p61
    %p63 = scmp.ne.s32.totalorder %s55, %s57
    %p64 = scmp.eq.s32.totalorder %s14, 1
    %p65 = por %p63, %p64
    %p66 = scmp.ne.s32.totalorder %s57, %s58
    %p67 = scmp.eq.s32.totalorder %s14, 0
    %p68 = por %p66, %p67
    %p69 = scmp.ne.s32.totalorder %s57, %s58
    %p70 = scmp.eq.s32.totalorder %s15, 1
    %p71 = por %p69, %p70
    %p73 = scmp.ne.s32.totalorder %s58, %s72
    %p74 = scmp.eq.s32.totalorder %s15, 0
    %p75 = por %p73, %p74
    %s77 = sadd.s32 %s76, 1
    %p80 = scmp.eq.s32.totalorder %s9, 1
    %p81 = scmp.ne.s32.totalorder %s76, %s78
    %p82 = scmp.eq.s32.totalorder %s9, 0
    %p83 = por %p81, %p82
    %p84 = scmp.ne.s32.totalorder %s76, %s78
    %p85 = scmp.eq.s32.totalorder %s14, 1
    %p86 = por %p84, %p85
    %p87 = scmp.ne.s32.totalorder %s78, %s79
    %p88 = scmp.eq.s32.totalorder %s14, 0
    %p89 = por %p87, %p88
    %p90 = scmp.ne.s32.totalorder %s78, %s79
    %p91 = scmp.eq.s32.totalorder %s15, 1
    %p92 = por %p90, %p91
    %p94 = scmp.ne.s32.totalorder %s79, %s93
    %p95 = scmp.eq.s32.totalorder %s15, 0
    %p96 = por %p94, %p95
    %s97 = ssub.s32 %s16, %s28
    %s98 = ssub.s32 %s17, %s24
    %s99 = sor.u32 %s97, %s98
    %p100 = scmp.eq.s32.totalorder %s99, 0
    %s102 = sadd.s32 %s101, 1
    %s103 = scalar_select %p100, %s101, %s102
    %p106 = pneg %p100
    %p107 = scmp.eq.s32.totalorder %s9, 1
    %p108 = por %p106, %p107
    %p109 = scmp.ne.s32.totalorder %s101, %s104
    %p110 = scmp.eq.s32.totalorder %s9, 0
    %p111 = por %p109, %p110
    %p112 = scmp.ne.s32.totalorder %s101, %s104
    %p113 = scmp.eq.s32.totalorder %s14, 1
    %p114 = por %p112, %p113
    %p115 = scmp.ne.s32.totalorder %s104, %s105
    %p116 = scmp.eq.s32.totalorder %s14, 0
    %p117 = por %p115, %p116
    %p118 = scmp.ne.s32.totalorder %s104, %s105
    %p119 = scmp.eq.s32.totalorder %s15, 1
    %p120 = por %p118, %p119
    %p122 = scmp.ne.s32.totalorder %s105, %s121
    %p123 = scmp.eq.s32.totalorder %s15, 0
    %p124 = por %p122, %p123
    %p125 = scmp.le.s32.totalorder 1, %s9
    %p126 = scmp.lt.s32.totalorder %s9, 3
    %p127 = pnand %p125, %p126
    %p128 = pneg %p127
    // Predicated region
    $region9: #{blocks_forward.4} parent=5 // pred_check
      _
    $region10: #{blocks_forward.4} parent=5 // pred_check_branch
      %130 = sbr.rel (%p127) target = $region12
    $region11: #{blocks_forward.4} parent=5 // pred_region
      %s131 = ssub.s32 %s9, 1
      // Predicated region
      $region13: #{blocks_forward.4} parent=11 // pred_check
        %p132 = pneg %p68
      $region14: #{blocks_forward.4} parent=11 // pred_check_branch
        %134 = sbr.rel (%p132) target = $region16
      $region15: #{blocks_forward.4} parent=11 // pred_region
        _
      $region16: #{blocks_forward.4} parent=11 // pred_fallthru
        _
      // Predicated region
      $region17: #{blocks_forward.4} parent=11 // pred_check
        %p135 = pneg %p89
      $region18: #{blocks_forward.4} parent=11 // pred_check_branch
        %137 = sbr.rel (%p135) target = $region20
      $region19: #{blocks_forward.4} parent=11 // pred_region
        _
      $region20: #{blocks_forward.4} parent=11 // pred_fallthru
        _
    $region12: #{blocks_forward.4} parent=5 // pred_fallthru
      _
    %p138 = scmp.lt.s32.totalorder %s9, 2
    // Predicated region
    $region21: #{blocks_forward.4} parent=5 // pred_check
      %p139 = pneg %p138
    $region22: #{blocks_forward.4} parent=5 // pred_check_branch
      %141 = sbr.rel (%p139) target = $region24
    $region23: #{blocks_forward.4} parent=5 // pred_region
      // Predicated region
      $region25: #{blocks_forward.4} parent=23 // pred_check
        %p142 = pneg %p41
      $region26: #{blocks_forward.4} parent=23 // pred_check_branch
        %144 = sbr.rel (%p142) target = $region28
      $region27: #{blocks_forward.4} parent=23 // pred_region
        %s145 = smul.u32 4, %s16
        %p146 = scmp.lt.s32.totalorder %s145, 7
        %s147 = scalar_select %p146, %s145, 7
        %s148 = smul.addr %s147, 18
        %s149 = smul.addr %s148, 8
        %s150 = scalar_lea.vmem %s0, %s149
        %s151 = smul.u32 4, %s16
      $region28: #{blocks_forward.4} parent=23 // pred_fallthru
        _
    $region24: #{blocks_forward.4} parent=5 // pred_fallthru
      _
    %p152 = scmp.le.s32.totalorder 1, %s9
    %p153 = scmp.lt.s32.totalorder %s9, 3
    %p154 = pnand %p152, %p153
    %p155 = pneg %p154
    // Predicated region
    $region29: #{blocks_forward.4} parent=5 // pred_check
      _
    $region30: #{blocks_forward.4} parent=5 // pred_check_branch
      %157 = sbr.rel (%p154) target = $region32
    $region31: #{blocks_forward.4} parent=5 // pred_region
      %s158 = ssub.s32 %s9, 1
      %s159 = smul.u32 4, %s18
      %p160 = scmp.lt.s32.totalorder %s159, 7
      %s161 = scalar_select %p160, %s159, 7
      %s162 = smul.addr %s161, 18
      %s163 = smul.addr %s162, 8
      %s164 = scalar_lea.vmem %s0, %s163
      %p165 = pneg %p47
      %p166 = pneg %p44
      %p167 = pneg %p68
      %p168 = pneg %p65
      %p169 = pneg %p89
      %p170 = pneg %p86
      %p171 = pneg %p117
      %p172 = pneg %p114
      %s173 = smul.u32 8, %s19
      %p174 = scmp.lt.s32.totalorder %s18, 1
      %s175 = scalar_select %p174, %s18, 1
      %p176 = scmp.lt.s32.totalorder %s173, 7
      %s177 = scalar_select %p176, %s173, 7
      %s178 = smul.addr %s175, 8
      %s179 = sadd.s32 %s177, %s178
      %s180 = smul.addr %s179, 8
      %s181 = scalar_lea.vmem %s3, %s180
      %s182 = smul.u32 4, %s18
      %p183 = scmp.lt.s32.totalorder %s182, 7
      %s184 = scalar_select %p183, %s182, 7
      %s185 = smul.addr %s184, 18
      %s186 = smul.addr %s185, 8
      %s187 = scalar_lea.vmem %s0, %s186
      %s188 = smul.u32 4, %s18
      %s189 = smul.u32 8, %s19
      %p190 = scmp.lt.s32.totalorder %s18, 1
      %s191 = scalar_select %p190, %s18, 1
      %p192 = scmp.lt.s32.totalorder %s189, 7
      %s193 = scalar_select %p192, %s189, 7
      %s194 = smul.addr %s191, 8
      %s195 = sadd.s32 %s193, %s194
      %s196 = smul.addr %s195, 8
      %s197 = scalar_lea.vmem %s3, %s196
      %s198 = smul.u32 8, %s19
      %s199 = smul.u32 %s19, 8
      %s200 = smul.u32 %s199, 16
      %s201 = scalar_lea.vmem %s187, %s200
      %v202 = vld [vmem:[%s201] sm:$0xff]
      %v203 = vld [vmem:[%s201 + $0x10] sm:$0xff]
      %v204 = vld [vmem:[%s201 + $0x20] sm:$0xff]
      %v205 = vld [vmem:[%s201 + $0x30] sm:$0xff]
      %v206 = vld [vmem:[%s201 + $0x40] sm:$0xff]
      %v207 = vld [vmem:[%s201 + $0x50] sm:$0xff]
      %v208 = vld [vmem:[%s201 + $0x60] sm:$0xff]
      %v209 = vld [vmem:[%s201 + $0x70] sm:$0xff]
      %v210 = vld [vmem:[%s1] sm:$0xff]
      %v211 = vld [vmem:[%s1 + $0x8] sm:$0xff]
      %v212 = vld [vmem:[%s1 + $0x10] sm:$0xff]
      %v213 = vld [vmem:[%s1 + $0x18] sm:$0xff]
      %v214 = vld [vmem:[%s1 + $0x20] sm:$0xff]
      %v215 = vld [vmem:[%s1 + $0x28] sm:$0xff]
      %v216 = vld [vmem:[%s1 + $0x30] sm:$0xff]
      %v217 = vld [vmem:[%s1 + $0x38] sm:$0xff]
      %v218 = vld [vmem:[%s1 + $0x40] sm:$0xff]
      %v219 = vld [vmem:[%s1 + $0x48] sm:$0xff]
      %v220 = vld [vmem:[%s1 + $0x50] sm:$0xff]
      %v221 = vld [vmem:[%s1 + $0x58] sm:$0xff]
      %v222 = vld [vmem:[%s1 + $0x60] sm:$0xff]
      %v223 = vld [vmem:[%s1 + $0x68] sm:$0xff]
      %v224 = vld [vmem:[%s1 + $0x70] sm:$0xff]
      %v225 = vld [vmem:[%s1 + $0x78] sm:$0xff]
      %s226 = sadd.s32 %s200, 144
      %s227 = scalar_lea.vmem %s187, %s226
      %v228 = vld [vmem:[%s227] sm:$0xff]
      %v229 = vld [vmem:[%s227 + $0x10] sm:$0xff]
      %v230 = vld [vmem:[%s227 + $0x20] sm:$0xff]
      %v231 = vld [vmem:[%s227 + $0x30] sm:$0xff]
      %v232 = vld [vmem:[%s227 + $0x40] sm:$0xff]
      %v233 = vld [vmem:[%s227 + $0x50] sm:$0xff]
      %v234 = vld [vmem:[%s227 + $0x60] sm:$0xff]
      %v235 = vld [vmem:[%s227 + $0x70] sm:$0xff]
      %s236 = scalar_lea.vmem %s1, 128
      %v237 = vld [vmem:[%s236] sm:$0xff]
      %v238 = vld [vmem:[%s236 + $0x8] sm:$0xff]
      %v239 = vld [vmem:[%s236 + $0x10] sm:$0xff]
      %v240 = vld [vmem:[%s236 + $0x18] sm:$0xff]
      %v241 = vld [vmem:[%s236 + $0x20] sm:$0xff]
      %v242 = vld [vmem:[%s236 + $0x28] sm:$0xff]
      %v243 = vld [vmem:[%s236 + $0x30] sm:$0xff]
      %v244 = vld [vmem:[%s236 + $0x38] sm:$0xff]
      %v245 = vld [vmem:[%s236 + $0x40] sm:$0xff]
      %v246 = vld [vmem:[%s236 + $0x48] sm:$0xff]
      %v247 = vld [vmem:[%s236 + $0x50] sm:$0xff]
      %v248 = vld [vmem:[%s236 + $0x58] sm:$0xff]
      %v249 = vld [vmem:[%s236 + $0x60] sm:$0xff]
      %v250 = vld [vmem:[%s236 + $0x68] sm:$0xff]
      %v251 = vld [vmem:[%s236 + $0x70] sm:$0xff]
      %v252 = vld [vmem:[%s236 + $0x78] sm:$0xff]
      %253 = vmatprep.subr.mxu0 0.0
      %254 = vmatpush1.msra.mxu0 %v252
      %255 = vmatprep.subr.mxu0 0.0
      %256 = vmatpush1.msra.mxu0 %v251
      %257 = vmatprep.subr.mxu0 0.0
      %258 = vmatpush1.msra.mxu0 %v250
      %259 = vmatprep.subr.mxu0 0.0
      %260 = vmatpush1.msra.mxu0 %v249
      %261 = vmatprep.subr.mxu0 0.0
      %262 = vmatpush1.msra.mxu0 %v248
      %263 = vmatprep.subr.mxu0 0.0
      %264 = vmatpush1.msra.mxu0 %v247
      %265 = vmatprep.subr.mxu0 0.0
      %266 = vmatpush1.msra.mxu0 %v246
      %267 = vmatprep.subr.mxu0 0.0
      %268 = vmatpush1.msra.mxu0 %v245
      %269 = vmatprep.subr.mxu0 0.0
      %270 = vmatpush1.msra.mxu0 %v244
      %271 = vmatprep.subr.mxu0 0.0
      %272 = vmatpush1.msra.mxu0 %v243
      %273 = vmatprep.subr.mxu0 0.0
      %274 = vmatpush1.msra.mxu0 %v242
      %275 = vmatprep.subr.mxu0 0.0
      %276 = vmatpush1.msra.mxu0 %v241
      %277 = vmatprep.subr.mxu0 0.0
      %278 = vmatpush1.msra.mxu0 %v240
      %279 = vmatprep.subr.mxu0 0.0
      %280 = vmatpush1.msra.mxu0 %v239
      %281 = vmatprep.subr.mxu0 0.0
      %282 = vmatpush1.msra.mxu0 %v238
      %283 = vmatprep.subr.mxu0 0.0
      %284 = vmatpush1.msra.mxu0 %v237
      %285 = vmatprep.subr.mxu0 0.0
      %286 = vmatpush2.msra.mxu0 0.0
      %287 = vmatprep.subr.mxu0 0.0
      %288 = vmatpush2.msra.mxu0 0.0
      %289 = vmatprep.subr.mxu0 0.0
      %290 = vmatpush2.msra.mxu0 0.0
      %291 = vmatprep.subr.mxu0 0.0
      %292 = vmatpush2.msra.mxu0 0.0
      %293 = vmatprep.subr.mxu0 0.0
      %294 = vmatpush2.msra.mxu0 0.0
      %295 = vmatprep.subr.mxu0 0.0
      %296 = vmatpush2.msra.mxu0 0.0
      %297 = vmatprep.subr.mxu0 0.0
      %298 = vmatpush2.msra.mxu0 0.0
      %299 = vmatprep.subr.mxu0 0.0
      %300 = vmatpush2.msra.mxu0 0.0
      %301 = vmatprep.subr.mxu0 0.0
      %302 = vmatpush2.msra.mxu0 0.0
      %303 = vmatprep.subr.mxu0 0.0
      %304 = vmatpush2.msra.mxu0 0.0
      %305 = vmatprep.subr.mxu0 0.0
      %306 = vmatpush2.msra.mxu0 0.0
      %307 = vmatprep.subr.mxu0 0.0
      %308 = vmatpush2.msra.mxu0 0.0
      %309 = vmatprep.subr.mxu0 0.0
      %310 = vmatpush2.msra.mxu0 0.0
      %311 = vmatprep.subr.mxu0 0.0
      %312 = vmatpush2.msra.mxu0 0.0
      %313 = vmatprep.subr.mxu0 0.0
      %314 = vmatpush2.msra.mxu0 0.0
      %315 = vmatprep.subr.mxu0 0.0
      %316 = vmatpush2.msra.mxu0 0.0
      %317 = vmatprep.mubr.f32.mxu0 0.0
      %318 = vmatmul.mubr.f32.gmra.mxu0 %v228
      %v319 = vpop.f32.mrf.mxu0
      %v320 = vadd.f32 0.0, %v319
      %v321 = vpop.f32.mrf.mxu0
      %322 = vmatprep.mubr.f32.mxu0 0.0
      %323 = vmatmul.mubr.f32.gmra.mxu0 %v229
      %v324 = vpop.f32.mrf.mxu0
      %v325 = vadd.f32 0.0, %v324
      %v326 = vpop.f32.mrf.mxu0
      %327 = vmatprep.mubr.f32.mxu0 0.0
      %328 = vmatmul.mubr.f32.gmra.mxu0 %v230
      %v329 = vpop.f32.mrf.mxu0
      %v330 = vadd.f32 0.0, %v329
      %v331 = vpop.f32.mrf.mxu0
      %332 = vmatprep.mubr.f32.mxu0 0.0
      %333 = vmatmul.mubr.f32.gmra.mxu0 %v231
      %v334 = vpop.f32.mrf.mxu0
      %v335 = vadd.f32 0.0, %v334
      %v336 = vpop.f32.mrf.mxu0
      %337 = vmatprep.mubr.f32.mxu0 0.0
      %338 = vmatmul.mubr.f32.gmra.mxu0 %v232
      %v339 = vpop.f32.mrf.mxu0
      %v340 = vadd.f32 0.0, %v339
      %v341 = vpop.f32.mrf.mxu0
      %342 = vmatprep.mubr.f32.mxu0 0.0
      %343 = vmatmul.mubr.f32.gmra.mxu0 %v233
      %v344 = vpop.f32.mrf.mxu0
      %v345 = vadd.f32 0.0, %v344
      %v346 = vpop.f32.mrf.mxu0
      %347 = vmatprep.mubr.f32.mxu0 0.0
      %348 = vmatmul.mubr.f32.gmra.mxu0 %v234
      %v349 = vpop.f32.mrf.mxu0
      %v350 = vadd.f32 0.0, %v349
      %v351 = vpop.f32.mrf.mxu0
      %352 = vmatprep.mubr.f32.mxu0 0.0
      %353 = vmatmul.mubr.f32.gmra.mxu0 %v235
      %v354 = vpop.f32.mrf.mxu0
      %v355 = vadd.f32 0.0, %v354
      %v356 = vpop.f32.mrf.mxu0
      %357 = vdwg.mxu0
      %358 = vmatprep.subr.mxu0 0.0
      %359 = vmatpush1.msra.mxu0 %v225
      %360 = vmatprep.subr.mxu0 0.0
      %361 = vmatpush1.msra.mxu0 %v224
      %362 = vmatprep.subr.mxu0 0.0
      %363 = vmatpush1.msra.mxu0 %v223
      %364 = vmatprep.subr.mxu0 0.0
      %365 = vmatpush1.msra.mxu0 %v222
      %366 = vmatprep.subr.mxu0 0.0
      %367 = vmatpush1.msra.mxu0 %v221
      %368 = vmatprep.subr.mxu0 0.0
      %369 = vmatpush1.msra.mxu0 %v220
      %370 = vmatprep.subr.mxu0 0.0
      %371 = vmatpush1.msra.mxu0 %v219
      %372 = vmatprep.subr.mxu0 0.0
      %373 = vmatpush1.msra.mxu0 %v218
      %374 = vmatprep.subr.mxu0 0.0
      %375 = vmatpush1.msra.mxu0 %v217
      %376 = vmatprep.subr.mxu0 0.0
      %377 = vmatpush1.msra.mxu0 %v216
      %378 = vmatprep.subr.mxu0 0.0
      %379 = vmatpush1.msra.mxu0 %v215
      %380 = vmatprep.subr.mxu0 0.0
      %381 = vmatpush1.msra.mxu0 %v214
      %382 = vmatprep.subr.mxu0 0.0
      %383 = vmatpush1.msra.mxu0 %v213
      %384 = vmatprep.subr.mxu0 0.0
      %385 = vmatpush1.msra.mxu0 %v212
      %386 = vmatprep.subr.mxu0 0.0
      %387 = vmatpush1.msra.mxu0 %v211
      %388 = vmatprep.subr.mxu0 0.0
      %389 = vmatpush1.msra.mxu0 %v210
      %390 = vmatprep.subr.mxu0 0.0
      %391 = vmatpush2.msra.mxu0 0.0
      %392 = vmatprep.subr.mxu0 0.0
      %393 = vmatpush2.msra.mxu0 0.0
      %394 = vmatprep.subr.mxu0 0.0
      %395 = vmatpush2.msra.mxu0 0.0
      %396 = vmatprep.subr.mxu0 0.0
      %397 = vmatpush2.msra.mxu0 0.0
      %398 = vmatprep.subr.mxu0 0.0
      %399 = vmatpush2.msra.mxu0 0.0
      %400 = vmatprep.subr.mxu0 0.0
      %401 = vmatpush2.msra.mxu0 0.0
      %402 = vmatprep.subr.mxu0 0.0
      %403 = vmatpush2.msra.mxu0 0.0
      %404 = vmatprep.subr.mxu0 0.0
      %405 = vmatpush2.msra.mxu0 0.0
      %406 = vmatprep.subr.mxu0 0.0
      %407 = vmatpush2.msra.mxu0 0.0
      %408 = vmatprep.subr.mxu0 0.0
      %409 = vmatpush2.msra.mxu0 0.0
      %410 = vmatprep.subr.mxu0 0.0
      %411 = vmatpush2.msra.mxu0 0.0
      %412 = vmatprep.subr.mxu0 0.0
      %413 = vmatpush2.msra.mxu0 0.0
      %414 = vmatprep.subr.mxu0 0.0
      %415 = vmatpush2.msra.mxu0 0.0
      %416 = vmatprep.subr.mxu0 0.0
      %417 = vmatpush2.msra.mxu0 0.0
      %418 = vmatprep.subr.mxu0 0.0
      %419 = vmatpush2.msra.mxu0 0.0
      %420 = vmatprep.subr.mxu0 0.0
      %421 = vmatpush2.msra.mxu0 0.0
      %422 = vmatprep.mubr.f32.mxu0 0.0
      %423 = vmatmul.mubr.f32.gmra.mxu0 %v202
      %v424 = vpop.f32.mrf.mxu0
      %v425 = vadd.f32 %v320, %v424
      %v426 = vpop.f32.mrf.mxu0
      %427 = vmatprep.mubr.f32.mxu0 0.0
      %428 = vmatmul.mubr.f32.gmra.mxu0 %v203
      %v429 = vpop.f32.mrf.mxu0
      %v430 = vadd.f32 %v325, %v429
      %v431 = vpop.f32.mrf.mxu0
      %432 = vmatprep.mubr.f32.mxu0 0.0
      %433 = vmatmul.mubr.f32.gmra.mxu0 %v204
      %v434 = vpop.f32.mrf.mxu0
      %v435 = vadd.f32 %v330, %v434
      %v436 = vpop.f32.mrf.mxu0
      %437 = vmatprep.mubr.f32.mxu0 0.0
      %438 = vmatmul.mubr.f32.gmra.mxu0 %v205
      %v439 = vpop.f32.mrf.mxu0
      %v440 = vadd.f32 %v335, %v439
      %v441 = vpop.f32.mrf.mxu0
      %442 = vmatprep.mubr.f32.mxu0 0.0
      %443 = vmatmul.mubr.f32.gmra.mxu0 %v206
      %v444 = vpop.f32.mrf.mxu0
      %v445 = vadd.f32 %v340, %v444
      %v446 = vpop.f32.mrf.mxu0
      %447 = vmatprep.mubr.f32.mxu0 0.0
      %448 = vmatmul.mubr.f32.gmra.mxu0 %v207
      %v449 = vpop.f32.mrf.mxu0
      %v450 = vadd.f32 %v345, %v449
      %v451 = vpop.f32.mrf.mxu0
      %452 = vmatprep.mubr.f32.mxu0 0.0
      %453 = vmatmul.mubr.f32.gmra.mxu0 %v208
      %v454 = vpop.f32.mrf.mxu0
      %v455 = vadd.f32 %v350, %v454
      %v456 = vpop.f32.mrf.mxu0
      %457 = vmatprep.mubr.f32.mxu0 0.0
      %458 = vmatmul.mubr.f32.gmra.mxu0 %v209
      %v459 = vpop.f32.mrf.mxu0
      %v460 = vadd.f32 %v355, %v459
      %v461 = vpop.f32.mrf.mxu0
      %462 = vdwg.mxu0
      %v463 = vld [vmem:[%s201 + $0x1] sm:$0xff]
      %v464 = vld [vmem:[%s201 + $0x11] sm:$0xff]
      %v465 = vld [vmem:[%s201 + $0x21] sm:$0xff]
      %v466 = vld [vmem:[%s201 + $0x31] sm:$0xff]
      %v467 = vld [vmem:[%s201 + $0x41] sm:$0xff]
      %v468 = vld [vmem:[%s201 + $0x51] sm:$0xff]
      %v469 = vld [vmem:[%s201 + $0x61] sm:$0xff]
      %v470 = vld [vmem:[%s201 + $0x71] sm:$0xff]
      %s471 = scalar_lea.vmem %s1, 256
      %v472 = vld [vmem:[%s471] sm:$0xff]
      %v473 = vld [vmem:[%s471 + $0x8] sm:$0xff]
      %v474 = vld [vmem:[%s471 + $0x10] sm:$0xff]
      %v475 = vld [vmem:[%s471 + $0x18] sm:$0xff]
      %v476 = vld [vmem:[%s471 + $0x20] sm:$0xff]
      %v477 = vld [vmem:[%s471 + $0x28] sm:$0xff]
      %v478 = vld [vmem:[%s471 + $0x30] sm:$0xff]
      %v479 = vld [vmem:[%s471 + $0x38] sm:$0xff]
      %v480 = vld [vmem:[%s471 + $0x40] sm:$0xff]
      %v481 = vld [vmem:[%s471 + $0x48] sm:$0xff]
      %v482 = vld [vmem:[%s471 + $0x50] sm:$0xff]
      %v483 = vld [vmem:[%s471 + $0x58] sm:$0xff]
      %v484 = vld [vmem:[%s471 + $0x60] sm:$0xff]
      %v485 = vld [vmem:[%s471 + $0x68] sm:$0xff]
      %v486 = vld [vmem:[%s471 + $0x70] sm:$0xff]
      %v487 = vld [vmem:[%s471 + $0x78] sm:$0xff]
      %488 = vmatprep.subr.mxu0 0.0
      %489 = vmatpush1.msra.mxu0 %v487
      %490 = vmatprep.subr.mxu0 0.0
      %491 = vmatpush1.msra.mxu0 %v486
      %492 = vmatprep.subr.mxu0 0.0
      %493 = vmatpush1.msra.mxu0 %v485
      %494 = vmatprep.subr.mxu0 0.0
      %495 = vmatpush1.msra.mxu0 %v484
      %496 = vmatprep.subr.mxu0 0.0
      %497 = vmatpush1.msra.mxu0 %v483
      %498 = vmatprep.subr.mxu0 0.0
      %499 = vmatpush1.msra.mxu0 %v482
      %500 = vmatprep.subr.mxu0 0.0
      %501 = vmatpush1.msra.mxu0 %v481
      %502 = vmatprep.subr.mxu0 0.0
      %503 = vmatpush1.msra.mxu0 %v480
      %504 = vmatprep.subr.mxu0 0.0
      %505 = vmatpush1.msra.mxu0 %v479
      %506 = vmatprep.subr.mxu0 0.0
      %507 = vmatpush1.msra.mxu0 %v478
      %508 = vmatprep.subr.mxu0 0.0
      %509 = vmatpush1.msra.mxu0 %v477
      %510 = vmatprep.subr.mxu0 0.0
      %511 = vmatpush1.msra.mxu0 %v476
      %512 = vmatprep.subr.mxu0 0.0
      %513 = vmatpush1.msra.mxu0 %v475
      %514 = vmatprep.subr.mxu0 0.0
      %515 = vmatpush1.msra.mxu0 %v474
      %516 = vmatprep.subr.mxu0 0.0
      %517 = vmatpush1.msra.mxu0 %v473
      %518 = vmatprep.subr.mxu0 0.0
      %519 = vmatpush1.msra.mxu0 %v472
      %520 = vmatprep.subr.mxu0 0.0
      %521 = vmatpush2.msra.mxu0 0.0
      %522 = vmatprep.subr.mxu0 0.0
      %523 = vmatpush2.msra.mxu0 0.0
      %524 = vmatprep.subr.mxu0 0.0
      %525 = vmatpush2.msra.mxu0 0.0
      %526 = vmatprep.subr.mxu0 0.0
      %527 = vmatpush2.msra.mxu0 0.0
      %528 = vmatprep.subr.mxu0 0.0
      %529 = vmatpush2.msra.mxu0 0.0
      %530 = vmatprep.subr.mxu0 0.0
      %531 = vmatpush2.msra.mxu0 0.0
      %532 = vmatprep.subr.mxu0 0.0
      %533 = vmatpush2.msra.mxu0 0.0
      %534 = vmatprep.subr.mxu0 0.0
      %535 = vmatpush2.msra.mxu0 0.0
      %536 = vmatprep.subr.mxu0 0.0
      %537 = vmatpush2.msra.mxu0 0.0
      %538 = vmatprep.subr.mxu0 0.0
      %539 = vmatpush2.msra.mxu0 0.0
      %540 = vmatprep.subr.mxu0 0.0
      %541 = vmatpush2.msra.mxu0 0.0
      %542 = vmatprep.subr.mxu0 0.0
      %543 = vmatpush2.msra.mxu0 0.0
      %544 = vmatprep.subr.mxu0 0.0
      %545 = vmatpush2.msra.mxu0 0.0
      %546 = vmatprep.subr.mxu0 0.0
      %547 = vmatpush2.msra.mxu0 0.0
      %548 = vmatprep.subr.mxu0 0.0
      %549 = vmatpush2.msra.mxu0 0.0
      %550 = vmatprep.subr.mxu0 0.0
      %551 = vmatpush2.msra.mxu0 0.0
      %552 = vmatprep.mubr.f32.mxu0 0.0
      %553 = vmatmul.mubr.f32.gmra.mxu0 %v463
      %v554 = vpop.f32.mrf.mxu0
      %v555 = vadd.f32 0.0, %v554
      %v556 = vpop.f32.mrf.mxu0
      %557 = vmatprep.mubr.f32.mxu0 0.0
      %558 = vmatmul.mubr.f32.gmra.mxu0 %v464
      %v559 = vpop.f32.mrf.mxu0
      %v560 = vadd.f32 0.0, %v559
      %v561 = vpop.f32.mrf.mxu0
      %562 = vmatprep.mubr.f32.mxu0 0.0
      %563 = vmatmul.mubr.f32.gmra.mxu0 %v465
      %v564 = vpop.f32.mrf.mxu0
      %v565 = vadd.f32 0.0, %v564
      %v566 = vpop.f32.mrf.mxu0
      %567 = vmatprep.mubr.f32.mxu0 0.0
      %568 = vmatmul.mubr.f32.gmra.mxu0 %v466
      %v569 = vpop.f32.mrf.mxu0
      %v570 = vadd.f32 0.0, %v569
      %v571 = vpop.f32.mrf.mxu0
      %572 = vmatprep.mubr.f32.mxu0 0.0
      %573 = vmatmul.mubr.f32.gmra.mxu0 %v467
      %v574 = vpop.f32.mrf.mxu0
      %v575 = vadd.f32 0.0, %v574
      %v576 = vpop.f32.mrf.mxu0
      %577 = vmatprep.mubr.f32.mxu0 0.0
      %578 = vmatmul.mubr.f32.gmra.mxu0 %v468
      %v579 = vpop.f32.mrf.mxu0
      %v580 = vadd.f32 0.0, %v579
      %v581 = vpop.f32.mrf.mxu0
      %582 = vmatprep.mubr.f32.mxu0 0.0
      %583 = vmatmul.mubr.f32.gmra.mxu0 %v469
      %v584 = vpop.f32.mrf.mxu0
      %v585 = vadd.f32 0.0, %v584
      %v586 = vpop.f32.mrf.mxu0
      %587 = vmatprep.mubr.f32.mxu0 0.0
      %588 = vmatmul.mubr.f32.gmra.mxu0 %v470
      %v589 = vpop.f32.mrf.mxu0
      %v590 = vadd.f32 0.0, %v589
      %v591 = vpop.f32.mrf.mxu0
      %592 = vdwg.mxu0
      %v593 = vadd.f32 %v425, %v555
      %v594 = vadd.f32 %v430, %v560
      %v595 = vadd.f32 %v435, %v565
      %v596 = vadd.f32 %v440, %v570
      %v597 = vadd.f32 %v445, %v575
      %v598 = vadd.f32 %v450, %v580
      %v599 = vadd.f32 %v455, %v585
      %v600 = vadd.f32 %v460, %v590
      %s601 = sadd.s32 %s200, 288
      %s602 = scalar_lea.vmem %s187, %s601
      %v603 = vld [vmem:[%s602] sm:$0xff]
      %v604 = vld [vmem:[%s602 + $0x10] sm:$0xff]
      %v605 = vld [vmem:[%s602 + $0x20] sm:$0xff]
      %v606 = vld [vmem:[%s602 + $0x30] sm:$0xff]
      %v607 = vld [vmem:[%s602 + $0x40] sm:$0xff]
      %v608 = vld [vmem:[%s602 + $0x50] sm:$0xff]
      %v609 = vld [vmem:[%s602 + $0x60] sm:$0xff]
      %v610 = vld [vmem:[%s602 + $0x70] sm:$0xff]
      %s611 = scalar_lea.vmem %s1, 384
      %v612 = vld [vmem:[%s611] sm:$0xff]
      %v613 = vld [vmem:[%s611 + $0x8] sm:$0xff]
      %v614 = vld [vmem:[%s611 + $0x10] sm:$0xff]
      %v615 = vld [vmem:[%s611 + $0x18] sm:$0xff]
      %v616 = vld [vmem:[%s611 + $0x20] sm:$0xff]
      %v617 = vld [vmem:[%s611 + $0x28] sm:$0xff]
      %v618 = vld [vmem:[%s611 + $0x30] sm:$0xff]
      %v619 = vld [vmem:[%s611 + $0x38] sm:$0xff]
      %v620 = vld [vmem:[%s611 + $0x40] sm:$0xff]
      %v621 = vld [vmem:[%s611 + $0x48] sm:$0xff]
      %v622 = vld [vmem:[%s611 + $0x50] sm:$0xff]
      %v623 = vld [vmem:[%s611 + $0x58] sm:$0xff]
      %v624 = vld [vmem:[%s611 + $0x60] sm:$0xff]
      %v625 = vld [vmem:[%s611 + $0x68] sm:$0xff]
      %v626 = vld [vmem:[%s611 + $0x70] sm:$0xff]
      %v627 = vld [vmem:[%s611 + $0x78] sm:$0xff]
      %628 = vmatprep.subr.mxu0 0.0
      %629 = vmatpush1.msra.mxu0 %v627
      %630 = vmatprep.subr.mxu0 0.0
      %631 = vmatpush1.msra.mxu0 %v626
      %632 = vmatprep.subr.mxu0 0.0
      %633 = vmatpush1.msra.mxu0 %v625
      %634 = vmatprep.subr.mxu0 0.0
      %635 = vmatpush1.msra.mxu0 %v624
      %636 = vmatprep.subr.mxu0 0.0
      %637 = vmatpush1.msra.mxu0 %v623
      %638 = vmatprep.subr.mxu0 0.0
      %639 = vmatpush1.msra.mxu0 %v622
      %640 = vmatprep.subr.mxu0 0.0
      %641 = vmatpush1.msra.mxu0 %v621
      %642 = vmatprep.subr.mxu0 0.0
      %643 = vmatpush1.msra.mxu0 %v620
      %644 = vmatprep.subr.mxu0 0.0
      %645 = vmatpush1.msra.mxu0 %v619
      %646 = vmatprep.subr.mxu0 0.0
      %647 = vmatpush1.msra.mxu0 %v618
      %648 = vmatprep.subr.mxu0 0.0
      %649 = vmatpush1.msra.mxu0 %v617
      %650 = vmatprep.subr.mxu0 0.0
      %651 = vmatpush1.msra.mxu0 %v616
      %652 = vmatprep.subr.mxu0 0.0
      %653 = vmatpush1.msra.mxu0 %v615
      %654 = vmatprep.subr.mxu0 0.0
      %655 = vmatpush1.msra.mxu0 %v614
      %656 = vmatprep.subr.mxu0 0.0
      %657 = vmatpush1.msra.mxu0 %v613
      %658 = vmatprep.subr.mxu0 0.0
      %659 = vmatpush1.msra.mxu0 %v612
      %660 = vmatprep.subr.mxu0 0.0
      %661 = vmatpush2.msra.mxu0 0.0
      %662 = vmatprep.subr.mxu0 0.0
      %663 = vmatpush2.msra.mxu0 0.0
      %664 = vmatprep.subr.mxu0 0.0
      %665 = vmatpush2.msra.mxu0 0.0
      %666 = vmatprep.subr.mxu0 0.0
      %667 = vmatpush2.msra.mxu0 0.0
      %668 = vmatprep.subr.mxu0 0.0
      %669 = vmatpush2.msra.mxu0 0.0
      %670 = vmatprep.subr.mxu0 0.0
      %671 = vmatpush2.msra.mxu0 0.0
      %672 = vmatprep.subr.mxu0 0.0
      %673 = vmatpush2.msra.mxu0 0.0
      %674 = vmatprep.subr.mxu0 0.0
      %675 = vmatpush2.msra.mxu0 0.0
      %676 = vmatprep.subr.mxu0 0.0
      %677 = vmatpush2.msra.mxu0 0.0
      %678 = vmatprep.subr.mxu0 0.0
      %679 = vmatpush2.msra.mxu0 0.0
      %680 = vmatprep.subr.mxu0 0.0
      %681 = vmatpush2.msra.mxu0 0.0
      %682 = vmatprep.subr.mxu0 0.0
      %683 = vmatpush2.msra.mxu0 0.0
      %684 = vmatprep.subr.mxu0 0.0
      %685 = vmatpush2.msra.mxu0 0.0
      %686 = vmatprep.subr.mxu0 0.0
      %687 = vmatpush2.msra.mxu0 0.0
      %688 = vmatprep.subr.mxu0 0.0
      %689 = vmatpush2.msra.mxu0 0.0
      %690 = vmatprep.subr.mxu0 0.0
      %691 = vmatpush2.msra.mxu0 0.0
      %692 = vmatprep.mubr.f32.mxu0 0.0
      %693 = vmatmul.mubr.f32.gmra.mxu0 %v603
      %v694 = vpop.f32.mrf.mxu0
      %v695 = vadd.f32 0.0, %v694
      %v696 = vpop.f32.mrf.mxu0
      %697 = vmatprep.mubr.f32.mxu0 0.0
      %698 = vmatmul.mubr.f32.gmra.mxu0 %v604
      %v699 = vpop.f32.mrf.mxu0
      %v700 = vadd.f32 0.0, %v699
      %v701 = vpop.f32.mrf.mxu0
      %702 = vmatprep.mubr.f32.mxu0 0.0
      %703 = vmatmul.mubr.f32.gmra.mxu0 %v605
      %v704 = vpop.f32.mrf.mxu0
      %v705 = vadd.f32 0.0, %v704
      %v706 = vpop.f32.mrf.mxu0
      %707 = vmatprep.mubr.f32.mxu0 0.0
      %708 = vmatmul.mubr.f32.gmra.mxu0 %v606
      %v709 = vpop.f32.mrf.mxu0
      %v710 = vadd.f32 0.0, %v709
      %v711 = vpop.f32.mrf.mxu0
      %712 = vmatprep.mubr.f32.mxu0 0.0
      %713 = vmatmul.mubr.f32.gmra.mxu0 %v607
      %v714 = vpop.f32.mrf.mxu0
      %v715 = vadd.f32 0.0, %v714
      %v716 = vpop.f32.mrf.mxu0
      %717 = vmatprep.mubr.f32.mxu0 0.0
      %718 = vmatmul.mubr.f32.gmra.mxu0 %v608
      %v719 = vpop.f32.mrf.mxu0
      %v720 = vadd.f32 0.0, %v719
      %v721 = vpop.f32.mrf.mxu0
      %722 = vmatprep.mubr.f32.mxu0 0.0
      %723 = vmatmul.mubr.f32.gmra.mxu0 %v609
      %v724 = vpop.f32.mrf.mxu0
      %v725 = vadd.f32 0.0, %v724
      %v726 = vpop.f32.mrf.mxu0
      %727 = vmatprep.mubr.f32.mxu0 0.0
      %728 = vmatmul.mubr.f32.gmra.mxu0 %v610
      %v729 = vpop.f32.mrf.mxu0
      %v730 = vadd.f32 0.0, %v729
      %v731 = vpop.f32.mrf.mxu0
      %732 = vdwg.mxu0
      %v733 = vadd.f32 %v593, %v695
      %v734 = vadd.f32 %v594, %v700
      %v735 = vadd.f32 %v595, %v705
      %v736 = vadd.f32 %v596, %v710
      %v737 = vadd.f32 %v597, %v715
      %v738 = vadd.f32 %v598, %v720
      %v739 = vadd.f32 %v599, %v725
      %v740 = vadd.f32 %v600, %v730
      %s741 = sadd.s32 %s200, 432
      %s742 = scalar_lea.vmem %s187, %s741
      %v743 = vld [vmem:[%s742] sm:$0xff]
      %v744 = vld [vmem:[%s742 + $0x10] sm:$0xff]
      %v745 = vld [vmem:[%s742 + $0x20] sm:$0xff]
      %v746 = vld [vmem:[%s742 + $0x30] sm:$0xff]
      %v747 = vld [vmem:[%s742 + $0x40] sm:$0xff]
      %v748 = vld [vmem:[%s742 + $0x50] sm:$0xff]
      %v749 = vld [vmem:[%s742 + $0x60] sm:$0xff]
      %v750 = vld [vmem:[%s742 + $0x70] sm:$0xff]
      %s751 = scalar_lea.vmem %s1, 512
      %v752 = vld [vmem:[%s751] sm:$0xff]
      %v753 = vld [vmem:[%s751 + $0x8] sm:$0xff]
      %v754 = vld [vmem:[%s751 + $0x10] sm:$0xff]
      %v755 = vld [vmem:[%s751 + $0x18] sm:$0xff]
      %v756 = vld [vmem:[%s751 + $0x20] sm:$0xff]
      %v757 = vld [vmem:[%s751 + $0x28] sm:$0xff]
      %v758 = vld [vmem:[%s751 + $0x30] sm:$0xff]
      %v759 = vld [vmem:[%s751 + $0x38] sm:$0xff]
      %v760 = vld [vmem:[%s751 + $0x40] sm:$0xff]
      %v761 = vld [vmem:[%s751 + $0x48] sm:$0xff]
      %v762 = vld [vmem:[%s751 + $0x50] sm:$0xff]
      %v763 = vld [vmem:[%s751 + $0x58] sm:$0xff]
      %v764 = vld [vmem:[%s751 + $0x60] sm:$0xff]
      %v765 = vld [vmem:[%s751 + $0x68] sm:$0xff]
      %v766 = vld [vmem:[%s751 + $0x70] sm:$0xff]
      %v767 = vld [vmem:[%s751 + $0x78] sm:$0xff]
      %768 = vmatprep.subr.mxu0 0.0
      %769 = vmatpush1.msra.mxu0 %v767
      %770 = vmatprep.subr.mxu0 0.0
      %771 = vmatpush1.msra.mxu0 %v766
      %772 = vmatprep.subr.mxu0 0.0
      %773 = vmatpush1.msra.mxu0 %v765
      %774 = vmatprep.subr.mxu0 0.0
      %775 = vmatpush1.msra.mxu0 %v764
      %776 = vmatprep.subr.mxu0 0.0
      %777 = vmatpush1.msra.mxu0 %v763
      %778 = vmatprep.subr.mxu0 0.0
      %779 = vmatpush1.msra.mxu0 %v762
      %780 = vmatprep.subr.mxu0 0.0
      %781 = vmatpush1.msra.mxu0 %v761
      %782 = vmatprep.subr.mxu0 0.0
      %783 = vmatpush1.msra.mxu0 %v760
      %784 = vmatprep.subr.mxu0 0.0
      %785 = vmatpush1.msra.mxu0 %v759
      %786 = vmatprep.subr.mxu0 0.0
      %787 = vmatpush1.msra.mxu0 %v758
      %788 = vmatprep.subr.mxu0 0.0
      %789 = vmatpush1.msra.mxu0 %v757
      %790 = vmatprep.subr.mxu0 0.0
      %791 = vmatpush1.msra.mxu0 %v756
      %792 = vmatprep.subr.mxu0 0.0
      %793 = vmatpush1.msra.mxu0 %v755
      %794 = vmatprep.subr.mxu0 0.0
      %795 = vmatpush1.msra.mxu0 %v754
      %796 = vmatprep.subr.mxu0 0.0
      %797 = vmatpush1.msra.mxu0 %v753
      %798 = vmatprep.subr.mxu0 0.0
      %799 = vmatpush1.msra.mxu0 %v752
      %800 = vmatprep.subr.mxu0 0.0
      %801 = vmatpush2.msra.mxu0 0.0
      %802 = vmatprep.subr.mxu0 0.0
      %803 = vmatpush2.msra.mxu0 0.0
      %804 = vmatprep.subr.mxu0 0.0
      %805 = vmatpush2.msra.mxu0 0.0
      %806 = vmatprep.subr.mxu0 0.0
      %807 = vmatpush2.msra.mxu0 0.0
      %808 = vmatprep.subr.mxu0 0.0
      %809 = vmatpush2.msra.mxu0 0.0
      %810 = vmatprep.subr.mxu0 0.0
      %811 = vmatpush2.msra.mxu0 0.0
      %812 = vmatprep.subr.mxu0 0.0
      %813 = vmatpush2.msra.mxu0 0.0
      %814 = vmatprep.subr.mxu0 0.0
      %815 = vmatpush2.msra.mxu0 0.0
      %816 = vmatprep.subr.mxu0 0.0
      %817 = vmatpush2.msra.mxu0 0.0
      %818 = vmatprep.subr.mxu0 0.0
      %819 = vmatpush2.msra.mxu0 0.0
      %820 = vmatprep.subr.mxu0 0.0
      %821 = vmatpush2.msra.mxu0 0.0
      %822 = vmatprep.subr.mxu0 0.0
      %823 = vmatpush2.msra.mxu0 0.0
      %824 = vmatprep.subr.mxu0 0.0
      %825 = vmatpush2.msra.mxu0 0.0
      %826 = vmatprep.subr.mxu0 0.0
      %827 = vmatpush2.msra.mxu0 0.0
      %828 = vmatprep.subr.mxu0 0.0
      %829 = vmatpush2.msra.mxu0 0.0
      %830 = vmatprep.subr.mxu0 0.0
      %831 = vmatpush2.msra.mxu0 0.0
      %832 = vmatprep.mubr.f32.mxu0 0.0
      %833 = vmatmul.mubr.f32.gmra.mxu0 %v743
      %v834 = vpop.f32.mrf.mxu0
      %v835 = vadd.f32 0.0, %v834
      %v836 = vpop.f32.mrf.mxu0
      %837 = vmatprep.mubr.f32.mxu0 0.0
      %838 = vmatmul.mubr.f32.gmra.mxu0 %v744
      %v839 = vpop.f32.mrf.mxu0
      %v840 = vadd.f32 0.0, %v839
      %v841 = vpop.f32.mrf.mxu0
      %842 = vmatprep.mubr.f32.mxu0 0.0
      %843 = vmatmul.mubr.f32.gmra.mxu0 %v745
      %v844 = vpop.f32.mrf.mxu0
      %v845 = vadd.f32 0.0, %v844
      %v846 = vpop.f32.mrf.mxu0
      %847 = vmatprep.mubr.f32.mxu0 0.0
      %848 = vmatmul.mubr.f32.gmra.mxu0 %v746
      %v849 = vpop.f32.mrf.mxu0
      %v850 = vadd.f32 0.0, %v849
      %v851 = vpop.f32.mrf.mxu0
      %852 = vmatprep.mubr.f32.mxu0 0.0
      %853 = vmatmul.mubr.f32.gmra.mxu0 %v747
      %v854 = vpop.f32.mrf.mxu0
      %v855 = vadd.f32 0.0, %v854
      %v856 = vpop.f32.mrf.mxu0
      %857 = vmatprep.mubr.f32.mxu0 0.0
      %858 = vmatmul.mubr.f32.gmra.mxu0 %v748
      %v859 = vpop.f32.mrf.mxu0
      %v860 = vadd.f32 0.0, %v859
      %v861 = vpop.f32.mrf.mxu0
      %862 = vmatprep.mubr.f32.mxu0 0.0
      %863 = vmatmul.mubr.f32.gmra.mxu0 %v749
      %v864 = vpop.f32.mrf.mxu0
      %v865 = vadd.f32 0.0, %v864
      %v866 = vpop.f32.mrf.mxu0
      %867 = vmatprep.mubr.f32.mxu0 0.0
      %868 = vmatmul.mubr.f32.gmra.mxu0 %v750
      %v869 = vpop.f32.mrf.mxu0
      %v870 = vadd.f32 0.0, %v869
      %v871 = vpop.f32.mrf.mxu0
      %872 = vdwg.mxu0
      %v873 = vadd.f32 %v733, %v835
      %v874 = vadd.f32 %v734, %v840
      %v875 = vadd.f32 %v735, %v845
      %v876 = vadd.f32 %v736, %v850
      %v877 = vadd.f32 %v737, %v855
      %v878 = vadd.f32 %v738, %v860
      %v879 = vadd.f32 %v739, %v865
      %v880 = vadd.f32 %v740, %v870
      %v881 = vld [vmem:[%s602 + $0x1] sm:$0xff]
      %v882 = vld [vmem:[%s602 + $0x11] sm:$0xff]
      %v883 = vld [vmem:[%s602 + $0x21] sm:$0xff]
      %v884 = vld [vmem:[%s602 + $0x31] sm:$0xff]
      %v885 = vld [vmem:[%s602 + $0x41] sm:$0xff]
      %v886 = vld [vmem:[%s602 + $0x51] sm:$0xff]
      %v887 = vld [vmem:[%s602 + $0x61] sm:$0xff]
      %v888 = vld [vmem:[%s602 + $0x71] sm:$0xff]
      %s889 = scalar_lea.vmem %s1, 640
      %v890 = vld [vmem:[%s889] sm:$0xff]
      %v891 = vld [vmem:[%s889 + $0x8] sm:$0xff]
      %v892 = vld [vmem:[%s889 + $0x10] sm:$0xff]
      %v893 = vld [vmem:[%s889 + $0x18] sm:$0xff]
      %v894 = vld [vmem:[%s889 + $0x20] sm:$0xff]
      %v895 = vld [vmem:[%s889 + $0x28] sm:$0xff]
      %v896 = vld [vmem:[%s889 + $0x30] sm:$0xff]
      %v897 = vld [vmem:[%s889 + $0x38] sm:$0xff]
      %v898 = vld [vmem:[%s889 + $0x40] sm:$0xff]
      %v899 = vld [vmem:[%s889 + $0x48] sm:$0xff]
      %v900 = vld [vmem:[%s889 + $0x50] sm:$0xff]
      %v901 = vld [vmem:[%s889 + $0x58] sm:$0xff]
      %v902 = vld [vmem:[%s889 + $0x60] sm:$0xff]
      %v903 = vld [vmem:[%s889 + $0x68] sm:$0xff]
      %v904 = vld [vmem:[%s889 + $0x70] sm:$0xff]
      %v905 = vld [vmem:[%s889 + $0x78] sm:$0xff]
      %906 = vmatprep.subr.mxu0 0.0
      %907 = vmatpush1.msra.mxu0 %v905
      %908 = vmatprep.subr.mxu0 0.0
      %909 = vmatpush1.msra.mxu0 %v904
      %910 = vmatprep.subr.mxu0 0.0
      %911 = vmatpush1.msra.mxu0 %v903
      %912 = vmatprep.subr.mxu0 0.0
      %913 = vmatpush1.msra.mxu0 %v902
      %914 = vmatprep.subr.mxu0 0.0
      %915 = vmatpush1.msra.mxu0 %v901
      %916 = vmatprep.subr.mxu0 0.0
      %917 = vmatpush1.msra.mxu0 %v900
      %918 = vmatprep.subr.mxu0 0.0
      %919 = vmatpush1.msra.mxu0 %v899
      %920 = vmatprep.subr.mxu0 0.0
      %921 = vmatpush1.msra.mxu0 %v898
      %922 = vmatprep.subr.mxu0 0.0
      %923 = vmatpush1.msra.mxu0 %v897
      %924 = vmatprep.subr.mxu0 0.0
      %925 = vmatpush1.msra.mxu0 %v896
      %926 = vmatprep.subr.mxu0 0.0
      %927 = vmatpush1.msra.mxu0 %v895
      %928 = vmatprep.subr.mxu0 0.0
      %929 = vmatpush1.msra.mxu0 %v894
      %930 = vmatprep.subr.mxu0 0.0
      %931 = vmatpush1.msra.mxu0 %v893
      %932 = vmatprep.subr.mxu0 0.0
      %933 = vmatpush1.msra.mxu0 %v892
      %934 = vmatprep.subr.mxu0 0.0
      %935 = vmatpush1.msra.mxu0 %v891
      %936 = vmatprep.subr.mxu0 0.0
      %937 = vmatpush1.msra.mxu0 %v890
      %938 = vmatprep.subr.mxu0 0.0
      %939 = vmatpush2.msra.mxu0 0.0
      %940 = vmatprep.subr.mxu0 0.0
      %941 = vmatpush2.msra.mxu0 0.0
      %942 = vmatprep.subr.mxu0 0.0
      %943 = vmatpush2.msra.mxu0 0.0
      %944 = vmatprep.subr.mxu0 0.0
      %945 = vmatpush2.msra.mxu0 0.0
      %946 = vmatprep.subr.mxu0 0.0
      %947 = vmatpush2.msra.mxu0 0.0
      %948 = vmatprep.subr.mxu0 0.0
      %949 = vmatpush2.msra.mxu0 0.0
      %950 = vmatprep.subr.mxu0 0.0
      %951 = vmatpush2.msra.mxu0 0.0
      %952 = vmatprep.subr.mxu0 0.0
      %953 = vmatpush2.msra.mxu0 0.0
      %954 = vmatprep.subr.mxu0 0.0
      %955 = vmatpush2.msra.mxu0 0.0
      %956 = vmatprep.subr.mxu0 0.0
      %957 = vmatpush2.msra.mxu0 0.0
      %958 = vmatprep.subr.mxu0 0.0
      %959 = vmatpush2.msra.mxu0 0.0
      %960 = vmatprep.subr.mxu0 0.0
      %961 = vmatpush2.msra.mxu0 0.0
      %962 = vmatprep.subr.mxu0 0.0
      %963 = vmatpush2.msra.mxu0 0.0
      %964 = vmatprep.subr.mxu0 0.0
      %965 = vmatpush2.msra.mxu0 0.0
      %966 = vmatprep.subr.mxu0 0.0
      %967 = vmatpush2.msra.mxu0 0.0
      %968 = vmatprep.subr.mxu0 0.0
      %969 = vmatpush2.msra.mxu0 0.0
      %970 = vmatprep.mubr.f32.mxu0 0.0
      %971 = vmatmul.mubr.f32.gmra.mxu0 %v881
      %v972 = vpop.f32.mrf.mxu0
      %v973 = vadd.f32 0.0, %v972
      %v974 = vpop.f32.mrf.mxu0
      %975 = vmatprep.mubr.f32.mxu0 0.0
      %976 = vmatmul.mubr.f32.gmra.mxu0 %v882
      %v977 = vpop.f32.mrf.mxu0
      %v978 = vadd.f32 0.0, %v977
      %v979 = vpop.f32.mrf.mxu0
      %980 = vmatprep.mubr.f32.mxu0 0.0
      %981 = vmatmul.mubr.f32.gmra.mxu0 %v883
      %v982 = vpop.f32.mrf.mxu0
      %v983 = vadd.f32 0.0, %v982
      %v984 = vpop.f32.mrf.mxu0
      %985 = vmatprep.mubr.f32.mxu0 0.0
      %986 = vmatmul.mubr.f32.gmra.mxu0 %v884
      %v987 = vpop.f32.mrf.mxu0
      %v988 = vadd.f32 0.0, %v987
      %v989 = vpop.f32.mrf.mxu0
      %990 = vmatprep.mubr.f32.mxu0 0.0
      %991 = vmatmul.mubr.f32.gmra.mxu0 %v885
      %v992 = vpop.f32.mrf.mxu0
      %v993 = vadd.f32 0.0, %v992
      %v994 = vpop.f32.mrf.mxu0
      %995 = vmatprep.mubr.f32.mxu0 0.0
      %996 = vmatmul.mubr.f32.gmra.mxu0 %v886
      %v997 = vpop.f32.mrf.mxu0
      %v998 = vadd.f32 0.0, %v997
      %v999 = vpop.f32.mrf.mxu0
      %1000 = vmatprep.mubr.f32.mxu0 0.0
      %1001 = vmatmul.mubr.f32.gmra.mxu0 %v887
      %v1002 = vpop.f32.mrf.mxu0
      %v1003 = vadd.f32 0.0, %v1002
      %v1004 = vpop.f32.mrf.mxu0
      %1005 = vmatprep.mubr.f32.mxu0 0.0
      %1006 = vmatmul.mubr.f32.gmra.mxu0 %v888
      %v1007 = vpop.f32.mrf.mxu0
      %v1008 = vadd.f32 0.0, %v1007
      %v1009 = vpop.f32.mrf.mxu0
      %1010 = vdwg.mxu0
      %v1011 = vadd.f32 %v873, %v973
      %v1012 = vadd.f32 %v874, %v978
      %v1013 = vadd.f32 %v875, %v983
      %v1014 = vadd.f32 %v876, %v988
      %v1015 = vadd.f32 %v877, %v993
      %v1016 = vadd.f32 %v878, %v998
      %v1017 = vadd.f32 %v879, %v1003
      %v1018 = vadd.f32 %v880, %v1008
      %s1019 = sadd.s32 %s199, 1
      %s1020 = smul.u32 %s1019, 16
      %s1021 = scalar_lea.vmem %s187, %s1020
      %v1022 = vld [vmem:[%s1021] sm:$0xff]
      %v1023 = vld [vmem:[%s1021 + $0x10] sm:$0xff]
      %v1024 = vld [vmem:[%s1021 + $0x20] sm:$0xff]
      %v1025 = vld [vmem:[%s1021 + $0x30] sm:$0xff]
      %v1026 = vld [vmem:[%s1021 + $0x40] sm:$0xff]
      %v1027 = vld [vmem:[%s1021 + $0x50] sm:$0xff]
      %v1028 = vld [vmem:[%s1021 + $0x60] sm:$0xff]
      %v1029 = vld [vmem:[%s1021 + $0x70] sm:$0xff]
      %s1030 = scalar_lea.vmem %s1, 768
      %v1031 = vld [vmem:[%s1030] sm:$0xff]
      %v1032 = vld [vmem:[%s1030 + $0x8] sm:$0xff]
      %v1033 = vld [vmem:[%s1030 + $0x10] sm:$0xff]
      %v1034 = vld [vmem:[%s1030 + $0x18] sm:$0xff]
      %v1035 = vld [vmem:[%s1030 + $0x20] sm:$0xff]
      %v1036 = vld [vmem:[%s1030 + $0x28] sm:$0xff]
      %v1037 = vld [vmem:[%s1030 + $0x30] sm:$0xff]
      %v1038 = vld [vmem:[%s1030 + $0x38] sm:$0xff]
      %v1039 = vld [vmem:[%s1030 + $0x40] sm:$0xff]
      %v1040 = vld [vmem:[%s1030 + $0x48] sm:$0xff]
      %v1041 = vld [vmem:[%s1030 + $0x50] sm:$0xff]
      %v1042 = vld [vmem:[%s1030 + $0x58] sm:$0xff]
      %v1043 = vld [vmem:[%s1030 + $0x60] sm:$0xff]
      %v1044 = vld [vmem:[%s1030 + $0x68] sm:$0xff]
      %v1045 = vld [vmem:[%s1030 + $0x70] sm:$0xff]
      %v1046 = vld [vmem:[%s1030 + $0x78] sm:$0xff]
      %1047 = vmatprep.subr.mxu0 0.0
      %1048 = vmatpush1.msra.mxu0 %v1046
      %1049 = vmatprep.subr.mxu0 0.0
      %1050 = vmatpush1.msra.mxu0 %v1045
      %1051 = vmatprep.subr.mxu0 0.0
      %1052 = vmatpush1.msra.mxu0 %v1044
      %1053 = vmatprep.subr.mxu0 0.0
      %1054 = vmatpush1.msra.mxu0 %v1043
      %1055 = vmatprep.subr.mxu0 0.0
      %1056 = vmatpush1.msra.mxu0 %v1042
      %1057 = vmatprep.subr.mxu0 0.0
      %1058 = vmatpush1.msra.mxu0 %v1041
      %1059 = vmatprep.subr.mxu0 0.0
      %1060 = vmatpush1.msra.mxu0 %v1040
      %1061 = vmatprep.subr.mxu0 0.0
      %1062 = vmatpush1.msra.mxu0 %v1039
      %1063 = vmatprep.subr.mxu0 0.0
      %1064 = vmatpush1.msra.mxu0 %v1038
      %1065 = vmatprep.subr.mxu0 0.0
      %1066 = vmatpush1.msra.mxu0 %v1037
      %1067 = vmatprep.subr.mxu0 0.0
      %1068 = vmatpush1.msra.mxu0 %v1036
      %1069 = vmatprep.subr.mxu0 0.0
      %1070 = vmatpush1.msra.mxu0 %v1035
      %1071 = vmatprep.subr.mxu0 0.0
      %1072 = vmatpush1.msra.mxu0 %v1034
      %1073 = vmatprep.subr.mxu0 0.0
      %1074 = vmatpush1.msra.mxu0 %v1033
      %1075 = vmatprep.subr.mxu0 0.0
      %1076 = vmatpush1.msra.mxu0 %v1032
      %1077 = vmatprep.subr.mxu0 0.0
      %1078 = vmatpush1.msra.mxu0 %v1031
      %1079 = vmatprep.subr.mxu0 0.0
      %1080 = vmatpush2.msra.mxu0 0.0
      %1081 = vmatprep.subr.mxu0 0.0
      %1082 = vmatpush2.msra.mxu0 0.0
      %1083 = vmatprep.subr.mxu0 0.0
      %1084 = vmatpush2.msra.mxu0 0.0
      %1085 = vmatprep.subr.mxu0 0.0
      %1086 = vmatpush2.msra.mxu0 0.0
      %1087 = vmatprep.subr.mxu0 0.0
      %1088 = vmatpush2.msra.mxu0 0.0
      %1089 = vmatprep.subr.mxu0 0.0
      %1090 = vmatpush2.msra.mxu0 0.0
      %1091 = vmatprep.subr.mxu0 0.0
      %1092 = vmatpush2.msra.mxu0 0.0
      %1093 = vmatprep.subr.mxu0 0.0
      %1094 = vmatpush2.msra.mxu0 0.0
      %1095 = vmatprep.subr.mxu0 0.0
      %1096 = vmatpush2.msra.mxu0 0.0
      %1097 = vmatprep.subr.mxu0 0.0
      %1098 = vmatpush2.msra.mxu0 0.0
      %1099 = vmatprep.subr.mxu0 0.0
      %1100 = vmatpush2.msra.mxu0 0.0
      %1101 = vmatprep.subr.mxu0 0.0
      %1102 = vmatpush2.msra.mxu0 0.0
      %1103 = vmatprep.subr.mxu0 0.0
      %1104 = vmatpush2.msra.mxu0 0.0
      %1105 = vmatprep.subr.mxu0 0.0
      %1106 = vmatpush2.msra.mxu0 0.0
      %1107 = vmatprep.subr.mxu0 0.0
      %1108 = vmatpush2.msra.mxu0 0.0
      %1109 = vmatprep.subr.mxu0 0.0
      %1110 = vmatpush2.msra.mxu0 0.0
      %1111 = vmatprep.mubr.f32.mxu0 0.0
      %1112 = vmatmul.mubr.f32.gmra.mxu0 %v1022
      %v1113 = vpop.f32.mrf.mxu0
      %v1114 = vadd.f32 0.0, %v1113
      %v1115 = vpop.f32.mrf.mxu0
      %1116 = vmatprep.mubr.f32.mxu0 0.0
      %1117 = vmatmul.mubr.f32.gmra.mxu0 %v1023
      %v1118 = vpop.f32.mrf.mxu0
      %v1119 = vadd.f32 0.0, %v1118
      %v1120 = vpop.f32.mrf.mxu0
      %1121 = vmatprep.mubr.f32.mxu0 0.0
      %1122 = vmatmul.mubr.f32.gmra.mxu0 %v1024
      %v1123 = vpop.f32.mrf.mxu0
      %v1124 = vadd.f32 0.0, %v1123
      %v1125 = vpop.f32.mrf.mxu0
      %1126 = vmatprep.mubr.f32.mxu0 0.0
      %1127 = vmatmul.mubr.f32.gmra.mxu0 %v1025
      %v1128 = vpop.f32.mrf.mxu0
      %v1129 = vadd.f32 0.0, %v1128
      %v1130 = vpop.f32.mrf.mxu0
      %1131 = vmatprep.mubr.f32.mxu0 0.0
      %1132 = vmatmul.mubr.f32.gmra.mxu0 %v1026
      %v1133 = vpop.f32.mrf.mxu0
      %v1134 = vadd.f32 0.0, %v1133
      %v1135 = vpop.f32.mrf.mxu0
      %1136 = vmatprep.mubr.f32.mxu0 0.0
      %1137 = vmatmul.mubr.f32.gmra.mxu0 %v1027
      %v1138 = vpop.f32.mrf.mxu0
      %v1139 = vadd.f32 0.0, %v1138
      %v1140 = vpop.f32.mrf.mxu0
      %1141 = vmatprep.mubr.f32.mxu0 0.0
      %1142 = vmatmul.mubr.f32.gmra.mxu0 %v1028
      %v1143 = vpop.f32.mrf.mxu0
      %v1144 = vadd.f32 0.0, %v1143
      %v1145 = vpop.f32.mrf.mxu0
      %1146 = vmatprep.mubr.f32.mxu0 0.0
      %1147 = vmatmul.mubr.f32.gmra.mxu0 %v1029
      %v1148 = vpop.f32.mrf.mxu0
      %v1149 = vadd.f32 0.0, %v1148
      %v1150 = vpop.f32.mrf.mxu0
      %1151 = vdwg.mxu0
      %v1152 = vadd.f32 %v1011, %v1114
      %v1153 = vadd.f32 %v1012, %v1119
      %v1154 = vadd.f32 %v1013, %v1124
      %v1155 = vadd.f32 %v1014, %v1129
      %v1156 = vadd.f32 %v1015, %v1134
      %v1157 = vadd.f32 %v1016, %v1139
      %v1158 = vadd.f32 %v1017, %v1144
      %v1159 = vadd.f32 %v1018, %v1149
      %s1160 = sadd.s32 %s1020, 144
      %s1161 = scalar_lea.vmem %s187, %s1160
      %v1162 = vld [vmem:[%s1161] sm:$0xff]
      %v1163 = vld [vmem:[%s1161 + $0x10] sm:$0xff]
      %v1164 = vld [vmem:[%s1161 + $0x20] sm:$0xff]
      %v1165 = vld [vmem:[%s1161 + $0x30] sm:$0xff]
      %v1166 = vld [vmem:[%s1161 + $0x40] sm:$0xff]
      %v1167 = vld [vmem:[%s1161 + $0x50] sm:$0xff]
      %v1168 = vld [vmem:[%s1161 + $0x60] sm:$0xff]
      %v1169 = vld [vmem:[%s1161 + $0x70] sm:$0xff]
      %s1170 = scalar_lea.vmem %s1, 896
      %v1171 = vld [vmem:[%s1170] sm:$0xff]
      %v1172 = vld [vmem:[%s1170 + $0x8] sm:$0xff]
      %v1173 = vld [vmem:[%s1170 + $0x10] sm:$0xff]
      %v1174 = vld [vmem:[%s1170 + $0x18] sm:$0xff]
      %v1175 = vld [vmem:[%s1170 + $0x20] sm:$0xff]
      %v1176 = vld [vmem:[%s1170 + $0x28] sm:$0xff]
      %v1177 = vld [vmem:[%s1170 + $0x30] sm:$0xff]
      %v1178 = vld [vmem:[%s1170 + $0x38] sm:$0xff]
      %v1179 = vld [vmem:[%s1170 + $0x40] sm:$0xff]
      %v1180 = vld [vmem:[%s1170 + $0x48] sm:$0xff]
      %v1181 = vld [vmem:[%s1170 + $0x50] sm:$0xff]
      %v1182 = vld [vmem:[%s1170 + $0x58] sm:$0xff]
      %v1183 = vld [vmem:[%s1170 + $0x60] sm:$0xff]
      %v1184 = vld [vmem:[%s1170 + $0x68] sm:$0xff]
      %v1185 = vld [vmem:[%s1170 + $0x70] sm:$0xff]
      %v1186 = vld [vmem:[%s1170 + $0x78] sm:$0xff]
      %1187 = vmatprep.subr.mxu0 0.0
      %1188 = vmatpush1.msra.mxu0 %v1186
      %1189 = vmatprep.subr.mxu0 0.0
      %1190 = vmatpush1.msra.mxu0 %v1185
      %1191 = vmatprep.subr.mxu0 0.0
      %1192 = vmatpush1.msra.mxu0 %v1184
      %1193 = vmatprep.subr.mxu0 0.0
      %1194 = vmatpush1.msra.mxu0 %v1183
      %1195 = vmatprep.subr.mxu0 0.0
      %1196 = vmatpush1.msra.mxu0 %v1182
      %1197 = vmatprep.subr.mxu0 0.0
      %1198 = vmatpush1.msra.mxu0 %v1181
      %1199 = vmatprep.subr.mxu0 0.0
      %1200 = vmatpush1.msra.mxu0 %v1180
      %1201 = vmatprep.subr.mxu0 0.0
      %1202 = vmatpush1.msra.mxu0 %v1179
      %1203 = vmatprep.subr.mxu0 0.0
      %1204 = vmatpush1.msra.mxu0 %v1178
      %1205 = vmatprep.subr.mxu0 0.0
      %1206 = vmatpush1.msra.mxu0 %v1177
      %1207 = vmatprep.subr.mxu0 0.0
      %1208 = vmatpush1.msra.mxu0 %v1176
      %1209 = vmatprep.subr.mxu0 0.0
      %1210 = vmatpush1.msra.mxu0 %v1175
      %1211 = vmatprep.subr.mxu0 0.0
      %1212 = vmatpush1.msra.mxu0 %v1174
      %1213 = vmatprep.subr.mxu0 0.0
      %1214 = vmatpush1.msra.mxu0 %v1173
      %1215 = vmatprep.subr.mxu0 0.0
      %1216 = vmatpush1.msra.mxu0 %v1172
      %1217 = vmatprep.subr.mxu0 0.0
      %1218 = vmatpush1.msra.mxu0 %v1171
      %1219 = vmatprep.subr.mxu0 0.0
      %1220 = vmatpush2.msra.mxu0 0.0
      %1221 = vmatprep.subr.mxu0 0.0
      %1222 = vmatpush2.msra.mxu0 0.0
      %1223 = vmatprep.subr.mxu0 0.0
      %1224 = vmatpush2.msra.mxu0 0.0
      %1225 = vmatprep.subr.mxu0 0.0
      %1226 = vmatpush2.msra.mxu0 0.0
      %1227 = vmatprep.subr.mxu0 0.0
      %1228 = vmatpush2.msra.mxu0 0.0
      %1229 = vmatprep.subr.mxu0 0.0
      %1230 = vmatpush2.msra.mxu0 0.0
      %1231 = vmatprep.subr.mxu0 0.0
      %1232 = vmatpush2.msra.mxu0 0.0
      %1233 = vmatprep.subr.mxu0 0.0
      %1234 = vmatpush2.msra.mxu0 0.0
      %1235 = vmatprep.subr.mxu0 0.0
      %1236 = vmatpush2.msra.mxu0 0.0
      %1237 = vmatprep.subr.mxu0 0.0
      %1238 = vmatpush2.msra.mxu0 0.0
      %1239 = vmatprep.subr.mxu0 0.0
      %1240 = vmatpush2.msra.mxu0 0.0
      %1241 = vmatprep.subr.mxu0 0.0
      %1242 = vmatpush2.msra.mxu0 0.0
      %1243 = vmatprep.subr.mxu0 0.0
      %1244 = vmatpush2.msra.mxu0 0.0
      %1245 = vmatprep.subr.mxu0 0.0
      %1246 = vmatpush2.msra.mxu0 0.0
      %1247 = vmatprep.subr.mxu0 0.0
      %1248 = vmatpush2.msra.mxu0 0.0
      %1249 = vmatprep.subr.mxu0 0.0
      %1250 = vmatpush2.msra.mxu0 0.0
      %1251 = vmatprep.mubr.f32.mxu0 0.0
      %1252 = vmatmul.mubr.f32.gmra.mxu0 %v1162
      %v1253 = vpop.f32.mrf.mxu0
      %v1254 = vadd.f32 0.0, %v1253
      %v1255 = vpop.f32.mrf.mxu0
      %1256 = vmatprep.mubr.f32.mxu0 0.0
      %1257 = vmatmul.mubr.f32.gmra.mxu0 %v1163
      %v1258 = vpop.f32.mrf.mxu0
      %v1259 = vadd.f32 0.0, %v1258
      %v1260 = vpop.f32.mrf.mxu0
      %1261 = vmatprep.mubr.f32.mxu0 0.0
      %1262 = vmatmul.mubr.f32.gmra.mxu0 %v1164
      %v1263 = vpop.f32.mrf.mxu0
      %v1264 = vadd.f32 0.0, %v1263
      %v1265 = vpop.f32.mrf.mxu0
      %1266 = vmatprep.mubr.f32.mxu0 0.0
      %1267 = vmatmul.mubr.f32.gmra.mxu0 %v1165
      %v1268 = vpop.f32.mrf.mxu0
      %v1269 = vadd.f32 0.0, %v1268
      %v1270 = vpop.f32.mrf.mxu0
      %1271 = vmatprep.mubr.f32.mxu0 0.0
      %1272 = vmatmul.mubr.f32.gmra.mxu0 %v1166
      %v1273 = vpop.f32.mrf.mxu0
      %v1274 = vadd.f32 0.0, %v1273
      %v1275 = vpop.f32.mrf.mxu0
      %1276 = vmatprep.mubr.f32.mxu0 0.0
      %1277 = vmatmul.mubr.f32.gmra.mxu0 %v1167
      %v1278 = vpop.f32.mrf.mxu0
      %v1279 = vadd.f32 0.0, %v1278
      %v1280 = vpop.f32.mrf.mxu0
      %1281 = vmatprep.mubr.f32.mxu0 0.0
      %1282 = vmatmul.mubr.f32.gmra.mxu0 %v1168
      %v1283 = vpop.f32.mrf.mxu0
      %v1284 = vadd.f32 0.0, %v1283
      %v1285 = vpop.f32.mrf.mxu0
      %1286 = vmatprep.mubr.f32.mxu0 0.0
      %1287 = vmatmul.mubr.f32.gmra.mxu0 %v1169
      %v1288 = vpop.f32.mrf.mxu0
      %v1289 = vadd.f32 0.0, %v1288
      %v1290 = vpop.f32.mrf.mxu0
      %1291 = vdwg.mxu0
      %v1292 = vadd.f32 %v1152, %v1254
      %v1293 = vadd.f32 %v1153, %v1259
      %v1294 = vadd.f32 %v1154, %v1264
      %v1295 = vadd.f32 %v1155, %v1269
      %v1296 = vadd.f32 %v1156, %v1274
      %v1297 = vadd.f32 %v1157, %v1279
      %v1298 = vadd.f32 %v1158, %v1284
      %v1299 = vadd.f32 %v1159, %v1289
      %v1300 = vld [vmem:[%s1021 + $0x1] sm:$0xff]
      %v1301 = vld [vmem:[%s1021 + $0x11] sm:$0xff]
      %v1302 = vld [vmem:[%s1021 + $0x21] sm:$0xff]
      %v1303 = vld [vmem:[%s1021 + $0x31] sm:$0xff]
      %v1304 = vld [vmem:[%s1021 + $0x41] sm:$0xff]
      %v1305 = vld [vmem:[%s1021 + $0x51] sm:$0xff]
      %v1306 = vld [vmem:[%s1021 + $0x61] sm:$0xff]
      %v1307 = vld [vmem:[%s1021 + $0x71] sm:$0xff]
      %s1308 = scalar_lea.vmem %s1, 1024
      %v1309 = vld [vmem:[%s1308] sm:$0xff]
      %v1310 = vld [vmem:[%s1308 + $0x8] sm:$0xff]
      %v1311 = vld [vmem:[%s1308 + $0x10] sm:$0xff]
      %v1312 = vld [vmem:[%s1308 + $0x18] sm:$0xff]
      %v1313 = vld [vmem:[%s1308 + $0x20] sm:$0xff]
      %v1314 = vld [vmem:[%s1308 + $0x28] sm:$0xff]
      %v1315 = vld [vmem:[%s1308 + $0x30] sm:$0xff]
      %v1316 = vld [vmem:[%s1308 + $0x38] sm:$0xff]
      %v1317 = vld [vmem:[%s1308 + $0x40] sm:$0xff]
      %v1318 = vld [vmem:[%s1308 + $0x48] sm:$0xff]
      %v1319 = vld [vmem:[%s1308 + $0x50] sm:$0xff]
      %v1320 = vld [vmem:[%s1308 + $0x58] sm:$0xff]
      %v1321 = vld [vmem:[%s1308 + $0x60] sm:$0xff]
      %v1322 = vld [vmem:[%s1308 + $0x68] sm:$0xff]
      %v1323 = vld [vmem:[%s1308 + $0x70] sm:$0xff]
      %v1324 = vld [vmem:[%s1308 + $0x78] sm:$0xff]
      %1325 = vmatprep.subr.mxu0 0.0
      %1326 = vmatpush1.msra.mxu0 %v1324
      %1327 = vmatprep.subr.mxu0 0.0
      %1328 = vmatpush1.msra.mxu0 %v1323
      %1329 = vmatprep.subr.mxu0 0.0
      %1330 = vmatpush1.msra.mxu0 %v1322
      %1331 = vmatprep.subr.mxu0 0.0
      %1332 = vmatpush1.msra.mxu0 %v1321
      %1333 = vmatprep.subr.mxu0 0.0
      %1334 = vmatpush1.msra.mxu0 %v1320
      %1335 = vmatprep.subr.mxu0 0.0
      %1336 = vmatpush1.msra.mxu0 %v1319
      %1337 = vmatprep.subr.mxu0 0.0
      %1338 = vmatpush1.msra.mxu0 %v1318
      %1339 = vmatprep.subr.mxu0 0.0
      %1340 = vmatpush1.msra.mxu0 %v1317
      %1341 = vmatprep.subr.mxu0 0.0
      %1342 = vmatpush1.msra.mxu0 %v1316
      %1343 = vmatprep.subr.mxu0 0.0
      %1344 = vmatpush1.msra.mxu0 %v1315
      %1345 = vmatprep.subr.mxu0 0.0
      %1346 = vmatpush1.msra.mxu0 %v1314
      %1347 = vmatprep.subr.mxu0 0.0
      %1348 = vmatpush1.msra.mxu0 %v1313
      %1349 = vmatprep.subr.mxu0 0.0
      %1350 = vmatpush1.msra.mxu0 %v1312
      %1351 = vmatprep.subr.mxu0 0.0
      %1352 = vmatpush1.msra.mxu0 %v1311
      %1353 = vmatprep.subr.mxu0 0.0
      %1354 = vmatpush1.msra.mxu0 %v1310
      %1355 = vmatprep.subr.mxu0 0.0
      %1356 = vmatpush1.msra.mxu0 %v1309
      %1357 = vmatprep.subr.mxu0 0.0
      %1358 = vmatpush2.msra.mxu0 0.0
      %1359 = vmatprep.subr.mxu0 0.0
      %1360 = vmatpush2.msra.mxu0 0.0
      %1361 = vmatprep.subr.mxu0 0.0
      %1362 = vmatpush2.msra.mxu0 0.0
      %1363 = vmatprep.subr.mxu0 0.0
      %1364 = vmatpush2.msra.mxu0 0.0
      %1365 = vmatprep.subr.mxu0 0.0
      %1366 = vmatpush2.msra.mxu0 0.0
      %1367 = vmatprep.subr.mxu0 0.0
      %1368 = vmatpush2.msra.mxu0 0.0
      %1369 = vmatprep.subr.mxu0 0.0
      %1370 = vmatpush2.msra.mxu0 0.0
      %1371 = vmatprep.subr.mxu0 0.0
      %1372 = vmatpush2.msra.mxu0 0.0
      %1373 = vmatprep.subr.mxu0 0.0
      %1374 = vmatpush2.msra.mxu0 0.0
      %1375 = vmatprep.subr.mxu0 0.0
      %1376 = vmatpush2.msra.mxu0 0.0
      %1377 = vmatprep.subr.mxu0 0.0
      %1378 = vmatpush2.msra.mxu0 0.0
      %1379 = vmatprep.subr.mxu0 0.0
      %1380 = vmatpush2.msra.mxu0 0.0
      %1381 = vmatprep.subr.mxu0 0.0
      %1382 = vmatpush2.msra.mxu0 0.0
      %1383 = vmatprep.subr.mxu0 0.0
      %1384 = vmatpush2.msra.mxu0 0.0
      %1385 = vmatprep.subr.mxu0 0.0
      %1386 = vmatpush2.msra.mxu0 0.0
      %1387 = vmatprep.subr.mxu0 0.0
      %1388 = vmatpush2.msra.mxu0 0.0
      %1389 = vmatprep.mubr.f32.mxu0 0.0
      %1390 = vmatmul.mubr.f32.gmra.mxu0 %v1300
      %v1391 = vpop.f32.mrf.mxu0
      %v1392 = vadd.f32 0.0, %v1391
      %v1393 = vpop.f32.mrf.mxu0
      %1394 = vmatprep.mubr.f32.mxu0 0.0
      %1395 = vmatmul.mubr.f32.gmra.mxu0 %v1301
      %v1396 = vpop.f32.mrf.mxu0
      %v1397 = vadd.f32 0.0, %v1396
      %v1398 = vpop.f32.mrf.mxu0
      %1399 = vmatprep.mubr.f32.mxu0 0.0
      %1400 = vmatmul.mubr.f32.gmra.mxu0 %v1302
      %v1401 = vpop.f32.mrf.mxu0
      %v1402 = vadd.f32 0.0, %v1401
      %v1403 = vpop.f32.mrf.mxu0
      %1404 = vmatprep.mubr.f32.mxu0 0.0
      %1405 = vmatmul.mubr.f32.gmra.mxu0 %v1303
      %v1406 = vpop.f32.mrf.mxu0
      %v1407 = vadd.f32 0.0, %v1406
      %v1408 = vpop.f32.mrf.mxu0
      %1409 = vmatprep.mubr.f32.mxu0 0.0
      %1410 = vmatmul.mubr.f32.gmra.mxu0 %v1304
      %v1411 = vpop.f32.mrf.mxu0
      %v1412 = vadd.f32 0.0, %v1411
      %v1413 = vpop.f32.mrf.mxu0
      %1414 = vmatprep.mubr.f32.mxu0 0.0
      %1415 = vmatmul.mubr.f32.gmra.mxu0 %v1305
      %v1416 = vpop.f32.mrf.mxu0
      %v1417 = vadd.f32 0.0, %v1416
      %v1418 = vpop.f32.mrf.mxu0
      %1419 = vmatprep.mubr.f32.mxu0 0.0
      %1420 = vmatmul.mubr.f32.gmra.mxu0 %v1306
      %v1421 = vpop.f32.mrf.mxu0
      %v1422 = vadd.f32 0.0, %v1421
      %v1423 = vpop.f32.mrf.mxu0
      %1424 = vmatprep.mubr.f32.mxu0 0.0
      %1425 = vmatmul.mubr.f32.gmra.mxu0 %v1307
      %v1426 = vpop.f32.mrf.mxu0
      %v1427 = vadd.f32 0.0, %v1426
      %v1428 = vpop.f32.mrf.mxu0
      %1429 = vdwg.mxu0
      %v1430 = vadd.f32 %v1292, %v1392
      %v1431 = vadd.f32 %v1293, %v1397
      %v1432 = vadd.f32 %v1294, %v1402
      %v1433 = vadd.f32 %v1295, %v1407
      %v1434 = vadd.f32 %v1296, %v1412
      %v1435 = vadd.f32 %v1297, %v1417
      %v1436 = vadd.f32 %v1298, %v1422
      %v1437 = vadd.f32 %v1299, %v1427
      %v1438 = vld [vmem:[%s2] sm:$0x1]
      %v1440 = vlaneseq
      %v1441 = vshrl.u32 %v1440, 7
      %v1442 = vsub.s32 0, %v1441
      %v1443 = vrot.slane %v1438, %v1442
      %v1445 = vadd.f32 %v1430, %v1443
      %v1446 = vadd.f32 %v1431, %v1443
      %v1447 = vadd.f32 %v1432, %v1443
      %v1448 = vadd.f32 %v1433, %v1443
      %v1449 = vadd.f32 %v1434, %v1443
      %v1450 = vadd.f32 %v1435, %v1443
      %v1451 = vadd.f32 %v1436, %v1443
      %v1452 = vadd.f32 %v1437, %v1443
      %v1453 = vmax.f32 %v1445, 0.0
      %v1454 = vmax.f32 %v1446, 0.0
      %v1455 = vmax.f32 %v1447, 0.0
      %v1456 = vmax.f32 %v1448, 0.0
      %v1457 = vmax.f32 %v1449, 0.0
      %v1458 = vmax.f32 %v1450, 0.0
      %v1459 = vmax.f32 %v1451, 0.0
      %v1460 = vmax.f32 %v1452, 0.0
      %1461 = vst [vmem:[%s197] sm:$0xff] %v1453
      %1462 = vst [vmem:[%s197 + $0x8] sm:$0xff] %v1454
      %1463 = vst [vmem:[%s197 + $0x10] sm:$0xff] %v1455
      %1464 = vst [vmem:[%s197 + $0x18] sm:$0xff] %v1456
      %1465 = vst [vmem:[%s197 + $0x20] sm:$0xff] %v1457
      %1466 = vst [vmem:[%s197 + $0x28] sm:$0xff] %v1458
      %1467 = vst [vmem:[%s197 + $0x30] sm:$0xff] %v1459
      %1468 = vst [vmem:[%s197 + $0x38] sm:$0xff] %v1460
      %s1469 = smul.u32 8, %s19
      %p1470 = scmp.lt.s32.totalorder %s18, 1
      %s1471 = scalar_select %p1470, %s18, 1
      %p1472 = scmp.lt.s32.totalorder %s1469, 7
      %s1473 = scalar_select %p1472, %s1469, 7
      %s1474 = smul.addr %s1471, 8
      %s1475 = sadd.s32 %s1473, %s1474
      %s1476 = smul.addr %s1475, 8
      %s1477 = scalar_lea.vmem %s3, %s1476
      // Predicated region
      $region33: #{blocks_forward.4} parent=31 // pred_check
        %p1478 = pneg %p114
      $region34: #{blocks_forward.4} parent=31 // pred_check_branch
        %1480 = sbr.rel (%p1478) target = $region36
      $region35: #{blocks_forward.4} parent=31 // pred_region
        %s1481 = smul.u32 8, %s19
      $region36: #{blocks_forward.4} parent=31 // pred_fallthru
        _
    $region32: #{blocks_forward.4} parent=5 // pred_fallthru
      _
    %p1482 = scmp.le.s32.totalorder 2, %s9
    // Predicated region
    $region37: #{blocks_forward.4} parent=5 // pred_check
      %p1483 = pneg %p1482
    $region38: #{blocks_forward.4} parent=5 // pred_check_branch
      %1485 = sbr.rel (%p1483) target = $region40
    $region39: #{blocks_forward.4} parent=5 // pred_region
      %s1486 = ssub.s32 %s9, 2
      // Predicated region
      $region41: #{blocks_forward.4} parent=39 // pred_check
        %p1487 = pneg %p120
      $region42: #{blocks_forward.4} parent=39 // pred_check_branch
        %1489 = sbr.rel (%p1487) target = $region44
      $region43: #{blocks_forward.4} parent=39 // pred_region
        %s1490 = smul.u32 8, %s21
        %p1491 = scmp.lt.s32.totalorder %s20, 1
        %s1492 = scalar_select %p1491, %s20, 1
        %p1493 = scmp.lt.s32.totalorder %s1490, 7
        %s1494 = scalar_select %p1493, %s1490, 7
        %s1495 = smul.addr %s1492, 8
        %s1496 = sadd.s32 %s1494, %s1495
        %s1497 = smul.addr %s1496, 8
        %s1498 = scalar_lea.vmem %s3, %s1497
      $region44: #{blocks_forward.4} parent=39 // pred_fallthru
        _
    $region40: #{blocks_forward.4} parent=5 // pred_fallthru
      _
  $region6: #{blocks_forward.4} parent=0 // loop_footer
    %s13 = sadd.s32 1, %s9
  $region7: #{blocks_forward.4} parent=0 // loop_footer_branch
    %8 = sbr.rel target = $region3
  $region8: #{blocks_forward.4} parent=0 // loop_exit
    _

// kernel: blocks_forward.5
$region0: #{blocks_forward.5}
  #allocation0 [shape = 'u32[]', space=smem, size = 0x4, offset = 0x4, fixed_abs, tag = 'smem constant byte address 0x4 - core index']
  #allocation1 [shape = 'u32[144,128]{1,0:T(1,128)}', space=vmem, size = 0x12000, scoped, tag = 'internal scratch']
  %s0 = inlined_call_operand.vmem [shape: f32[128,128], index: 0, kind: input, shape index: {}]
  %s1 = inlined_call_operand.vmem [shape: f32[128,128], index: 1, kind: input, shape index: {}]
  %s2 = inlined_call_operand.vmem [shape: f32[1,128], index: 2, kind: input, shape index: {}]
  %s3 = inlined_call_operand.vmem [shape: f32[128,128], index: 3, kind: input, shape index: {}]
  %s4 = inlined_call_operand.vmem [shape: f32[128,128], index: 4, kind: input, shape index: {}]
  %s5 = inlined_call_operand.vmem [shape: f32[1,128], index: 5, kind: input, shape index: {}]
  %s6 = inlined_call_operand.vmem [shape: f32[128,128], index: 6, kind: output, shape index: {}]
  %s7 = sld [smem:[#allocation0]]
  $region34: #{blocks_forward.5} parent=0
    _
  %s9 = ssub.s32 1, %s7
  %s10 = scalar_select 0, %s9, %s7
  // Predicated region
  $region2: #{blocks_forward.5} parent=0 // pred_check
    _
  $region3: #{blocks_forward.5} parent=0 // pred_check_branch
    %12 = sbr.rel (0) target = $region5
  $region4: #{blocks_forward.5} parent=0 // pred_region
    _
  $region5: #{blocks_forward.5} parent=0 // pred_fallthru
    _
  // Predicated region
  $region6: #{blocks_forward.5} parent=0 // pred_check
    _
  $region7: #{blocks_forward.5} parent=0 // pred_check_branch
    %14 = sbr.rel (0) target = $region9
  $region8: #{blocks_forward.5} parent=0 // pred_region
    _
  $region9: #{blocks_forward.5} parent=0 // pred_fallthru
    _
  // Predicated region
  $region10: #{blocks_forward.5} parent=0 // pred_check
    _
  $region11: #{blocks_forward.5} parent=0 // pred_check_branch
    %16 = sbr.rel (0) target = $region13
  $region12: #{blocks_forward.5} parent=0 // pred_region
    _
  $region13: #{blocks_forward.5} parent=0 // pred_fallthru
    _
  // Predicated region
  $region14: #{blocks_forward.5} parent=0 // pred_check
    _
  $region15: #{blocks_forward.5} parent=0 // pred_check_branch
    %18 = sbr.rel (0) target = $region17
  $region16: #{blocks_forward.5} parent=0 // pred_region
    _
  $region17: #{blocks_forward.5} parent=0 // pred_fallthru
    _
  // Predicated region
  $region18: #{blocks_forward.5} parent=0 // pred_check
    _
  $region19: #{blocks_forward.5} parent=0 // pred_check_branch
    %20 = sbr.rel (0) target = $region21
  $region20: #{blocks_forward.5} parent=0 // pred_region
    _
  $region21: #{blocks_forward.5} parent=0 // pred_fallthru
    _
  // Predicated region
  $region22: #{blocks_forward.5} parent=0 // pred_check
    _
  $region23: #{blocks_forward.5} parent=0 // pred_check_branch
    %22 = sbr.rel (0) target = $region25
  $region24: #{blocks_forward.5} parent=0 // pred_region
    _
  $region25: #{blocks_forward.5} parent=0 // pred_fallthru
    _
  %v23 = vld [vmem:[%s0] sm:$0xff]
  %v24 = vld [vmem:[%s0 + $0x8] sm:$0xff]
  %v25 = vld [vmem:[%s0 + $0x10] sm:$0xff]
  %v26 = vld [vmem:[%s0 + $0x18] sm:$0xff]
  %v27 = vld [vmem:[%s0 + $0x20] sm:$0xff]
  %v28 = vld [vmem:[%s0 + $0x28] sm:$0xff]
  %v29 = vld [vmem:[%s0 + $0x30] sm:$0xff]
  %v30 = vld [vmem:[%s0 + $0x38] sm:$0xff]
  %v31 = vld [vmem:[%s0 + $0x40] sm:$0xff]
  %v32 = vld [vmem:[%s0 + $0x48] sm:$0xff]
  %v33 = vld [vmem:[%s0 + $0x50] sm:$0xff]
  %v34 = vld [vmem:[%s0 + $0x58] sm:$0xff]
  %v35 = vld [vmem:[%s0 + $0x60] sm:$0xff]
  %v36 = vld [vmem:[%s0 + $0x68] sm:$0xff]
  %v37 = vld [vmem:[%s0 + $0x70] sm:$0xff]
  %v38 = vld [vmem:[%s0 + $0x78] sm:$0xff]
  %v39 = vld [vmem:[%s1] sm:$0xff]
  %v40 = vld [vmem:[%s1 + $0x8] sm:$0xff]
  %v41 = vld [vmem:[%s1 + $0x10] sm:$0xff]
  %v42 = vld [vmem:[%s1 + $0x18] sm:$0xff]
  %v43 = vld [vmem:[%s1 + $0x20] sm:$0xff]
  %v44 = vld [vmem:[%s1 + $0x28] sm:$0xff]
  %v45 = vld [vmem:[%s1 + $0x30] sm:$0xff]
  %v46 = vld [vmem:[%s1 + $0x38] sm:$0xff]
  %v47 = vld [vmem:[%s1 + $0x40] sm:$0xff]
  %v48 = vld [vmem:[%s1 + $0x48] sm:$0xff]
  %v49 = vld [vmem:[%s1 + $0x50] sm:$0xff]
  %v50 = vld [vmem:[%s1 + $0x58] sm:$0xff]
  %v51 = vld [vmem:[%s1 + $0x60] sm:$0xff]
  %v52 = vld [vmem:[%s1 + $0x68] sm:$0xff]
  %v53 = vld [vmem:[%s1 + $0x70] sm:$0xff]
  %v54 = vld [vmem:[%s1 + $0x78] sm:$0xff]
  %v55 = vld [vmem:[%s3] sm:$0xff]
  %v56 = vld [vmem:[%s3 + $0x8] sm:$0xff]
  %v57 = vld [vmem:[%s3 + $0x10] sm:$0xff]
  %v58 = vld [vmem:[%s3 + $0x18] sm:$0xff]
  %v59 = vld [vmem:[%s3 + $0x20] sm:$0xff]
  %v60 = vld [vmem:[%s3 + $0x28] sm:$0xff]
  %v61 = vld [vmem:[%s3 + $0x30] sm:$0xff]
  %v62 = vld [vmem:[%s3 + $0x38] sm:$0xff]
  %v63 = vld [vmem:[%s3 + $0x40] sm:$0xff]
  %v64 = vld [vmem:[%s3 + $0x48] sm:$0xff]
  %v65 = vld [vmem:[%s3 + $0x50] sm:$0xff]
  %v66 = vld [vmem:[%s3 + $0x58] sm:$0xff]
  %v67 = vld [vmem:[%s3 + $0x60] sm:$0xff]
  %v68 = vld [vmem:[%s3 + $0x68] sm:$0xff]
  %v69 = vld [vmem:[%s3 + $0x70] sm:$0xff]
  %v70 = vld [vmem:[%s3 + $0x78] sm:$0xff]
  %v71 = vld [vmem:[%s4] sm:$0xff]
  %v72 = vld [vmem:[%s4 + $0x8] sm:$0xff]
  %v73 = vld [vmem:[%s4 + $0x10] sm:$0xff]
  %v74 = vld [vmem:[%s4 + $0x18] sm:$0xff]
  %v75 = vld [vmem:[%s4 + $0x20] sm:$0xff]
  %v76 = vld [vmem:[%s4 + $0x28] sm:$0xff]
  %v77 = vld [vmem:[%s4 + $0x30] sm:$0xff]
  %v78 = vld [vmem:[%s4 + $0x38] sm:$0xff]
  %v79 = vld [vmem:[%s4 + $0x40] sm:$0xff]
  %v80 = vld [vmem:[%s4 + $0x48] sm:$0xff]
  %v81 = vld [vmem:[%s4 + $0x50] sm:$0xff]
  %v82 = vld [vmem:[%s4 + $0x58] sm:$0xff]
  %v83 = vld [vmem:[%s4 + $0x60] sm:$0xff]
  %v84 = vld [vmem:[%s4 + $0x68] sm:$0xff]
  %v85 = vld [vmem:[%s4 + $0x70] sm:$0xff]
  %v86 = vld [vmem:[%s4 + $0x78] sm:$0xff]
  %87 = vmatprep.subr.mxu0 0.0
  %88 = vmatpush1.msra.mxu0 %v86
  %89 = vmatprep.subr.mxu0 0.0
  %90 = vmatpush1.msra.mxu0 %v85
  %91 = vmatprep.subr.mxu0 0.0
  %92 = vmatpush1.msra.mxu0 %v84
  %93 = vmatprep.subr.mxu0 0.0
  %94 = vmatpush1.msra.mxu0 %v83
  %95 = vmatprep.subr.mxu0 0.0
  %96 = vmatpush1.msra.mxu0 %v82
  %97 = vmatprep.subr.mxu0 0.0
  %98 = vmatpush1.msra.mxu0 %v81
  %99 = vmatprep.subr.mxu0 0.0
  %100 = vmatpush1.msra.mxu0 %v80
  %101 = vmatprep.subr.mxu0 0.0
  %102 = vmatpush1.msra.mxu0 %v79
  %103 = vmatprep.subr.mxu0 0.0
  %104 = vmatpush1.msra.mxu0 %v78
  %105 = vmatprep.subr.mxu0 0.0
  %106 = vmatpush1.msra.mxu0 %v77
  %107 = vmatprep.subr.mxu0 0.0
  %108 = vmatpush1.msra.mxu0 %v76
  %109 = vmatprep.subr.mxu0 0.0
  %110 = vmatpush1.msra.mxu0 %v75
  %111 = vmatprep.subr.mxu0 0.0
  %112 = vmatpush1.msra.mxu0 %v74
  %113 = vmatprep.subr.mxu0 0.0
  %114 = vmatpush1.msra.mxu0 %v73
  %115 = vmatprep.subr.mxu0 0.0
  %116 = vmatpush1.msra.mxu0 %v72
  %117 = vmatprep.subr.mxu0 0.0
  %118 = vmatpush1.msra.mxu0 %v71
  %119 = vmatprep.subr.mxu0 0.0
  %120 = vmatpush2.msra.mxu0 0.0
  %121 = vmatprep.subr.mxu0 0.0
  %122 = vmatpush2.msra.mxu0 0.0
  %123 = vmatprep.subr.mxu0 0.0
  %124 = vmatpush2.msra.mxu0 0.0
  %125 = vmatprep.subr.mxu0 0.0
  %126 = vmatpush2.msra.mxu0 0.0
  %127 = vmatprep.subr.mxu0 0.0
  %128 = vmatpush2.msra.mxu0 0.0
  %129 = vmatprep.subr.mxu0 0.0
  %130 = vmatpush2.msra.mxu0 0.0
  %131 = vmatprep.subr.mxu0 0.0
  %132 = vmatpush2.msra.mxu0 0.0
  %133 = vmatprep.subr.mxu0 0.0
  %134 = vmatpush2.msra.mxu0 0.0
  %135 = vmatprep.subr.mxu0 0.0
  %136 = vmatpush2.msra.mxu0 0.0
  %137 = vmatprep.subr.mxu0 0.0
  %138 = vmatpush2.msra.mxu0 0.0
  %139 = vmatprep.subr.mxu0 0.0
  %140 = vmatpush2.msra.mxu0 0.0
  %141 = vmatprep.subr.mxu0 0.0
  %142 = vmatpush2.msra.mxu0 0.0
  %143 = vmatprep.subr.mxu0 0.0
  %144 = vmatpush2.msra.mxu0 0.0
  %145 = vmatprep.subr.mxu0 0.0
  %146 = vmatpush2.msra.mxu0 0.0
  %147 = vmatprep.subr.mxu0 0.0
  %148 = vmatpush2.msra.mxu0 0.0
  %149 = vmatprep.subr.mxu0 0.0
  %150 = vmatpush2.msra.mxu0 0.0
  %151 = vmatprep.mubr.f32.mxu0 0.0
  %152 = vmatmul.mubr.f32.gmra.mxu0 %v55
  %v153 = vpop.f32.mrf.mxu0
  %v154 = vadd.f32 0.0, %v153
  %v155 = vpop.f32.mrf.mxu0
  %156 = vmatprep.mubr.f32.mxu0 0.0
  %157 = vmatmul.mubr.f32.gmra.mxu0 %v56
  %v158 = vpop.f32.mrf.mxu0
  %v159 = vadd.f32 0.0, %v158
  %v160 = vpop.f32.mrf.mxu0
  %161 = vmatprep.mubr.f32.mxu0 0.0
  %162 = vmatmul.mubr.f32.gmra.mxu0 %v57
  %v163 = vpop.f32.mrf.mxu0
  %v164 = vadd.f32 0.0, %v163
  %v165 = vpop.f32.mrf.mxu0
  %166 = vmatprep.mubr.f32.mxu0 0.0
  %167 = vmatmul.mubr.f32.gmra.mxu0 %v58
  %v168 = vpop.f32.mrf.mxu0
  %v169 = vadd.f32 0.0, %v168
  %v170 = vpop.f32.mrf.mxu0
  %171 = vmatprep.mubr.f32.mxu0 0.0
  %172 = vmatmul.mubr.f32.gmra.mxu0 %v59
  %v173 = vpop.f32.mrf.mxu0
  %v174 = vadd.f32 0.0, %v173
  %v175 = vpop.f32.mrf.mxu0
  %176 = vmatprep.mubr.f32.mxu0 0.0
  %177 = vmatmul.mubr.f32.gmra.mxu0 %v60
  %v178 = vpop.f32.mrf.mxu0
  %v179 = vadd.f32 0.0, %v178
  %v180 = vpop.f32.mrf.mxu0
  %181 = vmatprep.mubr.f32.mxu0 0.0
  %182 = vmatmul.mubr.f32.gmra.mxu0 %v61
  %v183 = vpop.f32.mrf.mxu0
  %v184 = vadd.f32 0.0, %v183
  %v185 = vpop.f32.mrf.mxu0
  %186 = vmatprep.mubr.f32.mxu0 0.0
  %187 = vmatmul.mubr.f32.gmra.mxu0 %v62
  %v188 = vpop.f32.mrf.mxu0
  %v189 = vadd.f32 0.0, %v188
  %v190 = vpop.f32.mrf.mxu0
  %191 = vmatprep.mubr.f32.mxu0 0.0
  %192 = vmatmul.mubr.f32.gmra.mxu0 %v63
  %v193 = vpop.f32.mrf.mxu0
  %v194 = vadd.f32 0.0, %v193
  %v195 = vpop.f32.mrf.mxu0
  %196 = vmatprep.mubr.f32.mxu0 0.0
  %197 = vmatmul.mubr.f32.gmra.mxu0 %v64
  %v198 = vpop.f32.mrf.mxu0
  %v199 = vadd.f32 0.0, %v198
  %v200 = vpop.f32.mrf.mxu0
  %201 = vmatprep.mubr.f32.mxu0 0.0
  %202 = vmatmul.mubr.f32.gmra.mxu0 %v65
  %v203 = vpop.f32.mrf.mxu0
  %v204 = vadd.f32 0.0, %v203
  %v205 = vpop.f32.mrf.mxu0
  %206 = vmatprep.mubr.f32.mxu0 0.0
  %207 = vmatmul.mubr.f32.gmra.mxu0 %v66
  %v208 = vpop.f32.mrf.mxu0
  %v209 = vadd.f32 0.0, %v208
  %v210 = vpop.f32.mrf.mxu0
  %211 = vmatprep.mubr.f32.mxu0 0.0
  %212 = vmatmul.mubr.f32.gmra.mxu0 %v67
  %v213 = vpop.f32.mrf.mxu0
  %v214 = vadd.f32 0.0, %v213
  %v215 = vpop.f32.mrf.mxu0
  %216 = vmatprep.mubr.f32.mxu0 0.0
  %217 = vmatmul.mubr.f32.gmra.mxu0 %v68
  %v218 = vpop.f32.mrf.mxu0
  %v219 = vadd.f32 0.0, %v218
  %v220 = vpop.f32.mrf.mxu0
  %221 = vmatprep.mubr.f32.mxu0 0.0
  %222 = vmatmul.mubr.f32.gmra.mxu0 %v69
  %v223 = vpop.f32.mrf.mxu0
  %v224 = vadd.f32 0.0, %v223
  %v225 = vpop.f32.mrf.mxu0
  %226 = vmatprep.mubr.f32.mxu0 0.0
  %227 = vmatmul.mubr.f32.gmra.mxu0 %v70
  %v228 = vpop.f32.mrf.mxu0
  %v229 = vadd.f32 0.0, %v228
  %v230 = vpop.f32.mrf.mxu0
  %231 = vdwg.mxu0
  %v232 = vld [vmem:[%s2] sm:$0x1]
  %v234 = vlaneseq
  %v235 = vshrl.u32 %v234, 7
  %v236 = vsub.s32 0, %v235
  %v237 = vrot.slane %v232, %v236
  %239 = vmatprep.subr.mxu0 0.0
  %240 = vmatpush1.msra.mxu0 %v54
  %241 = vmatprep.subr.mxu0 0.0
  %242 = vmatpush1.msra.mxu0 %v53
  %243 = vmatprep.subr.mxu0 0.0
  %244 = vmatpush1.msra.mxu0 %v52
  %245 = vmatprep.subr.mxu0 0.0
  %246 = vmatpush1.msra.mxu0 %v51
  %247 = vmatprep.subr.mxu0 0.0
  %248 = vmatpush1.msra.mxu0 %v50
  %249 = vmatprep.subr.mxu0 0.0
  %250 = vmatpush1.msra.mxu0 %v49
  %251 = vmatprep.subr.mxu0 0.0
  %252 = vmatpush1.msra.mxu0 %v48
  %253 = vmatprep.subr.mxu0 0.0
  %254 = vmatpush1.msra.mxu0 %v47
  %255 = vmatprep.subr.mxu0 0.0
  %256 = vmatpush1.msra.mxu0 %v46
  %257 = vmatprep.subr.mxu0 0.0
  %258 = vmatpush1.msra.mxu0 %v45
  %259 = vmatprep.subr.mxu0 0.0
  %260 = vmatpush1.msra.mxu0 %v44
  %261 = vmatprep.subr.mxu0 0.0
  %262 = vmatpush1.msra.mxu0 %v43
  %263 = vmatprep.subr.mxu0 0.0
  %264 = vmatpush1.msra.mxu0 %v42
  %265 = vmatprep.subr.mxu0 0.0
  %266 = vmatpush1.msra.mxu0 %v41
  %267 = vmatprep.subr.mxu0 0.0
  %268 = vmatpush1.msra.mxu0 %v40
  %269 = vmatprep.subr.mxu0 0.0
  %270 = vmatpush1.msra.mxu0 %v39
  %271 = vmatprep.subr.mxu0 0.0
  %272 = vmatpush2.msra.mxu0 0.0
  %273 = vmatprep.subr.mxu0 0.0
  %274 = vmatpush2.msra.mxu0 0.0
  %275 = vmatprep.subr.mxu0 0.0
  %276 = vmatpush2.msra.mxu0 0.0
  %277 = vmatprep.subr.mxu0 0.0
  %278 = vmatpush2.msra.mxu0 0.0
  %279 = vmatprep.subr.mxu0 0.0
  %280 = vmatpush2.msra.mxu0 0.0
  %281 = vmatprep.subr.mxu0 0.0
  %282 = vmatpush2.msra.mxu0 0.0
  %283 = vmatprep.subr.mxu0 0.0
  %284 = vmatpush2.msra.mxu0 0.0
  %285 = vmatprep.subr.mxu0 0.0
  %286 = vmatpush2.msra.mxu0 0.0
  %287 = vmatprep.subr.mxu0 0.0
  %288 = vmatpush2.msra.mxu0 0.0
  %289 = vmatprep.subr.mxu0 0.0
  %290 = vmatpush2.msra.mxu0 0.0
  %291 = vmatprep.subr.mxu0 0.0
  %292 = vmatpush2.msra.mxu0 0.0
  %293 = vmatprep.subr.mxu0 0.0
  %294 = vmatpush2.msra.mxu0 0.0
  %295 = vmatprep.subr.mxu0 0.0
  %296 = vmatpush2.msra.mxu0 0.0
  %297 = vmatprep.subr.mxu0 0.0
  %298 = vmatpush2.msra.mxu0 0.0
  %299 = vmatprep.subr.mxu0 0.0
  %300 = vmatpush2.msra.mxu0 0.0
  %301 = vmatprep.subr.mxu0 0.0
  %302 = vmatpush2.msra.mxu0 0.0
  %303 = vmatprep.mubr.f32.mxu0 0.0
  %304 = vmatmul.mubr.f32.gmra.mxu0 %v23
  %v305 = vpop.f32.mrf.mxu0
  %v306 = vadd.f32 %v237, %v305
  %v307 = vpop.f32.mrf.mxu0
  %308 = vmatprep.mubr.f32.mxu0 0.0
  %309 = vmatmul.mubr.f32.gmra.mxu0 %v24
  %v310 = vpop.f32.mrf.mxu0
  %v311 = vadd.f32 %v237, %v310
  %v312 = vpop.f32.mrf.mxu0
  %313 = vmatprep.mubr.f32.mxu0 0.0
  %314 = vmatmul.mubr.f32.gmra.mxu0 %v25
  %v315 = vpop.f32.mrf.mxu0
  %v316 = vadd.f32 %v237, %v315
  %v317 = vpop.f32.mrf.mxu0
  %318 = vmatprep.mubr.f32.mxu0 0.0
  %319 = vmatmul.mubr.f32.gmra.mxu0 %v26
  %v320 = vpop.f32.mrf.mxu0
  %v321 = vadd.f32 %v237, %v320
  %v322 = vpop.f32.mrf.mxu0
  %323 = vmatprep.mubr.f32.mxu0 0.0
  %324 = vmatmul.mubr.f32.gmra.mxu0 %v27
  %v325 = vpop.f32.mrf.mxu0
  %v326 = vadd.f32 %v237, %v325
  %v327 = vpop.f32.mrf.mxu0
  %328 = vmatprep.mubr.f32.mxu0 0.0
  %329 = vmatmul.mubr.f32.gmra.mxu0 %v28
  %v330 = vpop.f32.mrf.mxu0
  %v331 = vadd.f32 %v237, %v330
  %v332 = vpop.f32.mrf.mxu0
  %333 = vmatprep.mubr.f32.mxu0 0.0
  %334 = vmatmul.mubr.f32.gmra.mxu0 %v29
  %v335 = vpop.f32.mrf.mxu0
  %v336 = vadd.f32 %v237, %v335
  %v337 = vpop.f32.mrf.mxu0
  %338 = vmatprep.mubr.f32.mxu0 0.0
  %339 = vmatmul.mubr.f32.gmra.mxu0 %v30
  %v340 = vpop.f32.mrf.mxu0
  %v341 = vadd.f32 %v237, %v340
  %v342 = vpop.f32.mrf.mxu0
  %343 = vmatprep.mubr.f32.mxu0 0.0
  %344 = vmatmul.mubr.f32.gmra.mxu0 %v31
  %v345 = vpop.f32.mrf.mxu0
  %v346 = vadd.f32 %v237, %v345
  %v347 = vpop.f32.mrf.mxu0
  %348 = vmatprep.mubr.f32.mxu0 0.0
  %349 = vmatmul.mubr.f32.gmra.mxu0 %v32
  %v350 = vpop.f32.mrf.mxu0
  %v351 = vadd.f32 %v237, %v350
  %v352 = vpop.f32.mrf.mxu0
  %353 = vmatprep.mubr.f32.mxu0 0.0
  %354 = vmatmul.mubr.f32.gmra.mxu0 %v33
  %v355 = vpop.f32.mrf.mxu0
  %v356 = vadd.f32 %v237, %v355
  %v357 = vpop.f32.mrf.mxu0
  %358 = vmatprep.mubr.f32.mxu0 0.0
  %359 = vmatmul.mubr.f32.gmra.mxu0 %v34
  %v360 = vpop.f32.mrf.mxu0
  %v361 = vadd.f32 %v237, %v360
  %v362 = vpop.f32.mrf.mxu0
  %363 = vmatprep.mubr.f32.mxu0 0.0
  %364 = vmatmul.mubr.f32.gmra.mxu0 %v35
  %v365 = vpop.f32.mrf.mxu0
  %v366 = vadd.f32 %v237, %v365
  %v367 = vpop.f32.mrf.mxu0
  %368 = vmatprep.mubr.f32.mxu0 0.0
  %369 = vmatmul.mubr.f32.gmra.mxu0 %v36
  %v370 = vpop.f32.mrf.mxu0
  %v371 = vadd.f32 %v237, %v370
  %v372 = vpop.f32.mrf.mxu0
  %373 = vmatprep.mubr.f32.mxu0 0.0
  %374 = vmatmul.mubr.f32.gmra.mxu0 %v37
  %v375 = vpop.f32.mrf.mxu0
  %v376 = vadd.f32 %v237, %v375
  %v377 = vpop.f32.mrf.mxu0
  %378 = vmatprep.mubr.f32.mxu0 0.0
  %379 = vmatmul.mubr.f32.gmra.mxu0 %v38
  %v380 = vpop.f32.mrf.mxu0
  %v381 = vadd.f32 %v237, %v380
  %v382 = vpop.f32.mrf.mxu0
  %383 = vdwg.mxu0
  %v384 = vadd.f32 %v306, %v154
  %v385 = vadd.f32 %v311, %v159
  %v386 = vadd.f32 %v316, %v164
  %v387 = vadd.f32 %v321, %v169
  %v388 = vadd.f32 %v326, %v174
  %v389 = vadd.f32 %v331, %v179
  %v390 = vadd.f32 %v336, %v184
  %v391 = vadd.f32 %v341, %v189
  %v392 = vadd.f32 %v346, %v194
  %v393 = vadd.f32 %v351, %v199
  %v394 = vadd.f32 %v356, %v204
  %v395 = vadd.f32 %v361, %v209
  %v396 = vadd.f32 %v366, %v214
  %v397 = vadd.f32 %v371, %v219
  %v398 = vadd.f32 %v376, %v224
  %v399 = vadd.f32 %v381, %v229
  %v400 = vld [vmem:[%s5] sm:$0x1]
  %v402 = vlaneseq
  %v403 = vshrl.u32 %v402, 7
  %v404 = vsub.s32 0, %v403
  %v405 = vrot.slane %v400, %v404
  %v407 = vadd.f32 %v384, %v405
  %v408 = vadd.f32 %v385, %v405
  %v409 = vadd.f32 %v386, %v405
  %v410 = vadd.f32 %v387, %v405
  %v411 = vadd.f32 %v388, %v405
  %v412 = vadd.f32 %v389, %v405
  %v413 = vadd.f32 %v390, %v405
  %v414 = vadd.f32 %v391, %v405
  %v415 = vadd.f32 %v392, %v405
  %v416 = vadd.f32 %v393, %v405
  %v417 = vadd.f32 %v394, %v405
  %v418 = vadd.f32 %v395, %v405
  %v419 = vadd.f32 %v396, %v405
  %v420 = vadd.f32 %v397, %v405
  %v421 = vadd.f32 %v398, %v405
  %v422 = vadd.f32 %v399, %v405
  %v423 = vmax.f32 %v407, 0.0
  %v424 = vmax.f32 %v408, 0.0
  %v425 = vmax.f32 %v409, 0.0
  %v426 = vmax.f32 %v410, 0.0
  %v427 = vmax.f32 %v411, 0.0
  %v428 = vmax.f32 %v412, 0.0
  %v429 = vmax.f32 %v413, 0.0
  %v430 = vmax.f32 %v414, 0.0
  %v431 = vmax.f32 %v415, 0.0
  %v432 = vmax.f32 %v416, 0.0
  %v433 = vmax.f32 %v417, 0.0
  %v434 = vmax.f32 %v418, 0.0
  %v435 = vmax.f32 %v419, 0.0
  %v436 = vmax.f32 %v420, 0.0
  %v437 = vmax.f32 %v421, 0.0
  %v438 = vmax.f32 %v422, 0.0
  %439 = vst [vmem:[%s6] sm:$0xff] %v423
  %440 = vst [vmem:[%s6 + $0x8] sm:$0xff] %v424
  %441 = vst [vmem:[%s6 + $0x10] sm:$0xff] %v425
  %442 = vst [vmem:[%s6 + $0x18] sm:$0xff] %v426
  %443 = vst [vmem:[%s6 + $0x20] sm:$0xff] %v427
  %444 = vst [vmem:[%s6 + $0x28] sm:$0xff] %v428
  %445 = vst [vmem:[%s6 + $0x30] sm:$0xff] %v429
  %446 = vst [vmem:[%s6 + $0x38] sm:$0xff] %v430
  %447 = vst [vmem:[%s6 + $0x40] sm:$0xff] %v431
  %448 = vst [vmem:[%s6 + $0x48] sm:$0xff] %v432
  %449 = vst [vmem:[%s6 + $0x50] sm:$0xff] %v433
  %450 = vst [vmem:[%s6 + $0x58] sm:$0xff] %v434
  %451 = vst [vmem:[%s6 + $0x60] sm:$0xff] %v435
  %452 = vst [vmem:[%s6 + $0x68] sm:$0xff] %v436
  %453 = vst [vmem:[%s6 + $0x70] sm:$0xff] %v437
  %454 = vst [vmem:[%s6 + $0x78] sm:$0xff] %v438
  // Predicated region
  $region26: #{blocks_forward.5} parent=0 // pred_check
    _
  $region27: #{blocks_forward.5} parent=0 // pred_check_branch
    %456 = sbr.rel (0) target = $region29
  $region28: #{blocks_forward.5} parent=0 // pred_region
    _
  $region29: #{blocks_forward.5} parent=0 // pred_fallthru
    _
  // Predicated region
  $region30: #{blocks_forward.5} parent=0 // pred_check
    _
  $region31: #{blocks_forward.5} parent=0 // pred_check_branch
    %458 = sbr.rel (0) target = $region33
  $region32: #{blocks_forward.5} parent=0 // pred_region
    _
  $region33: #{blocks_forward.5} parent=0 // pred_fallthru
    _

</llo_original>
